<compile_context>
chip_gen: v6e
topology: v6e:2x2x1
jax: 0.10.0
libtpu: 0.0.40
codegen_flags: <defaults>
</compile_context>

<pallas_src>
import functools

import jax
import jax.numpy as jnp
import numpy as np
from jax import lax
from jax.experimental import pallas as pl
from jax.experimental.pallas import tpu as pltpu

EPS = 1e-5          # nn.BatchNorm2d default eps
NEG_SLOPE = 0.2     # nn.LeakyReLU(0.2)


def _leaky(v):
    return jnp.where(v > 0, v, NEG_SLOPE * v)


def _bn_lane(acc, count, a_ref, g_ref, be_ref):
    """Training-mode BatchNorm2d on a (rows, width*C) lane-layout activation.

    Single pass: sum and sum-of-squares.  a_ref is the 0/1 "same channel"
    matrix (width*C, width*C); jnp.dot(acc, A) sums over the w-groups so that,
    after the row reduction, every lane already holds its channel statistic.
    g_ref / be_ref are gamma / beta pre-tiled to lane layout (1, width*C).
    """
    inv = 1.0 / count
    mean = jnp.sum(jnp.dot(acc, a_ref[...], preferred_element_type=jnp.float32),
                   axis=0, keepdims=True) * inv
    msq = jnp.sum(jnp.dot(acc * acc, a_ref[...], preferred_element_type=jnp.float32),
                  axis=0, keepdims=True) * inv
    var = msq - mean * mean                     # biased variance (training mode)
    scale = g_ref[...] * lax.rsqrt(var + EPS)
    shift = be_ref[...] - mean * scale
    return acc * scale + shift


def building_block_kernel(x_ref, b1_ref, a1_ref, g1_ref, be1_ref,
                          b2_ref, a2_ref, g2_ref, be2_ref, *rest,
                          pool, add_res, N, H, W, Cin, Cout):
    if pool > 1:
        pw_ref, out_ref, xpad_ref, hpad_ref = rest
    else:
        out_ref, xpad_ref, hpad_ref = rest
    Hq, Wq = H // pool, W // pool

    # ---- conv1: height-pad x into VMEM scratch, 3 banded MXU matmuls --------
    xpad_ref[...] = jnp.zeros_like(xpad_ref)
    xpad_ref[:, 1:H + 1, :, :] = x_ref[...].reshape(N, H, 1, W * Cin)
    acc = None
    for dy in range(3):                      # short static loop, unrolled
        xd = xpad_ref[:, dy:dy + H, :, :].reshape(N * H, W * Cin)
        part = jnp.dot(xd, b1_ref[dy], preferred_element_type=jnp.float32)
        acc = part if acc is None else acc + part

    # ---- BN1 (batch statistics, single pass) + LeakyReLU --------------------
    y = _leaky(_bn_lane(acc, N * H * W, a1_ref, g1_ref, be1_ref))

    # ---- AvgPool2d(pool): one matmul (w) + one sublane reduction (h) --------
    if pool > 1:
        y = jnp.dot(y, pw_ref[...], preferred_element_type=jnp.float32)   # (N*H, Wq*C)
        y = jnp.sum(y.reshape(N, Hq, pool, Wq * Cout), axis=2)            # (N, Hq, Wq*C)
        y = y * (1.0 / (pool * pool))
    y = y.reshape(N, Hq, 1, Wq * Cout)

    # ---- conv2: height-pad pooled activation in VMEM, 3 banded matmuls ------
    hpad_ref[...] = jnp.zeros_like(hpad_ref)
    hpad_ref[:, 1:Hq + 1, :, :] = y
    acc2 = None
    for dy in range(3):
        hd = hpad_ref[:, dy:dy + Hq, :, :].reshape(N * Hq, Wq * Cout)
        part = jnp.dot(hd, b2_ref[dy], preferred_element_type=jnp.float32)
        acc2 = part if acc2 is None else acc2 + part

    # ---- BN2 + identity residual (stride==1) + LeakyReLU, lane-dense store --
    z = _bn_lane(acc2, N * Hq * Wq, a2_ref, g2_ref, be2_ref)
    if add_res:
        z = z + x_ref[...]                    # x already loaded; no extra DMA
    out_ref[...] = _leaky(z)


def _full_spec(shape):
    # whole array as a single block (block shape == array shape is always legal)
    return pl.BlockSpec(shape, lambda i, _nd=len(shape): (0,) * _nd)


def _band_matrices(w_hwio, width):
    """Fold the 3 dx taps and the SAME width padding of a 3x3 conv into
    per-dy block-banded matrices: (3, width*cin, width*cout) with
    B[dy, u*cin+ci, w*cout+co] = sum_dx [u == w+dx-1] * w[dy, dx, ci, co]."""
    kh, kw, cin, cout = w_hwio.shape
    sel = np.zeros((kw, width, width), np.float32)
    for dx in range(kw):
        for w in range(width):
            u = w + dx - 1
            if 0 <= u < width:
                sel[dx, u, w] = 1.0
    sel = jnp.asarray(sel)                                        # (dx, u, w)
    # exact 0/1 broadcast-multiply + sum (no dot => no precision surprises)
    prod = sel[None, :, :, None, :, None] * w_hwio[:, :, None, :, None, :]
    b = jnp.sum(prod, axis=1)                                     # (dy, u, ci, w, co)
    return b.reshape(kh, width * cin, width * cout)


def _same_channel_matrix(width, c):
    # A[w*c + ch, w'*c + ch'] = 1 iff ch == ch'
    return jnp.asarray(np.tile(np.eye(c, dtype=np.float32), (width, width)))


def _pool_matrix(width, c, pool):
    wq = width // pool
    p = np.zeros((width * c, wq * c), np.float32)
    for w in range(width):
        q = w // pool
        p[w * c:(w + 1) * c, q * c:(q + 1) * c] = np.eye(c, dtype=np.float32)
    return jnp.asarray(p)


def building_block_forward(x_nchw, params, stride):
    """Pallas TPU implementation of BuildingBlock.forward (single fused kernel)."""
    w1, g1, b1, w2, g2, b2 = params
    x = jnp.transpose(x_nchw, (0, 2, 3, 1)).astype(jnp.float32)   # NCHW -> NHWC
    N, H, W, Cin = x.shape
    Cout = w1.shape[-1]
    assert H % stride == 0 and W % stride == 0
    Hq, Wq = H // stride, W // stride
    add_res = (stride == 1)
    if add_res:
        assert Cin == Cout, "identity residual requires in_ch == out_ch"

    # lane-dense activation layout: rows = (n, h), lanes = (w, c)
    x2d = x.reshape(N * H, W * Cin)

    # weight-dependent preprocessing (in a real net: precomputed once per step)
    b1m = _band_matrices(w1.astype(jnp.float32), W)     # (3, W*Cin,   W*Cout)
    b2m = _band_matrices(w2.astype(jnp.float32), Wq)    # (3, Wq*Cout, Wq*Cout)
    a1 = _same_channel_matrix(W, Cout)                  # (W*Cout,  W*Cout)
    a2 = _same_channel_matrix(Wq, Cout)                 # (Wq*Cout, Wq*Cout)
    g1l = jnp.tile(g1.reshape(1, Cout).astype(jnp.float32), (1, W))
    be1 = jnp.tile(b1.reshape(1, Cout).astype(jnp.float32), (1, W))
    g2l = jnp.tile(g2.reshape(1, Cout).astype(jnp.float32), (1, Wq))
    be2 = jnp.tile(b2.reshape(1, Cout).astype(jnp.float32), (1, Wq))

    args = [x2d, b1m, a1, g1l, be1, b2m, a2, g2l, be2]
    if stride > 1:
        args.append(_pool_matrix(W, Cout, stride))      # no zeros-residual DMA either way

    kern = functools.partial(building_block_kernel, pool=stride, add_res=add_res,
                             N=N, H=H, W=W, Cin=Cin, Cout=Cout)
    out2d = pl.pallas_call(
        kern,
        out_shape=jax.ShapeDtypeStruct((N * Hq, Wq * Cout), jnp.float32),
        grid=(1,),
        in_specs=[_full_spec(a.shape) for a in args],
        out_specs=_full_spec((N * Hq, Wq * Cout)),
        scratch_shapes=[
            pltpu.VMEM((N, H + 2, 1, W * Cin), jnp.float32),       # H-padded conv1 input
            pltpu.VMEM((N, Hq + 2, 1, Wq * Cout), jnp.float32),    # H-padded conv2 input
        ],
    )(*args)

    out = out2d.reshape(N, Hq, Wq, Cout)
    return jnp.transpose(out, (0, 3, 1, 2))             # NHWC -> NCHW


def reference_forward(x_nchw, params, stride):
    """Pure-JAX reference (same semantics) for correctness checking."""
    w1, g1, b1, w2, g2, b2 = params
    x = jnp.transpose(x_nchw, (0, 2, 3, 1)).astype(jnp.float32)
    dn = ('NHWC', 'HWIO', 'NHWC')

    def bn(v, g, b):
        m = jnp.mean(v, axis=(0, 1, 2), keepdims=True)
        var = jnp.mean((v - m) ** 2, axis=(0, 1, 2), keepdims=True)
        return (v - m) * (g.reshape(1, 1, 1, -1) * lax.rsqrt(var + EPS)) \
            + b.reshape(1, 1, 1, -1)

    y = lax.conv_general_dilated(x, w1, (1, 1), 'SAME', dimension_numbers=dn,
                                 precision=lax.Precision.HIGHEST)
    y = _leaky(bn(y, g1, b1))
    if stride > 1:
        y = lax.reduce_window(y, 0.0, lax.add, (1, stride, stride, 1),
                              (1, stride, stride, 1), 'VALID') / float(stride * stride)
    y2 = lax.conv_general_dilated(y, w2, (1, 1), 'SAME', dimension_numbers=dn,
                                  precision=lax.Precision.HIGHEST)
    y2 = bn(y2, g2, b2)
    if stride == 1:
        y2 = y2 + x
    return jnp.transpose(_leaky(y2), (0, 3, 1, 2))


if __name__ == "__main__":
    key = jax.random.PRNGKey(0)
    kx, k1, k2, k3, k4, k5, k6 = jax.random.split(key, 7)

    N, in_ch, out_ch, H, W = 2, 4, 4, 16, 16

    x = jax.random.normal(kx, (N, in_ch, H, W), jnp.float32)   # PyTorch NCHW input
    # Conv weights in HWIO (kH, kW, in, out) == PyTorch (out, in, kH, kW) permuted.
    w1 = 0.1 * jax.random.normal(k1, (3, 3, in_ch, out_ch), jnp.float32)
    w2 = 0.1 * jax.random.normal(k2, (3, 3, out_ch, out_ch), jnp.float32)
    g1 = jax.random.uniform(k3, (out_ch,), jnp.float32, 0.5, 1.5)   # BN1 gamma
    b1 = 0.1 * jax.random.normal(k4, (out_ch,), jnp.float32)        # BN1 beta
    g2 = jax.random.uniform(k5, (out_ch,), jnp.float32, 0.5, 1.5)   # BN2 gamma
    b2 = 0.1 * jax.random.normal(k6, (out_ch,), jnp.float32)        # BN2 beta
    params = (w1, g1, b1, w2, g2, b2)

    # stride == 1 exercises the identity-residual path; stride == 2 the AvgPool path.
    for stride in (1, 2):
        out = building_block_forward(x, params, stride)
        jax.block_until_ready(out)
        ref = reference_forward(x, params, stride)
        np.testing.assert_allclose(np.asarray(out), np.asarray(ref),
                                   rtol=1e-3, atol=1e-3)

    print("KERNEL_OK")
</pallas_src>

<mosaic_0001>
module attributes {stable_mosaic.version = 11 : i64} {
  func.func @building_block_kernel(%arg0: i32, %arg1: memref<32x64xf32, #tpu.memory_space<vmem>>, %arg2: memref<3x64x64xf32, #tpu.memory_space<vmem>>, %arg3: memref<64x64xf32, #tpu.memory_space<vmem>>, %arg4: memref<1x64xf32, #tpu.memory_space<vmem>>, %arg5: memref<1x64xf32, #tpu.memory_space<vmem>>, %arg6: memref<3x64x64xf32, #tpu.memory_space<vmem>>, %arg7: memref<64x64xf32, #tpu.memory_space<vmem>>, %arg8: memref<1x64xf32, #tpu.memory_space<vmem>>, %arg9: memref<1x64xf32, #tpu.memory_space<vmem>>, %arg10: memref<32x64xf32, #tpu.memory_space<vmem>>, %arg11: memref<2x18x1x64xf32, #tpu.memory_space<vmem>>, %arg12: memref<2x18x1x64xf32, #tpu.memory_space<vmem>>) attributes {dimension_semantics = [#tpu.dimension_semantics<arbitrary>], iteration_bounds = array<i64: 1>, scalar_prefetch = 0 : i64, scratch_operands = 2 : i64, tpu.core_type = #tpu.core_type<tc>, window_params = [{pipeline_mode = #tpu.pipeline_mode<synchronous>, transform_indices = @transform_0, window_bounds = array<i64: 32, 64>}, {pipeline_mode = #tpu.pipeline_mode<synchronous>, transform_indices = @transform_1, window_bounds = array<i64: 3, 64, 64>}, {pipeline_mode = #tpu.pipeline_mode<synchronous>, transform_indices = @transform_2, window_bounds = array<i64: 64, 64>}, {pipeline_mode = #tpu.pipeline_mode<synchronous>, transform_indices = @transform_3, window_bounds = array<i64: 1, 64>}, {pipeline_mode = #tpu.pipeline_mode<synchronous>, transform_indices = @transform_4, window_bounds = array<i64: 1, 64>}, {pipeline_mode = #tpu.pipeline_mode<synchronous>, transform_indices = @transform_5, window_bounds = array<i64: 3, 64, 64>}, {pipeline_mode = #tpu.pipeline_mode<synchronous>, transform_indices = @transform_6, window_bounds = array<i64: 64, 64>}, {pipeline_mode = #tpu.pipeline_mode<synchronous>, transform_indices = @transform_7, window_bounds = array<i64: 1, 64>}, {pipeline_mode = #tpu.pipeline_mode<synchronous>, transform_indices = @transform_8, window_bounds = array<i64: 1, 64>}, {pipeline_mode = #tpu.pipeline_mode<synchronous>, transform_indices = @transform_9, window_bounds = array<i64: 32, 64>}]} {
    %cst = arith.constant 0.000000e+00 : f32
    %0 = vector.broadcast %cst : f32 to vector<2x18x1x64xf32>
    %c0 = arith.constant 0 : index
    %c0_0 = arith.constant 0 : index
    %c0_1 = arith.constant 0 : index
    %c0_2 = arith.constant 0 : index
    %1 = vector.load %arg11[%c0, %c0_0, %c0_1, %c0_2] : memref<2x18x1x64xf32, #tpu.memory_space<vmem>>, vector<2x18x1x64xf32>
    tpu.vector_store %arg11[%c0, %c0_0, %c0_1, %c0_2], %0 {strides = array<i32>} : memref<2x18x1x64xf32, #tpu.memory_space<vmem>>, vector<2x18x1x64xf32>,
    %c0_3 = arith.constant 0 : index
    %c0_4 = arith.constant 0 : index
    %2 = vector.load %arg1[%c0_3, %c0_4] : memref<32x64xf32, #tpu.memory_space<vmem>>, vector<32x64xf32>
    %3 = vector.shape_cast %2 : vector<32x64xf32> to vector<2x16x1x64xf32>
    %c0_5 = arith.constant 0 : index
    %c1 = arith.constant 1 : index
    %c0_6 = arith.constant 0 : index
    %c0_7 = arith.constant 0 : index
    %4 = vector.load %arg11[%c0_5, %c1, %c0_6, %c0_7] : memref<2x18x1x64xf32, #tpu.memory_space<vmem>>, vector<2x16x1x64xf32>
    tpu.vector_store %arg11[%c0_5, %c1, %c0_6, %c0_7], %3 {strides = array<i32>} : memref<2x18x1x64xf32, #tpu.memory_space<vmem>>, vector<2x16x1x64xf32>,
    %c0_8 = arith.constant 0 : index
    %c0_9 = arith.constant 0 : index
    %c0_10 = arith.constant 0 : index
    %c0_11 = arith.constant 0 : index
    %5 = vector.load %arg11[%c0_8, %c0_9, %c0_10, %c0_11] : memref<2x18x1x64xf32, #tpu.memory_space<vmem>>, vector<2x16x1x64xf32>
    %6 = vector.shape_cast %5 : vector<2x16x1x64xf32> to vector<32x64xf32>
    %c0_12 = arith.constant 0 : index
    %c0_13 = arith.constant 0 : index
    %c0_14 = arith.constant 0 : index
    %7 = vector.load %arg2[%c0_12, %c0_13, %c0_14] : memref<3x64x64xf32, #tpu.memory_space<vmem>>, vector<1x64x64xf32>
    %8 = vector.shape_cast %7 : vector<1x64x64xf32> to vector<64x64xf32>
    %cst_15 = arith.constant dense<0.000000e+00> : vector<32x64xf32>
    %9 = tpu.matmul %6, %8, %cst_15 {dimension_numbers = #tpu.dot_dimension_numbers<[1], [0], [0], [1], [0, 0, 1, 1], [], []>} : vector<32x64xf32>, vector<64x64xf32>, vector<32x64xf32> -> vector<32x64xf32>
    %c0_16 = arith.constant 0 : index
    %c1_17 = arith.constant 1 : index
    %c0_18 = arith.constant 0 : index
    %c0_19 = arith.constant 0 : index
    %10 = vector.load %arg11[%c0_16, %c1_17, %c0_18, %c0_19] : memref<2x18x1x64xf32, #tpu.memory_space<vmem>>, vector<2x16x1x64xf32>
    %11 = vector.shape_cast %10 : vector<2x16x1x64xf32> to vector<32x64xf32>
    %c1_20 = arith.constant 1 : index
    %c0_21 = arith.constant 0 : index
    %c0_22 = arith.constant 0 : index
    %12 = vector.load %arg2[%c1_20, %c0_21, %c0_22] : memref<3x64x64xf32, #tpu.memory_space<vmem>>, vector<1x64x64xf32>
    %13 = vector.shape_cast %12 : vector<1x64x64xf32> to vector<64x64xf32>
    %cst_23 = arith.constant dense<0.000000e+00> : vector<32x64xf32>
    %14 = tpu.matmul %11, %13, %cst_23 {dimension_numbers = #tpu.dot_dimension_numbers<[1], [0], [0], [1], [0, 0, 1, 1], [], []>} : vector<32x64xf32>, vector<64x64xf32>, vector<32x64xf32> -> vector<32x64xf32>
    %15 = arith.addf %9, %14 : vector<32x64xf32>
    %c0_24 = arith.constant 0 : index
    %c2 = arith.constant 2 : index
    %c0_25 = arith.constant 0 : index
    %c0_26 = arith.constant 0 : index
    %16 = vector.load %arg11[%c0_24, %c2, %c0_25, %c0_26] : memref<2x18x1x64xf32, #tpu.memory_space<vmem>>, vector<2x16x1x64xf32>
    %17 = vector.shape_cast %16 : vector<2x16x1x64xf32> to vector<32x64xf32>
    %c2_27 = arith.constant 2 : index
    %c0_28 = arith.constant 0 : index
    %c0_29 = arith.constant 0 : index
    %18 = vector.load %arg2[%c2_27, %c0_28, %c0_29] : memref<3x64x64xf32, #tpu.memory_space<vmem>>, vector<1x64x64xf32>
    %19 = vector.shape_cast %18 : vector<1x64x64xf32> to vector<64x64xf32>
    %cst_30 = arith.constant dense<0.000000e+00> : vector<32x64xf32>
    %20 = tpu.matmul %17, %19, %cst_30 {dimension_numbers = #tpu.dot_dimension_numbers<[1], [0], [0], [1], [0, 0, 1, 1], [], []>} : vector<32x64xf32>, vector<64x64xf32>, vector<32x64xf32> -> vector<32x64xf32>
    %21 = arith.addf %15, %20 : vector<32x64xf32>
    %c0_31 = arith.constant 0 : index
    %c0_32 = arith.constant 0 : index
    %22 = vector.load %arg3[%c0_31, %c0_32] : memref<64x64xf32, #tpu.memory_space<vmem>>, vector<64x64xf32>
    %cst_33 = arith.constant dense<0.000000e+00> : vector<32x64xf32>
    %23 = tpu.matmul %21, %22, %cst_33 {dimension_numbers = #tpu.dot_dimension_numbers<[1], [0], [0], [1], [0, 0, 1, 1], [], []>} : vector<32x64xf32>, vector<64x64xf32>, vector<32x64xf32> -> vector<32x64xf32>
    %cst_34 = arith.constant dense<0.000000e+00> : vector<64xf32>
    %24 = vector.multi_reduction <add>, %23, %cst_34 [0] : vector<32x64xf32> to vector<64xf32>
    %25 = vector.shape_cast %24 : vector<64xf32> to vector<1x64xf32>
    %cst_35 = arith.constant 0.001953125 : f32
    %26 = vector.broadcast %cst_35 : f32 to vector<1x64xf32>
    %27 = arith.mulf %25, %26 : vector<1x64xf32>
    %28 = arith.mulf %21, %21 : vector<32x64xf32>
    %c0_36 = arith.constant 0 : index
    %c0_37 = arith.constant 0 : index
    %29 = vector.load %arg3[%c0_36, %c0_37] : memref<64x64xf32, #tpu.memory_space<vmem>>, vector<64x64xf32>
    %cst_38 = arith.constant dense<0.000000e+00> : vector<32x64xf32>
    %30 = tpu.matmul %28, %29, %cst_38 {dimension_numbers = #tpu.dot_dimension_numbers<[1], [0], [0], [1], [0, 0, 1, 1], [], []>} : vector<32x64xf32>, vector<64x64xf32>, vector<32x64xf32> -> vector<32x64xf32>
    %cst_39 = arith.constant dense<0.000000e+00> : vector<64xf32>
    %31 = vector.multi_reduction <add>, %30, %cst_39 [0] : vector<32x64xf32> to vector<64xf32>
    %32 = vector.shape_cast %31 : vector<64xf32> to vector<1x64xf32>
    %cst_40 = arith.constant 0.001953125 : f32
    %33 = vector.broadcast %cst_40 : f32 to vector<1x64xf32>
    %34 = arith.mulf %32, %33 : vector<1x64xf32>
    %35 = arith.mulf %27, %27 : vector<1x64xf32>
    %36 = arith.subf %34, %35 : vector<1x64xf32>
    %c0_41 = arith.constant 0 : index
    %c0_42 = arith.constant 0 : index
    %37 = vector.load %arg4[%c0_41, %c0_42] : memref<1x64xf32, #tpu.memory_space<vmem>>, vector<1x64xf32>
    %cst_43 = arith.constant 9.99999974E-6 : f32
    %38 = vector.broadcast %cst_43 : f32 to vector<1x64xf32>
    %39 = arith.addf %36, %38 : vector<1x64xf32>
    %40 = math.rsqrt %39 : vector<1x64xf32>
    %41 = arith.mulf %37, %40 : vector<1x64xf32>
    %c0_44 = arith.constant 0 : index
    %c0_45 = arith.constant 0 : index
    %42 = vector.load %arg5[%c0_44, %c0_45] : memref<1x64xf32, #tpu.memory_space<vmem>>, vector<1x64xf32>
    %43 = arith.mulf %27, %41 : vector<1x64xf32>
    %44 = arith.subf %42, %43 : vector<1x64xf32>
    %45 = vector.broadcast %41 : vector<1x64xf32> to vector<32x64xf32>
    %46 = arith.mulf %21, %45 : vector<32x64xf32>
    %47 = vector.broadcast %44 : vector<1x64xf32> to vector<32x64xf32>
    %48 = arith.addf %46, %47 : vector<32x64xf32>
    %cst_46 = arith.constant 0.000000e+00 : f32
    %49 = vector.broadcast %cst_46 : f32 to vector<32x64xf32>
    %50 = arith.cmpf ogt, %48, %49 : vector<32x64xf32>
    %cst_47 = arith.constant 2.000000e-01 : f32
    %51 = vector.broadcast %cst_47 : f32 to vector<32x64xf32>
    %52 = arith.mulf %51, %48 : vector<32x64xf32>
    %53 = arith.select %50, %48, %52 : vector<32x64xi1>, vector<32x64xf32>
    %54 = vector.shape_cast %53 : vector<32x64xf32> to vector<2x16x1x64xf32>
    %cst_48 = arith.constant 0.000000e+00 : f32
    %55 = vector.broadcast %cst_48 : f32 to vector<2x18x1x64xf32>
    %c0_49 = arith.constant 0 : index
    %c0_50 = arith.constant 0 : index
    %c0_51 = arith.constant 0 : index
    %c0_52 = arith.constant 0 : index
    %56 = vector.load %arg12[%c0_49, %c0_50, %c0_51, %c0_52] : memref<2x18x1x64xf32, #tpu.memory_space<vmem>>, vector<2x18x1x64xf32>
    tpu.vector_store %arg12[%c0_49, %c0_50, %c0_51, %c0_52], %55 {strides = array<i32>} : memref<2x18x1x64xf32, #tpu.memory_space<vmem>>, vector<2x18x1x64xf32>,
    %c0_53 = arith.constant 0 : index
    %c1_54 = arith.constant 1 : index
    %c0_55 = arith.constant 0 : index
    %c0_56 = arith.constant 0 : index
    %57 = vector.load %arg12[%c0_53, %c1_54, %c0_55, %c0_56] : memref<2x18x1x64xf32, #tpu.memory_space<vmem>>, vector<2x16x1x64xf32>
    tpu.vector_store %arg12[%c0_53, %c1_54, %c0_55, %c0_56], %54 {strides = array<i32>} : memref<2x18x1x64xf32, #tpu.memory_space<vmem>>, vector<2x16x1x64xf32>,
    %c0_57 = arith.constant 0 : index
    %c0_58 = arith.constant 0 : index
    %c0_59 = arith.constant 0 : index
    %c0_60 = arith.constant 0 : index
    %58 = vector.load %arg12[%c0_57, %c0_58, %c0_59, %c0_60] : memref<2x18x1x64xf32, #tpu.memory_space<vmem>>, vector<2x16x1x64xf32>
    %59 = vector.shape_cast %58 : vector<2x16x1x64xf32> to vector<32x64xf32>
    %c0_61 = arith.constant 0 : index
    %c0_62 = arith.constant 0 : index
    %c0_63 = arith.constant 0 : index
    %60 = vector.load %arg6[%c0_61, %c0_62, %c0_63] : memref<3x64x64xf32, #tpu.memory_space<vmem>>, vector<1x64x64xf32>
    %61 = vector.shape_cast %60 : vector<1x64x64xf32> to vector<64x64xf32>
    %cst_64 = arith.constant dense<0.000000e+00> : vector<32x64xf32>
    %62 = tpu.matmul %59, %61, %cst_64 {dimension_numbers = #tpu.dot_dimension_numbers<[1], [0], [0], [1], [0, 0, 1, 1], [], []>} : vector<32x64xf32>, vector<64x64xf32>, vector<32x64xf32> -> vector<32x64xf32>
    %c0_65 = arith.constant 0 : index
    %c1_66 = arith.constant 1 : index
    %c0_67 = arith.constant 0 : index
    %c0_68 = arith.constant 0 : index
    %63 = vector.load %arg12[%c0_65, %c1_66, %c0_67, %c0_68] : memref<2x18x1x64xf32, #tpu.memory_space<vmem>>, vector<2x16x1x64xf32>
    %64 = vector.shape_cast %63 : vector<2x16x1x64xf32> to vector<32x64xf32>
    %c1_69 = arith.constant 1 : index
    %c0_70 = arith.constant 0 : index
    %c0_71 = arith.constant 0 : index
    %65 = vector.load %arg6[%c1_69, %c0_70, %c0_71] : memref<3x64x64xf32, #tpu.memory_space<vmem>>, vector<1x64x64xf32>
    %66 = vector.shape_cast %65 : vector<1x64x64xf32> to vector<64x64xf32>
    %cst_72 = arith.constant dense<0.000000e+00> : vector<32x64xf32>
    %67 = tpu.matmul %64, %66, %cst_72 {dimension_numbers = #tpu.dot_dimension_numbers<[1], [0], [0], [1], [0, 0, 1, 1], [], []>} : vector<32x64xf32>, vector<64x64xf32>, vector<32x64xf32> -> vector<32x64xf32>
    %68 = arith.addf %62, %67 : vector<32x64xf32>
    %c0_73 = arith.constant 0 : index
    %c2_74 = arith.constant 2 : index
    %c0_75 = arith.constant 0 : index
    %c0_76 = arith.constant 0 : index
    %69 = vector.load %arg12[%c0_73, %c2_74, %c0_75, %c0_76] : memref<2x18x1x64xf32, #tpu.memory_space<vmem>>, vector<2x16x1x64xf32>
    %70 = vector.shape_cast %69 : vector<2x16x1x64xf32> to vector<32x64xf32>
    %c2_77 = arith.constant 2 : index
    %c0_78 = arith.constant 0 : index
    %c0_79 = arith.constant 0 : index
    %71 = vector.load %arg6[%c2_77, %c0_78, %c0_79] : memref<3x64x64xf32, #tpu.memory_space<vmem>>, vector<1x64x64xf32>
    %72 = vector.shape_cast %71 : vector<1x64x64xf32> to vector<64x64xf32>
    %cst_80 = arith.constant dense<0.000000e+00> : vector<32x64xf32>
    %73 = tpu.matmul %70, %72, %cst_80 {dimension_numbers = #tpu.dot_dimension_numbers<[1], [0], [0], [1], [0, 0, 1, 1], [], []>} : vector<32x64xf32>, vector<64x64xf32>, vector<32x64xf32> -> vector<32x64xf32>
    %74 = arith.addf %68, %73 : vector<32x64xf32>
    %c0_81 = arith.constant 0 : index
    %c0_82 = arith.constant 0 : index
    %75 = vector.load %arg7[%c0_81, %c0_82] : memref<64x64xf32, #tpu.memory_space<vmem>>, vector<64x64xf32>
    %cst_83 = arith.constant dense<0.000000e+00> : vector<32x64xf32>
    %76 = tpu.matmul %74, %75, %cst_83 {dimension_numbers = #tpu.dot_dimension_numbers<[1], [0], [0], [1], [0, 0, 1, 1], [], []>} : vector<32x64xf32>, vector<64x64xf32>, vector<32x64xf32> -> vector<32x64xf32>
    %cst_84 = arith.constant dense<0.000000e+00> : vector<64xf32>
    %77 = vector.multi_reduction <add>, %76, %cst_84 [0] : vector<32x64xf32> to vector<64xf32>
    %78 = vector.shape_cast %77 : vector<64xf32> to vector<1x64xf32>
    %cst_85 = arith.constant 0.001953125 : f32
    %79 = vector.broadcast %cst_85 : f32 to vector<1x64xf32>
    %80 = arith.mulf %78, %79 : vector<1x64xf32>
    %81 = arith.mulf %74, %74 : vector<32x64xf32>
    %c0_86 = arith.constant 0 : index
    %c0_87 = arith.constant 0 : index
    %82 = vector.load %arg7[%c0_86, %c0_87] : memref<64x64xf32, #tpu.memory_space<vmem>>, vector<64x64xf32>
    %cst_88 = arith.constant dense<0.000000e+00> : vector<32x64xf32>
    %83 = tpu.matmul %81, %82, %cst_88 {dimension_numbers = #tpu.dot_dimension_numbers<[1], [0], [0], [1], [0, 0, 1, 1], [], []>} : vector<32x64xf32>, vector<64x64xf32>, vector<32x64xf32> -> vector<32x64xf32>
    %cst_89 = arith.constant dense<0.000000e+00> : vector<64xf32>
    %84 = vector.multi_reduction <add>, %83, %cst_89 [0] : vector<32x64xf32> to vector<64xf32>
    %85 = vector.shape_cast %84 : vector<64xf32> to vector<1x64xf32>
    %cst_90 = arith.constant 0.001953125 : f32
    %86 = vector.broadcast %cst_90 : f32 to vector<1x64xf32>
    %87 = arith.mulf %85, %86 : vector<1x64xf32>
    %88 = arith.mulf %80, %80 : vector<1x64xf32>
    %89 = arith.subf %87, %88 : vector<1x64xf32>
    %c0_91 = arith.constant 0 : index
    %c0_92 = arith.constant 0 : index
    %90 = vector.load %arg8[%c0_91, %c0_92] : memref<1x64xf32, #tpu.memory_space<vmem>>, vector<1x64xf32>
    %cst_93 = arith.constant 9.99999974E-6 : f32
    %91 = vector.broadcast %cst_93 : f32 to vector<1x64xf32>
    %92 = arith.addf %89, %91 : vector<1x64xf32>
    %93 = math.rsqrt %92 : vector<1x64xf32>
    %94 = arith.mulf %90, %93 : vector<1x64xf32>
    %c0_94 = arith.constant 0 : index
    %c0_95 = arith.constant 0 : index
    %95 = vector.load %arg9[%c0_94, %c0_95] : memref<1x64xf32, #tpu.memory_space<vmem>>, vector<1x64xf32>
    %96 = arith.mulf %80, %94 : vector<1x64xf32>
    %97 = arith.subf %95, %96 : vector<1x64xf32>
    %98 = vector.broadcast %94 : vector<1x64xf32> to vector<32x64xf32>
    %99 = arith.mulf %74, %98 : vector<32x64xf32>
    %100 = vector.broadcast %97 : vector<1x64xf32> to vector<32x64xf32>
    %101 = arith.addf %99, %100 : vector<32x64xf32>
    %c0_96 = arith.constant 0 : index
    %c0_97 = arith.constant 0 : index
    %102 = vector.load %arg1[%c0_96, %c0_97] : memref<32x64xf32, #tpu.memory_space<vmem>>, vector<32x64xf32>
    %103 = arith.addf %101, %102 : vector<32x64xf32>
    %cst_98 = arith.constant 0.000000e+00 : f32
    %104 = vector.broadcast %cst_98 : f32 to vector<32x64xf32>
    %105 = arith.cmpf ogt, %103, %104 : vector<32x64xf32>
    %cst_99 = arith.constant 2.000000e-01 : f32
    %106 = vector.broadcast %cst_99 : f32 to vector<32x64xf32>
    %107 = arith.mulf %106, %103 : vector<32x64xf32>
    %108 = arith.select %105, %103, %107 : vector<32x64xi1>, vector<32x64xf32>
    %c0_100 = arith.constant 0 : index
    %c0_101 = arith.constant 0 : index
    %109 = vector.load %arg10[%c0_100, %c0_101] : memref<32x64xf32, #tpu.memory_space<vmem>>, vector<32x64xf32>
    tpu.vector_store %arg10[%c0_100, %c0_101], %108 {strides = array<i32>} : memref<32x64xf32, #tpu.memory_space<vmem>>, vector<32x64xf32>,
    return
  }
  func.func @transform_0(%arg0: i32) -> (i32, i32) {
    %c0_i32 = arith.constant 0 : i32
    %c0_i32_0 = arith.constant 0 : i32
    %c0_i32_1 = arith.constant 0 : i32
    return %c0_i32, %c0_i32_0 : i32, i32
  }
  func.func @transform_1(%arg0: i32) -> (i32, i32, i32) {
    %c0_i32 = arith.constant 0 : i32
    %c0_i32_0 = arith.constant 0 : i32
    %c0_i32_1 = arith.constant 0 : i32
    %c0_i32_2 = arith.constant 0 : i32
    return %c0_i32, %c0_i32_0, %c0_i32_1 : i32, i32, i32
  }
  func.func @transform_2(%arg0: i32) -> (i32, i32) {
    %c0_i32 = arith.constant 0 : i32
    %c0_i32_0 = arith.constant 0 : i32
    %c0_i32_1 = arith.constant 0 : i32
    return %c0_i32, %c0_i32_0 : i32, i32
  }
  func.func @transform_3(%arg0: i32) -> (i32, i32) {
    %c0_i32 = arith.constant 0 : i32
    %c0_i32_0 = arith.constant 0 : i32
    %c0_i32_1 = arith.constant 0 : i32
    return %c0_i32, %c0_i32_0 : i32, i32
  }
  func.func @transform_4(%arg0: i32) -> (i32, i32) {
    %c0_i32 = arith.constant 0 : i32
    %c0_i32_0 = arith.constant 0 : i32
    %c0_i32_1 = arith.constant 0 : i32
    return %c0_i32, %c0_i32_0 : i32, i32
  }
  func.func @transform_5(%arg0: i32) -> (i32, i32, i32) {
    %c0_i32 = arith.constant 0 : i32
    %c0_i32_0 = arith.constant 0 : i32
    %c0_i32_1 = arith.constant 0 : i32
    %c0_i32_2 = arith.constant 0 : i32
    return %c0_i32, %c0_i32_0, %c0_i32_1 : i32, i32, i32
  }
  func.func @transform_6(%arg0: i32) -> (i32, i32) {
    %c0_i32 = arith.constant 0 : i32
    %c0_i32_0 = arith.constant 0 : i32
    %c0_i32_1 = arith.constant 0 : i32
    return %c0_i32, %c0_i32_0 : i32, i32
  }
  func.func @transform_7(%arg0: i32) -> (i32, i32) {
    %c0_i32 = arith.constant 0 : i32
    %c0_i32_0 = arith.constant 0 : i32
    %c0_i32_1 = arith.constant 0 : i32
    return %c0_i32, %c0_i32_0 : i32, i32
  }
  func.func @transform_8(%arg0: i32) -> (i32, i32) {
    %c0_i32 = arith.constant 0 : i32
    %c0_i32_0 = arith.constant 0 : i32
    %c0_i32_1 = arith.constant 0 : i32
    return %c0_i32, %c0_i32_0 : i32, i32
  }
  func.func @transform_9(%arg0: i32) -> (i32, i32) {
    %c0_i32 = arith.constant 0 : i32
    %c0_i32_0 = arith.constant 0 : i32
    %c0_i32_1 = arith.constant 0 : i32
    return %c0_i32, %c0_i32_0 : i32, i32
  }
}

</mosaic_0001>

<llo_original>
// kernel: tpu_custom_call.1
$region0: #{tpu_custom_call.1}
  #allocation0 [shape = 'u32[]', space=smem, size = 0x4, offset = 0x4, fixed_abs, tag = 'smem constant byte address 0x4 - core index']
  #allocation1 [shape = 'u32[144,128]{1,0:T(1,128)}', space=vmem, size = 0x12000, scoped, tag = 'internal scratch']
  #allocation2 [shape = 'f32[2,18,1,64]{3,2,1,0:T(1,128)}', space=vmem, size = 0x4800, scoped, tag = 'scratch operand']
  #allocation3 [shape = 'f32[2,18,1,64]{3,2,1,0:T(1,128)}', space=vmem, size = 0x4800, scoped, tag = 'scratch operand']
  %s0 = inlined_call_operand.hbm [shape: f32[32,64], index: 0, kind: input, shape index: {}]
  %s1 = inlined_call_operand.hbm [shape: f32[3,64,64], index: 1, kind: input, shape index: {}]
  %s2 = inlined_call_operand.hbm [shape: f32[64,64], index: 2, kind: input, shape index: {}]
  %s3 = inlined_call_operand.vmem [shape: f32[1,64], index: 3, kind: input, shape index: {}]
  %s4 = inlined_call_operand.vmem [shape: f32[1,64], index: 4, kind: input, shape index: {}]
  %s5 = inlined_call_operand.hbm [shape: f32[3,64,64], index: 5, kind: input, shape index: {}]
  %s6 = inlined_call_operand.hbm [shape: f32[64,64], index: 6, kind: input, shape index: {}]
  %s7 = inlined_call_operand.vmem [shape: f32[1,64], index: 7, kind: input, shape index: {}]
  %s8 = inlined_call_operand.vmem [shape: f32[1,64], index: 8, kind: input, shape index: {}]
  %s9 = inlined_call_operand.hbm [shape: f32[32,64], index: 9, kind: output, shape index: {}]
  %s10 = sld [smem:[#allocation0]]
  $region66: #{tpu_custom_call.1} parent=0
    _
  %s12 = ssub.s32 1, %s10
  %s13 = scalar_select 0, %s12, %s10
  $region1: #{tpu_custom_call.1} parent=0
    #allocation4 [shape = 'u8[16384]{0}', space=vmem, size = 0x4000, scoped, tag = 'input window, operand 0, single buffered']
    #allocation5 [shape = 's32[1]{0}', space=sflag, size = 0x4, scoped, tag = 'scoped memory for tpu_custom_call.1']
    #allocation6 [shape = 's32[1]{0}', space=sflag, size = 0x4, scoped, tag = 'scoped memory for tpu_custom_call.1']
    #allocation7 [shape = 'u8[98304]{0}', space=vmem, size = 0x18000, scoped, tag = 'input window, operand 1, single buffered']
    #allocation8 [shape = 's32[1]{0}', space=sflag, size = 0x4, scoped, tag = 'scoped memory for tpu_custom_call.1']
    #allocation9 [shape = 'u8[32768]{0}', space=vmem, size = 0x8000, scoped, tag = 'input window, operand 2, single buffered']
    #allocation10 [shape = 'u8[98304]{0}', space=vmem, size = 0x18000, scoped, tag = 'input window, operand 5, single buffered']
    #allocation11 [shape = 's32[1]{0}', space=sflag, size = 0x4, scoped, tag = 'scoped memory for tpu_custom_call.1']
    #allocation12 [shape = 'u8[32768]{0}', space=vmem, size = 0x8000, scoped, tag = 'input window, operand 6, single buffered']
    #allocation13 [shape = 'u8[16384]{0}', space=vmem, size = 0x4000, scoped, tag = 'output window, operand 0, single buffered']
    %14 = vsyncpa [#allocation5], 0
    %15 = vsyncpa [#allocation8], 0
    %16 = vsyncpa [#allocation11], 0
    %17 = vsyncpa [#allocation6], 0
    // Predicated region
    $region2: #{tpu_custom_call.1} parent=1 // pred_check
      _
    $region3: #{tpu_custom_call.1} parent=1 // pred_check_branch
      %19 = sbr.rel (0) target = $region5
    $region4: #{tpu_custom_call.1} parent=1 // pred_region
      %s21 = ssub.s32 512, 512
      %22 = vsyncadd [#allocation5], %s21
      %s23 = sshll.u32 [#allocation4], 4
      %s24 = int_to_ptr.vmem [resolvable:$true] %s23
      %29 = dma.hbm_to_vmem [thread:$0]  %s0, 512, %s24, [#allocation5], 128, 128, 8
    $region5: #{tpu_custom_call.1} parent=1 // pred_fallthru
      _
    // Predicated region
    $region6: #{tpu_custom_call.1} parent=1 // pred_check
      _
    $region7: #{tpu_custom_call.1} parent=1 // pred_check_branch
      %31 = sbr.rel (0) target = $region9
    $region8: #{tpu_custom_call.1} parent=1 // pred_region
      %s33 = ssub.s32 3072, 3072
      %34 = vsyncadd [#allocation8], %s33
      %s35 = sshll.u32 [#allocation7], 4
      %s36 = int_to_ptr.vmem [resolvable:$true] %s35
      %41 = dma.hbm_to_vmem [thread:$0]  %s1, 3072, %s36, [#allocation8], 128, 128, 8
    $region9: #{tpu_custom_call.1} parent=1 // pred_fallthru
      _
    // Predicated region
    $region10: #{tpu_custom_call.1} parent=1 // pred_check
      _
    $region11: #{tpu_custom_call.1} parent=1 // pred_check_branch
      %43 = sbr.rel (0) target = $region13
    $region12: #{tpu_custom_call.1} parent=1 // pred_region
      %s45 = ssub.s32 1024, 1024
      %46 = vsyncadd [#allocation8], %s45
      %s47 = sshll.u32 [#allocation9], 4
      %s48 = int_to_ptr.vmem [resolvable:$true] %s47
      %53 = dma.hbm_to_vmem [thread:$0]  %s2, 1024, %s48, [#allocation8], 128, 128, 8
    $region13: #{tpu_custom_call.1} parent=1 // pred_fallthru
      _
    // Predicated region
    $region14: #{tpu_custom_call.1} parent=1 // pred_check
      _
    $region15: #{tpu_custom_call.1} parent=1 // pred_check_branch
      %55 = sbr.rel (0) target = $region17
    $region16: #{tpu_custom_call.1} parent=1 // pred_region
      _
    $region17: #{tpu_custom_call.1} parent=1 // pred_fallthru
      _
    // Predicated region
    $region18: #{tpu_custom_call.1} parent=1 // pred_check
      _
    $region19: #{tpu_custom_call.1} parent=1 // pred_check_branch
      %57 = sbr.rel (0) target = $region21
    $region20: #{tpu_custom_call.1} parent=1 // pred_region
      _
    $region21: #{tpu_custom_call.1} parent=1 // pred_fallthru
      _
    // Predicated region
    $region22: #{tpu_custom_call.1} parent=1 // pred_check
      _
    $region23: #{tpu_custom_call.1} parent=1 // pred_check_branch
      %59 = sbr.rel (0) target = $region25
    $region24: #{tpu_custom_call.1} parent=1 // pred_region
      %s61 = ssub.s32 3072, 3072
      %62 = vsyncadd [#allocation11], %s61
      %s63 = sshll.u32 [#allocation10], 4
      %s64 = int_to_ptr.vmem [resolvable:$true] %s63
      %69 = dma.hbm_to_vmem [thread:$0]  %s5, 3072, %s64, [#allocation11], 128, 128, 8
    $region25: #{tpu_custom_call.1} parent=1 // pred_fallthru
      _
    // Predicated region
    $region26: #{tpu_custom_call.1} parent=1 // pred_check
      _
    $region27: #{tpu_custom_call.1} parent=1 // pred_check_branch
      %71 = sbr.rel (0) target = $region29
    $region28: #{tpu_custom_call.1} parent=1 // pred_region
      %s73 = ssub.s32 1024, 1024
      %74 = vsyncadd [#allocation11], %s73
      %s75 = sshll.u32 [#allocation12], 4
      %s76 = int_to_ptr.vmem [resolvable:$true] %s75
      %81 = dma.hbm_to_vmem [thread:$0]  %s6, 1024, %s76, [#allocation11], 128, 128, 8
    $region29: #{tpu_custom_call.1} parent=1 // pred_fallthru
      _
    // Predicated region
    $region30: #{tpu_custom_call.1} parent=1 // pred_check
      _
    $region31: #{tpu_custom_call.1} parent=1 // pred_check_branch
      %83 = sbr.rel (0) target = $region33
    $region32: #{tpu_custom_call.1} parent=1 // pred_region
      _
    $region33: #{tpu_custom_call.1} parent=1 // pred_fallthru
      _
    // Predicated region
    $region34: #{tpu_custom_call.1} parent=1 // pred_check
      _
    $region35: #{tpu_custom_call.1} parent=1 // pred_check_branch
      %85 = sbr.rel (0) target = $region37
    $region36: #{tpu_custom_call.1} parent=1 // pred_region
      _
    $region37: #{tpu_custom_call.1} parent=1 // pred_fallthru
      _
    // Predicated region
    $region38: #{tpu_custom_call.1} parent=1 // pred_check
      _
    $region39: #{tpu_custom_call.1} parent=1 // pred_check_branch
      %87 = sbr.rel (0) target = $region41
    $region40: #{tpu_custom_call.1} parent=1 // pred_region
      %88 = dma.done [#allocation5], 512
    $region41: #{tpu_custom_call.1} parent=1 // pred_fallthru
      _
    // Predicated region
    $region42: #{tpu_custom_call.1} parent=1 // pred_check
      _
    $region43: #{tpu_custom_call.1} parent=1 // pred_check_branch
      %90 = sbr.rel (0) target = $region45
    $region44: #{tpu_custom_call.1} parent=1 // pred_region
      %91 = dma.done [#allocation8], 3072
    $region45: #{tpu_custom_call.1} parent=1 // pred_fallthru
      _
    // Predicated region
    $region46: #{tpu_custom_call.1} parent=1 // pred_check
      _
    $region47: #{tpu_custom_call.1} parent=1 // pred_check_branch
      %93 = sbr.rel (0) target = $region49
    $region48: #{tpu_custom_call.1} parent=1 // pred_region
      %94 = dma.done [#allocation8], 1024
    $region49: #{tpu_custom_call.1} parent=1 // pred_fallthru
      _
    // Predicated region
    $region50: #{tpu_custom_call.1} parent=1 // pred_check
      _
    $region51: #{tpu_custom_call.1} parent=1 // pred_check_branch
      %96 = sbr.rel (0) target = $region53
    $region52: #{tpu_custom_call.1} parent=1 // pred_region
      %97 = dma.done [#allocation11], 3072
    $region53: #{tpu_custom_call.1} parent=1 // pred_fallthru
      _
    // Predicated region
    $region54: #{tpu_custom_call.1} parent=1 // pred_check
      _
    $region55: #{tpu_custom_call.1} parent=1 // pred_check_branch
      %99 = sbr.rel (0) target = $region57
    $region56: #{tpu_custom_call.1} parent=1 // pred_region
      %100 = dma.done [#allocation11], 1024
    $region57: #{tpu_custom_call.1} parent=1 // pred_fallthru
      _
    %vm101 = vcmask 516096
    %102 = vst.msk [vmem:[#allocation2] sm:$0x1] %vm101, 0.0
    %103 = vst.msk [vmem:[#allocation2 + $0x1] sm:$0x1] %vm101, 0.0
    %104 = vst.msk [vmem:[#allocation2 + $0x2] sm:$0x1] %vm101, 0.0
    %105 = vst.msk [vmem:[#allocation2 + $0x3] sm:$0x1] %vm101, 0.0
    %106 = vst.msk [vmem:[#allocation2 + $0x4] sm:$0x1] %vm101, 0.0
    %107 = vst.msk [vmem:[#allocation2 + $0x5] sm:$0x1] %vm101, 0.0
    %108 = vst.msk [vmem:[#allocation2 + $0x6] sm:$0x1] %vm101, 0.0
    %109 = vst.msk [vmem:[#allocation2 + $0x7] sm:$0x1] %vm101, 0.0
    %110 = vst.msk [vmem:[#allocation2 + $0x8] sm:$0x1] %vm101, 0.0
    %111 = vst.msk [vmem:[#allocation2 + $0x9] sm:$0x1] %vm101, 0.0
    %112 = vst.msk [vmem:[#allocation2 + $0xa] sm:$0x1] %vm101, 0.0
    %113 = vst.msk [vmem:[#allocation2 + $0xb] sm:$0x1] %vm101, 0.0
    %114 = vst.msk [vmem:[#allocation2 + $0xc] sm:$0x1] %vm101, 0.0
    %115 = vst.msk [vmem:[#allocation2 + $0xd] sm:$0x1] %vm101, 0.0
    %116 = vst.msk [vmem:[#allocation2 + $0xe] sm:$0x1] %vm101, 0.0
    %117 = vst.msk [vmem:[#allocation2 + $0xf] sm:$0x1] %vm101, 0.0
    %118 = vst.msk [vmem:[#allocation2 + $0x10] sm:$0x1] %vm101, 0.0
    %119 = vst.msk [vmem:[#allocation2 + $0x11] sm:$0x1] %vm101, 0.0
    %120 = vst.msk [vmem:[#allocation2 + $0x12] sm:$0x1] %vm101, 0.0
    %121 = vst.msk [vmem:[#allocation2 + $0x13] sm:$0x1] %vm101, 0.0
    %122 = vst.msk [vmem:[#allocation2 + $0x14] sm:$0x1] %vm101, 0.0
    %123 = vst.msk [vmem:[#allocation2 + $0x15] sm:$0x1] %vm101, 0.0
    %124 = vst.msk [vmem:[#allocation2 + $0x16] sm:$0x1] %vm101, 0.0
    %125 = vst.msk [vmem:[#allocation2 + $0x17] sm:$0x1] %vm101, 0.0
    %126 = vst.msk [vmem:[#allocation2 + $0x18] sm:$0x1] %vm101, 0.0
    %127 = vst.msk [vmem:[#allocation2 + $0x19] sm:$0x1] %vm101, 0.0
    %128 = vst.msk [vmem:[#allocation2 + $0x1a] sm:$0x1] %vm101, 0.0
    %129 = vst.msk [vmem:[#allocation2 + $0x1b] sm:$0x1] %vm101, 0.0
    %130 = vst.msk [vmem:[#allocation2 + $0x1c] sm:$0x1] %vm101, 0.0
    %131 = vst.msk [vmem:[#allocation2 + $0x1d] sm:$0x1] %vm101, 0.0
    %132 = vst.msk [vmem:[#allocation2 + $0x1e] sm:$0x1] %vm101, 0.0
    %133 = vst.msk [vmem:[#allocation2 + $0x1f] sm:$0x1] %vm101, 0.0
    %134 = vst.msk [vmem:[#allocation2 + $0x20] sm:$0x1] %vm101, 0.0
    %135 = vst.msk [vmem:[#allocation2 + $0x21] sm:$0x1] %vm101, 0.0
    %136 = vst.msk [vmem:[#allocation2 + $0x22] sm:$0x1] %vm101, 0.0
    %137 = vst.msk [vmem:[#allocation2 + $0x23] sm:$0x1] %vm101, 0.0
    %v138 = vld [vmem:[#allocation4] sm:$0xff]
    %v139 = vld [vmem:[#allocation4 + $0x8] sm:$0xff]
    %v140 = vld [vmem:[#allocation4 + $0x10] sm:$0xff]
    %v141 = vld [vmem:[#allocation4 + $0x18] sm:$0xff]
    %v146 = vcombine.high %v138, %v138
    %v148 = vunpack.c.l.s4 1966171168
    %v149 = vunpack.c.0.s8 %v148
    %v150 = vlaneseq
    %v151 = vshrl.u32 %v150, 7
    %v152 = vsub.s32 %v149, %v151
    %v153 = vrot.slane %v138, %v152
    %v155 = vunpack.c.l.s4 1966171168
    %v156 = vunpack.c.0.s8 %v155
    %v157 = vlaneseq
    %v158 = vshrl.u32 %v157, 7
    %v159 = vsub.s32 %v156, %v158
    %v160 = vrot.slane %v146, %v159
    %v161 = vcombine.high %v153, %v153
    %v162 = vcombine.high %v160, %v160
    %v164 = vunpack.c.l.s4 1966171168
    %v165 = vunpack.c.0.s8 %v164
    %v166 = vlaneseq
    %v167 = vshrl.u32 %v166, 7
    %v168 = vsub.s32 %v165, %v167
    %v169 = vrot.slane %v153, %v168
    %v171 = vunpack.c.l.s4 1966171168
    %v172 = vunpack.c.0.s8 %v171
    %v173 = vlaneseq
    %v174 = vshrl.u32 %v173, 7
    %v175 = vsub.s32 %v172, %v174
    %v176 = vrot.slane %v160, %v175
    %v178 = vunpack.c.l.s4 1966171168
    %v179 = vunpack.c.0.s8 %v178
    %v180 = vlaneseq
    %v181 = vshrl.u32 %v180, 7
    %v182 = vsub.s32 %v179, %v181
    %v183 = vrot.slane %v161, %v182
    %v185 = vunpack.c.l.s4 1966171168
    %v186 = vunpack.c.0.s8 %v185
    %v187 = vlaneseq
    %v188 = vshrl.u32 %v187, 7
    %v189 = vsub.s32 %v186, %v188
    %v190 = vrot.slane %v162, %v189
    %v191 = vcombine.high %v169, %v169
    %v192 = vcombine.high %v176, %v176
    %v193 = vcombine.high %v183, %v183
    %v194 = vcombine.high %v190, %v190
    %v195 = vcombine.high %v139, %v139
    %v197 = vunpack.c.l.s4 1966171168
    %v198 = vunpack.c.0.s8 %v197
    %v199 = vlaneseq
    %v200 = vshrl.u32 %v199, 7
    %v201 = vsub.s32 %v198, %v200
    %v202 = vrot.slane %v139, %v201
    %v204 = vunpack.c.l.s4 1966171168
    %v205 = vunpack.c.0.s8 %v204
    %v206 = vlaneseq
    %v207 = vshrl.u32 %v206, 7
    %v208 = vsub.s32 %v205, %v207
    %v209 = vrot.slane %v195, %v208
    %v210 = vcombine.high %v202, %v202
    %v211 = vcombine.high %v209, %v209
    %v213 = vunpack.c.l.s4 1966171168
    %v214 = vunpack.c.0.s8 %v213
    %v215 = vlaneseq
    %v216 = vshrl.u32 %v215, 7
    %v217 = vsub.s32 %v214, %v216
    %v218 = vrot.slane %v202, %v217
    %v220 = vunpack.c.l.s4 1966171168
    %v221 = vunpack.c.0.s8 %v220
    %v222 = vlaneseq
    %v223 = vshrl.u32 %v222, 7
    %v224 = vsub.s32 %v221, %v223
    %v225 = vrot.slane %v209, %v224
    %v227 = vunpack.c.l.s4 1966171168
    %v228 = vunpack.c.0.s8 %v227
    %v229 = vlaneseq
    %v230 = vshrl.u32 %v229, 7
    %v231 = vsub.s32 %v228, %v230
    %v232 = vrot.slane %v210, %v231
    %v234 = vunpack.c.l.s4 1966171168
    %v235 = vunpack.c.0.s8 %v234
    %v236 = vlaneseq
    %v237 = vshrl.u32 %v236, 7
    %v238 = vsub.s32 %v235, %v237
    %v239 = vrot.slane %v211, %v238
    %v240 = vcombine.high %v218, %v218
    %v241 = vcombine.high %v225, %v225
    %v242 = vcombine.high %v232, %v232
    %v243 = vcombine.high %v239, %v239
    %v244 = vcombine.high %v140, %v140
    %v246 = vunpack.c.l.s4 1966171168
    %v247 = vunpack.c.0.s8 %v246
    %v248 = vlaneseq
    %v249 = vshrl.u32 %v248, 7
    %v250 = vsub.s32 %v247, %v249
    %v251 = vrot.slane %v140, %v250
    %v253 = vunpack.c.l.s4 1966171168
    %v254 = vunpack.c.0.s8 %v253
    %v255 = vlaneseq
    %v256 = vshrl.u32 %v255, 7
    %v257 = vsub.s32 %v254, %v256
    %v258 = vrot.slane %v244, %v257
    %v259 = vcombine.high %v251, %v251
    %v260 = vcombine.high %v258, %v258
    %v262 = vunpack.c.l.s4 1966171168
    %v263 = vunpack.c.0.s8 %v262
    %v264 = vlaneseq
    %v265 = vshrl.u32 %v264, 7
    %v266 = vsub.s32 %v263, %v265
    %v267 = vrot.slane %v251, %v266
    %v269 = vunpack.c.l.s4 1966171168
    %v270 = vunpack.c.0.s8 %v269
    %v271 = vlaneseq
    %v272 = vshrl.u32 %v271, 7
    %v273 = vsub.s32 %v270, %v272
    %v274 = vrot.slane %v258, %v273
    %v276 = vunpack.c.l.s4 1966171168
    %v277 = vunpack.c.0.s8 %v276
    %v278 = vlaneseq
    %v279 = vshrl.u32 %v278, 7
    %v280 = vsub.s32 %v277, %v279
    %v281 = vrot.slane %v259, %v280
    %v283 = vunpack.c.l.s4 1966171168
    %v284 = vunpack.c.0.s8 %v283
    %v285 = vlaneseq
    %v286 = vshrl.u32 %v285, 7
    %v287 = vsub.s32 %v284, %v286
    %v288 = vrot.slane %v260, %v287
    %v289 = vcombine.high %v267, %v267
    %v290 = vcombine.high %v274, %v274
    %v291 = vcombine.high %v281, %v281
    %v292 = vcombine.high %v288, %v288
    %v293 = vcombine.high %v141, %v141
    %v295 = vunpack.c.l.s4 1966171168
    %v296 = vunpack.c.0.s8 %v295
    %v297 = vlaneseq
    %v298 = vshrl.u32 %v297, 7
    %v299 = vsub.s32 %v296, %v298
    %v300 = vrot.slane %v141, %v299
    %v302 = vunpack.c.l.s4 1966171168
    %v303 = vunpack.c.0.s8 %v302
    %v304 = vlaneseq
    %v305 = vshrl.u32 %v304, 7
    %v306 = vsub.s32 %v303, %v305
    %v307 = vrot.slane %v293, %v306
    %v308 = vcombine.high %v300, %v300
    %v309 = vcombine.high %v307, %v307
    %v311 = vunpack.c.l.s4 1966171168
    %v312 = vunpack.c.0.s8 %v311
    %v313 = vlaneseq
    %v314 = vshrl.u32 %v313, 7
    %v315 = vsub.s32 %v312, %v314
    %v316 = vrot.slane %v300, %v315
    %v318 = vunpack.c.l.s4 1966171168
    %v319 = vunpack.c.0.s8 %v318
    %v320 = vlaneseq
    %v321 = vshrl.u32 %v320, 7
    %v322 = vsub.s32 %v319, %v321
    %v323 = vrot.slane %v307, %v322
    %v325 = vunpack.c.l.s4 1966171168
    %v326 = vunpack.c.0.s8 %v325
    %v327 = vlaneseq
    %v328 = vshrl.u32 %v327, 7
    %v329 = vsub.s32 %v326, %v328
    %v330 = vrot.slane %v308, %v329
    %v332 = vunpack.c.l.s4 1966171168
    %v333 = vunpack.c.0.s8 %v332
    %v334 = vlaneseq
    %v335 = vshrl.u32 %v334, 7
    %v336 = vsub.s32 %v333, %v335
    %v337 = vrot.slane %v309, %v336
    %v338 = vcombine.high %v316, %v316
    %v339 = vcombine.high %v323, %v323
    %v340 = vcombine.high %v330, %v330
    %v341 = vcombine.high %v337, %v337
    %s374 = scalar_lea.vmem [#allocation2], 1
    %375 = vst.msk [vmem:[%s374] sm:$0x1] %vm101, %v169
    %376 = vst.msk [vmem:[%s374 + $0x1] sm:$0x1] %vm101, %v183
    %377 = vst.msk [vmem:[%s374 + $0x2] sm:$0x1] %vm101, %v191
    %378 = vst.msk [vmem:[%s374 + $0x3] sm:$0x1] %vm101, %v193
    %379 = vst.msk [vmem:[%s374 + $0x4] sm:$0x1] %vm101, %v176
    %380 = vst.msk [vmem:[%s374 + $0x5] sm:$0x1] %vm101, %v190
    %381 = vst.msk [vmem:[%s374 + $0x6] sm:$0x1] %vm101, %v192
    %382 = vst.msk [vmem:[%s374 + $0x7] sm:$0x1] %vm101, %v194
    %383 = vst.msk [vmem:[%s374 + $0x8] sm:$0x1] %vm101, %v218
    %384 = vst.msk [vmem:[%s374 + $0x9] sm:$0x1] %vm101, %v232
    %385 = vst.msk [vmem:[%s374 + $0xa] sm:$0x1] %vm101, %v240
    %386 = vst.msk [vmem:[%s374 + $0xb] sm:$0x1] %vm101, %v242
    %387 = vst.msk [vmem:[%s374 + $0xc] sm:$0x1] %vm101, %v225
    %388 = vst.msk [vmem:[%s374 + $0xd] sm:$0x1] %vm101, %v239
    %389 = vst.msk [vmem:[%s374 + $0xe] sm:$0x1] %vm101, %v241
    %390 = vst.msk [vmem:[%s374 + $0xf] sm:$0x1] %vm101, %v243
    %391 = vst.msk [vmem:[%s374 + $0x12] sm:$0x1] %vm101, %v267
    %392 = vst.msk [vmem:[%s374 + $0x13] sm:$0x1] %vm101, %v281
    %393 = vst.msk [vmem:[%s374 + $0x14] sm:$0x1] %vm101, %v289
    %394 = vst.msk [vmem:[%s374 + $0x15] sm:$0x1] %vm101, %v291
    %395 = vst.msk [vmem:[%s374 + $0x16] sm:$0x1] %vm101, %v274
    %396 = vst.msk [vmem:[%s374 + $0x17] sm:$0x1] %vm101, %v288
    %397 = vst.msk [vmem:[%s374 + $0x18] sm:$0x1] %vm101, %v290
    %398 = vst.msk [vmem:[%s374 + $0x19] sm:$0x1] %vm101, %v292
    %399 = vst.msk [vmem:[%s374 + $0x1a] sm:$0x1] %vm101, %v316
    %400 = vst.msk [vmem:[%s374 + $0x1b] sm:$0x1] %vm101, %v330
    %401 = vst.msk [vmem:[%s374 + $0x1c] sm:$0x1] %vm101, %v338
    %402 = vst.msk [vmem:[%s374 + $0x1d] sm:$0x1] %vm101, %v340
    %403 = vst.msk [vmem:[%s374 + $0x1e] sm:$0x1] %vm101, %v323
    %404 = vst.msk [vmem:[%s374 + $0x1f] sm:$0x1] %vm101, %v337
    %405 = vst.msk [vmem:[%s374 + $0x20] sm:$0x1] %vm101, %v339
    %406 = vst.msk [vmem:[%s374 + $0x21] sm:$0x1] %vm101, %v341
    %v407 = vld [vmem:[#allocation2] sm:$0x1]
    %v408 = vld [vmem:[#allocation2 + $0x1] sm:$0x1]
    %v409 = vld [vmem:[#allocation2 + $0x2] sm:$0x1]
    %v410 = vld [vmem:[#allocation2 + $0x3] sm:$0x1]
    %v411 = vld [vmem:[#allocation2 + $0x4] sm:$0x1]
    %v412 = vld [vmem:[#allocation2 + $0x5] sm:$0x1]
    %v413 = vld [vmem:[#allocation2 + $0x6] sm:$0x1]
    %v414 = vld [vmem:[#allocation2 + $0x7] sm:$0x1]
    %v415 = vld [vmem:[#allocation2 + $0x8] sm:$0x1]
    %v416 = vld [vmem:[#allocation2 + $0x9] sm:$0x1]
    %v417 = vld [vmem:[#allocation2 + $0xa] sm:$0x1]
    %v418 = vld [vmem:[#allocation2 + $0xb] sm:$0x1]
    %v419 = vld [vmem:[#allocation2 + $0xc] sm:$0x1]
    %v420 = vld [vmem:[#allocation2 + $0xd] sm:$0x1]
    %v421 = vld [vmem:[#allocation2 + $0xe] sm:$0x1]
    %v422 = vld [vmem:[#allocation2 + $0xf] sm:$0x1]
    %v423 = vld [vmem:[#allocation2 + $0x12] sm:$0x1]
    %v424 = vld [vmem:[#allocation2 + $0x13] sm:$0x1]
    %v425 = vld [vmem:[#allocation2 + $0x14] sm:$0x1]
    %v426 = vld [vmem:[#allocation2 + $0x15] sm:$0x1]
    %v427 = vld [vmem:[#allocation2 + $0x16] sm:$0x1]
    %v428 = vld [vmem:[#allocation2 + $0x17] sm:$0x1]
    %v429 = vld [vmem:[#allocation2 + $0x18] sm:$0x1]
    %v430 = vld [vmem:[#allocation2 + $0x19] sm:$0x1]
    %v431 = vld [vmem:[#allocation2 + $0x1a] sm:$0x1]
    %v432 = vld [vmem:[#allocation2 + $0x1b] sm:$0x1]
    %v433 = vld [vmem:[#allocation2 + $0x1c] sm:$0x1]
    %v434 = vld [vmem:[#allocation2 + $0x1d] sm:$0x1]
    %v435 = vld [vmem:[#allocation2 + $0x1e] sm:$0x1]
    %v436 = vld [vmem:[#allocation2 + $0x1f] sm:$0x1]
    %v437 = vld [vmem:[#allocation2 + $0x20] sm:$0x1]
    %v438 = vld [vmem:[#allocation2 + $0x21] sm:$0x1]
    %v439 = vld [vmem:[#allocation7] sm:$0xff]
    %v440 = vld [vmem:[#allocation7 + $0x8] sm:$0xff]
    %v441 = vld [vmem:[#allocation7 + $0x10] sm:$0xff]
    %v442 = vld [vmem:[#allocation7 + $0x18] sm:$0xff]
    %v443 = vld [vmem:[#allocation7 + $0x20] sm:$0xff]
    %v444 = vld [vmem:[#allocation7 + $0x28] sm:$0xff]
    %v445 = vld [vmem:[#allocation7 + $0x30] sm:$0xff]
    %v446 = vld [vmem:[#allocation7 + $0x38] sm:$0xff]
    %v447 = vld [vmem:[%s374] sm:$0x1]
    %v448 = vld [vmem:[%s374 + $0x1] sm:$0x1]
    %v449 = vld [vmem:[%s374 + $0x2] sm:$0x1]
    %v450 = vld [vmem:[%s374 + $0x3] sm:$0x1]
    %v451 = vld [vmem:[%s374 + $0x4] sm:$0x1]
    %v452 = vld [vmem:[%s374 + $0x5] sm:$0x1]
    %v453 = vld [vmem:[%s374 + $0x6] sm:$0x1]
    %v454 = vld [vmem:[%s374 + $0x7] sm:$0x1]
    %v455 = vld [vmem:[%s374 + $0x8] sm:$0x1]
    %v456 = vld [vmem:[%s374 + $0x9] sm:$0x1]
    %v457 = vld [vmem:[%s374 + $0xa] sm:$0x1]
    %v458 = vld [vmem:[%s374 + $0xb] sm:$0x1]
    %v459 = vld [vmem:[%s374 + $0xc] sm:$0x1]
    %v460 = vld [vmem:[%s374 + $0xd] sm:$0x1]
    %v461 = vld [vmem:[%s374 + $0xe] sm:$0x1]
    %v462 = vld [vmem:[%s374 + $0xf] sm:$0x1]
    %v463 = vld [vmem:[%s374 + $0x12] sm:$0x1]
    %v464 = vld [vmem:[%s374 + $0x13] sm:$0x1]
    %v465 = vld [vmem:[%s374 + $0x14] sm:$0x1]
    %v466 = vld [vmem:[%s374 + $0x15] sm:$0x1]
    %v467 = vld [vmem:[%s374 + $0x16] sm:$0x1]
    %v468 = vld [vmem:[%s374 + $0x17] sm:$0x1]
    %v469 = vld [vmem:[%s374 + $0x18] sm:$0x1]
    %v470 = vld [vmem:[%s374 + $0x19] sm:$0x1]
    %v471 = vld [vmem:[%s374 + $0x1a] sm:$0x1]
    %v472 = vld [vmem:[%s374 + $0x1b] sm:$0x1]
    %v473 = vld [vmem:[%s374 + $0x1c] sm:$0x1]
    %v474 = vld [vmem:[%s374 + $0x1d] sm:$0x1]
    %v475 = vld [vmem:[%s374 + $0x1e] sm:$0x1]
    %v476 = vld [vmem:[%s374 + $0x1f] sm:$0x1]
    %v477 = vld [vmem:[%s374 + $0x20] sm:$0x1]
    %v478 = vld [vmem:[%s374 + $0x21] sm:$0x1]
    %s479 = scalar_lea.vmem [#allocation7], 64
    %v480 = vld [vmem:[%s479] sm:$0xff]
    %v481 = vld [vmem:[%s479 + $0x8] sm:$0xff]
    %v482 = vld [vmem:[%s479 + $0x10] sm:$0xff]
    %v483 = vld [vmem:[%s479 + $0x18] sm:$0xff]
    %v484 = vld [vmem:[%s479 + $0x20] sm:$0xff]
    %v485 = vld [vmem:[%s479 + $0x28] sm:$0xff]
    %v486 = vld [vmem:[%s479 + $0x30] sm:$0xff]
    %v487 = vld [vmem:[%s479 + $0x38] sm:$0xff]
    %v520 = vcombine.low %v447, %v448
    %v521 = vcombine.low %v449, %v450
    %v522 = vcombine.low %v451, %v452
    %v523 = vcombine.low %v453, %v454
    %v525 = vunpack.c.l.s4 1966171168
    %v526 = vunpack.c.0.s8 %v525
    %v527 = vlaneseq
    %v528 = vshrl.u32 %v527, 7
    %v529 = vsub.s32 %v526, %v528
    %v530 = vrot.slane %v520, %v529
    %v532 = vunpack.c.l.s4 1966171168
    %v533 = vunpack.c.0.s8 %v532
    %v534 = vlaneseq
    %v535 = vshrl.u32 %v534, 7
    %v536 = vsub.s32 %v533, %v535
    %v537 = vrot.slane %v521, %v536
    %v539 = vunpack.c.l.s4 1966171168
    %v540 = vunpack.c.0.s8 %v539
    %v541 = vlaneseq
    %v542 = vshrl.u32 %v541, 7
    %v543 = vsub.s32 %v540, %v542
    %v544 = vrot.slane %v522, %v543
    %v546 = vunpack.c.l.s4 1966171168
    %v547 = vunpack.c.0.s8 %v546
    %v548 = vlaneseq
    %v549 = vshrl.u32 %v548, 7
    %v550 = vsub.s32 %v547, %v549
    %v551 = vrot.slane %v523, %v550
    %v552 = vcombine.low %v530, %v537
    %v553 = vcombine.low %v544, %v551
    %v555 = vunpack.c.l.s4 1966171168
    %v556 = vunpack.c.0.s8 %v555
    %v557 = vlaneseq
    %v558 = vshrl.u32 %v557, 7
    %v559 = vsub.s32 %v556, %v558
    %v560 = vrot.slane %v552, %v559
    %v562 = vunpack.c.l.s4 1966171168
    %v563 = vunpack.c.0.s8 %v562
    %v564 = vlaneseq
    %v565 = vshrl.u32 %v564, 7
    %v566 = vsub.s32 %v563, %v565
    %v567 = vrot.slane %v553, %v566
    %v568 = vcombine.low %v560, %v567
    %v569 = vcombine.low %v455, %v456
    %v570 = vcombine.low %v457, %v458
    %v571 = vcombine.low %v459, %v460
    %v572 = vcombine.low %v461, %v462
    %v574 = vunpack.c.l.s4 1966171168
    %v575 = vunpack.c.0.s8 %v574
    %v576 = vlaneseq
    %v577 = vshrl.u32 %v576, 7
    %v578 = vsub.s32 %v575, %v577
    %v579 = vrot.slane %v569, %v578
    %v581 = vunpack.c.l.s4 1966171168
    %v582 = vunpack.c.0.s8 %v581
    %v583 = vlaneseq
    %v584 = vshrl.u32 %v583, 7
    %v585 = vsub.s32 %v582, %v584
    %v586 = vrot.slane %v570, %v585
    %v588 = vunpack.c.l.s4 1966171168
    %v589 = vunpack.c.0.s8 %v588
    %v590 = vlaneseq
    %v591 = vshrl.u32 %v590, 7
    %v592 = vsub.s32 %v589, %v591
    %v593 = vrot.slane %v571, %v592
    %v595 = vunpack.c.l.s4 1966171168
    %v596 = vunpack.c.0.s8 %v595
    %v597 = vlaneseq
    %v598 = vshrl.u32 %v597, 7
    %v599 = vsub.s32 %v596, %v598
    %v600 = vrot.slane %v572, %v599
    %v601 = vcombine.low %v579, %v586
    %v602 = vcombine.low %v593, %v600
    %v604 = vunpack.c.l.s4 1966171168
    %v605 = vunpack.c.0.s8 %v604
    %v606 = vlaneseq
    %v607 = vshrl.u32 %v606, 7
    %v608 = vsub.s32 %v605, %v607
    %v609 = vrot.slane %v601, %v608
    %v611 = vunpack.c.l.s4 1966171168
    %v612 = vunpack.c.0.s8 %v611
    %v613 = vlaneseq
    %v614 = vshrl.u32 %v613, 7
    %v615 = vsub.s32 %v612, %v614
    %v616 = vrot.slane %v602, %v615
    %v617 = vcombine.low %v609, %v616
    %v618 = vcombine.low %v463, %v464
    %v619 = vcombine.low %v465, %v466
    %v620 = vcombine.low %v467, %v468
    %v621 = vcombine.low %v469, %v470
    %v623 = vunpack.c.l.s4 1966171168
    %v624 = vunpack.c.0.s8 %v623
    %v625 = vlaneseq
    %v626 = vshrl.u32 %v625, 7
    %v627 = vsub.s32 %v624, %v626
    %v628 = vrot.slane %v618, %v627
    %v630 = vunpack.c.l.s4 1966171168
    %v631 = vunpack.c.0.s8 %v630
    %v632 = vlaneseq
    %v633 = vshrl.u32 %v632, 7
    %v634 = vsub.s32 %v631, %v633
    %v635 = vrot.slane %v619, %v634
    %v637 = vunpack.c.l.s4 1966171168
    %v638 = vunpack.c.0.s8 %v637
    %v639 = vlaneseq
    %v640 = vshrl.u32 %v639, 7
    %v641 = vsub.s32 %v638, %v640
    %v642 = vrot.slane %v620, %v641
    %v644 = vunpack.c.l.s4 1966171168
    %v645 = vunpack.c.0.s8 %v644
    %v646 = vlaneseq
    %v647 = vshrl.u32 %v646, 7
    %v648 = vsub.s32 %v645, %v647
    %v649 = vrot.slane %v621, %v648
    %v650 = vcombine.low %v628, %v635
    %v651 = vcombine.low %v642, %v649
    %v653 = vunpack.c.l.s4 1966171168
    %v654 = vunpack.c.0.s8 %v653
    %v655 = vlaneseq
    %v656 = vshrl.u32 %v655, 7
    %v657 = vsub.s32 %v654, %v656
    %v658 = vrot.slane %v650, %v657
    %v660 = vunpack.c.l.s4 1966171168
    %v661 = vunpack.c.0.s8 %v660
    %v662 = vlaneseq
    %v663 = vshrl.u32 %v662, 7
    %v664 = vsub.s32 %v661, %v663
    %v665 = vrot.slane %v651, %v664
    %v666 = vcombine.low %v658, %v665
    %v667 = vcombine.low %v471, %v472
    %v668 = vcombine.low %v473, %v474
    %v669 = vcombine.low %v475, %v476
    %v670 = vcombine.low %v477, %v478
    %v672 = vunpack.c.l.s4 1966171168
    %v673 = vunpack.c.0.s8 %v672
    %v674 = vlaneseq
    %v675 = vshrl.u32 %v674, 7
    %v676 = vsub.s32 %v673, %v675
    %v677 = vrot.slane %v667, %v676
    %v679 = vunpack.c.l.s4 1966171168
    %v680 = vunpack.c.0.s8 %v679
    %v681 = vlaneseq
    %v682 = vshrl.u32 %v681, 7
    %v683 = vsub.s32 %v680, %v682
    %v684 = vrot.slane %v668, %v683
    %v686 = vunpack.c.l.s4 1966171168
    %v687 = vunpack.c.0.s8 %v686
    %v688 = vlaneseq
    %v689 = vshrl.u32 %v688, 7
    %v690 = vsub.s32 %v687, %v689
    %v691 = vrot.slane %v669, %v690
    %v693 = vunpack.c.l.s4 1966171168
    %v694 = vunpack.c.0.s8 %v693
    %v695 = vlaneseq
    %v696 = vshrl.u32 %v695, 7
    %v697 = vsub.s32 %v694, %v696
    %v698 = vrot.slane %v670, %v697
    %v699 = vcombine.low %v677, %v684
    %v700 = vcombine.low %v691, %v698
    %v702 = vunpack.c.l.s4 1966171168
    %v703 = vunpack.c.0.s8 %v702
    %v704 = vlaneseq
    %v705 = vshrl.u32 %v704, 7
    %v706 = vsub.s32 %v703, %v705
    %v707 = vrot.slane %v699, %v706
    %v709 = vunpack.c.l.s4 1966171168
    %v710 = vunpack.c.0.s8 %v709
    %v711 = vlaneseq
    %v712 = vshrl.u32 %v711, 7
    %v713 = vsub.s32 %v710, %v712
    %v714 = vrot.slane %v700, %v713
    %v715 = vcombine.low %v707, %v714
    %vm716 = vcmask 523264
    %v717 = vsel %vm716, %v568, 0
    %v719 = vsel %vm716, %v617, 0
    %v721 = vsel %vm716, %v666, 0
    %v723 = vsel %vm716, %v715, 0
    %725 = vmatprep.subr.mxu0 0.0
    %726 = vmatpush1.msra.mxu0 0.0
    %727 = vmatprep.subr.mxu0 0.0
    %728 = vmatpush1.msra.mxu0 0.0
    %729 = vmatprep.subr.mxu0 0.0
    %730 = vmatpush1.msra.mxu0 0.0
    %731 = vmatprep.subr.mxu0 0.0
    %732 = vmatpush1.msra.mxu0 0.0
    %733 = vmatprep.subr.mxu0 0.0
    %734 = vmatpush1.msra.mxu0 0.0
    %735 = vmatprep.subr.mxu0 0.0
    %736 = vmatpush1.msra.mxu0 0.0
    %737 = vmatprep.subr.mxu0 0.0
    %738 = vmatpush1.msra.mxu0 0.0
    %739 = vmatprep.subr.mxu0 0.0
    %740 = vmatpush1.msra.mxu0 0.0
    %741 = vmatprep.subr.mxu0 0.0
    %742 = vmatpush1.msra.mxu0 %v487
    %743 = vmatprep.subr.mxu0 0.0
    %744 = vmatpush1.msra.mxu0 %v486
    %745 = vmatprep.subr.mxu0 0.0
    %746 = vmatpush1.msra.mxu0 %v485
    %747 = vmatprep.subr.mxu0 0.0
    %748 = vmatpush1.msra.mxu0 %v484
    %749 = vmatprep.subr.mxu0 0.0
    %750 = vmatpush1.msra.mxu0 %v483
    %751 = vmatprep.subr.mxu0 0.0
    %752 = vmatpush1.msra.mxu0 %v482
    %753 = vmatprep.subr.mxu0 0.0
    %754 = vmatpush1.msra.mxu0 %v481
    %755 = vmatprep.subr.mxu0 0.0
    %756 = vmatpush1.msra.mxu0 %v480
    %757 = vmatprep.subr.mxu0 0.0
    %758 = vmatpush2.msra.mxu0 0.0
    %759 = vmatprep.subr.mxu0 0.0
    %760 = vmatpush2.msra.mxu0 0.0
    %761 = vmatprep.subr.mxu0 0.0
    %762 = vmatpush2.msra.mxu0 0.0
    %763 = vmatprep.subr.mxu0 0.0
    %764 = vmatpush2.msra.mxu0 0.0
    %765 = vmatprep.subr.mxu0 0.0
    %766 = vmatpush2.msra.mxu0 0.0
    %767 = vmatprep.subr.mxu0 0.0
    %768 = vmatpush2.msra.mxu0 0.0
    %769 = vmatprep.subr.mxu0 0.0
    %770 = vmatpush2.msra.mxu0 0.0
    %771 = vmatprep.subr.mxu0 0.0
    %772 = vmatpush2.msra.mxu0 0.0
    %773 = vmatprep.subr.mxu0 0.0
    %774 = vmatpush2.msra.mxu0 0.0
    %775 = vmatprep.subr.mxu0 0.0
    %776 = vmatpush2.msra.mxu0 0.0
    %777 = vmatprep.subr.mxu0 0.0
    %778 = vmatpush2.msra.mxu0 0.0
    %779 = vmatprep.subr.mxu0 0.0
    %780 = vmatpush2.msra.mxu0 0.0
    %781 = vmatprep.subr.mxu0 0.0
    %782 = vmatpush2.msra.mxu0 0.0
    %783 = vmatprep.subr.mxu0 0.0
    %784 = vmatpush2.msra.mxu0 0.0
    %785 = vmatprep.subr.mxu0 0.0
    %786 = vmatpush2.msra.mxu0 0.0
    %787 = vmatprep.subr.mxu0 0.0
    %788 = vmatpush2.msra.mxu0 0.0
    %789 = vmatprep.mubr.f32.mxu0 0.0
    %790 = vmatmul.mubr.f32.gmra.mxu0 %v717
    %v791 = vpop.f32.mrf.mxu0
    %v792 = vadd.f32 0.0, %v791
    %v793 = vpop.f32.mrf.mxu0
    %794 = vmatprep.mubr.f32.mxu0 0.0
    %795 = vmatmul.mubr.f32.gmra.mxu0 %v719
    %v796 = vpop.f32.mrf.mxu0
    %v797 = vadd.f32 0.0, %v796
    %v798 = vpop.f32.mrf.mxu0
    %799 = vmatprep.mubr.f32.mxu0 0.0
    %800 = vmatmul.mubr.f32.gmra.mxu0 %v721
    %v801 = vpop.f32.mrf.mxu0
    %v802 = vadd.f32 0.0, %v801
    %v803 = vpop.f32.mrf.mxu0
    %804 = vmatprep.mubr.f32.mxu0 0.0
    %805 = vmatmul.mubr.f32.gmra.mxu0 %v723
    %v806 = vpop.f32.mrf.mxu0
    %v807 = vadd.f32 0.0, %v806
    %v808 = vpop.f32.mrf.mxu0
    %809 = vdwg.mxu0
    %v842 = vcombine.low %v407, %v408
    %v843 = vcombine.low %v409, %v410
    %v844 = vcombine.low %v411, %v412
    %v845 = vcombine.low %v413, %v414
    %v847 = vunpack.c.l.s4 1966171168
    %v848 = vunpack.c.0.s8 %v847
    %v849 = vlaneseq
    %v850 = vshrl.u32 %v849, 7
    %v851 = vsub.s32 %v848, %v850
    %v852 = vrot.slane %v842, %v851
    %v854 = vunpack.c.l.s4 1966171168
    %v855 = vunpack.c.0.s8 %v854
    %v856 = vlaneseq
    %v857 = vshrl.u32 %v856, 7
    %v858 = vsub.s32 %v855, %v857
    %v859 = vrot.slane %v843, %v858
    %v861 = vunpack.c.l.s4 1966171168
    %v862 = vunpack.c.0.s8 %v861
    %v863 = vlaneseq
    %v864 = vshrl.u32 %v863, 7
    %v865 = vsub.s32 %v862, %v864
    %v866 = vrot.slane %v844, %v865
    %v868 = vunpack.c.l.s4 1966171168
    %v869 = vunpack.c.0.s8 %v868
    %v870 = vlaneseq
    %v871 = vshrl.u32 %v870, 7
    %v872 = vsub.s32 %v869, %v871
    %v873 = vrot.slane %v845, %v872
    %v874 = vcombine.low %v852, %v859
    %v875 = vcombine.low %v866, %v873
    %v877 = vunpack.c.l.s4 1966171168
    %v878 = vunpack.c.0.s8 %v877
    %v879 = vlaneseq
    %v880 = vshrl.u32 %v879, 7
    %v881 = vsub.s32 %v878, %v880
    %v882 = vrot.slane %v874, %v881
    %v884 = vunpack.c.l.s4 1966171168
    %v885 = vunpack.c.0.s8 %v884
    %v886 = vlaneseq
    %v887 = vshrl.u32 %v886, 7
    %v888 = vsub.s32 %v885, %v887
    %v889 = vrot.slane %v875, %v888
    %v890 = vcombine.low %v882, %v889
    %v891 = vcombine.low %v415, %v416
    %v892 = vcombine.low %v417, %v418
    %v893 = vcombine.low %v419, %v420
    %v894 = vcombine.low %v421, %v422
    %v896 = vunpack.c.l.s4 1966171168
    %v897 = vunpack.c.0.s8 %v896
    %v898 = vlaneseq
    %v899 = vshrl.u32 %v898, 7
    %v900 = vsub.s32 %v897, %v899
    %v901 = vrot.slane %v891, %v900
    %v903 = vunpack.c.l.s4 1966171168
    %v904 = vunpack.c.0.s8 %v903
    %v905 = vlaneseq
    %v906 = vshrl.u32 %v905, 7
    %v907 = vsub.s32 %v904, %v906
    %v908 = vrot.slane %v892, %v907
    %v910 = vunpack.c.l.s4 1966171168
    %v911 = vunpack.c.0.s8 %v910
    %v912 = vlaneseq
    %v913 = vshrl.u32 %v912, 7
    %v914 = vsub.s32 %v911, %v913
    %v915 = vrot.slane %v893, %v914
    %v917 = vunpack.c.l.s4 1966171168
    %v918 = vunpack.c.0.s8 %v917
    %v919 = vlaneseq
    %v920 = vshrl.u32 %v919, 7
    %v921 = vsub.s32 %v918, %v920
    %v922 = vrot.slane %v894, %v921
    %v923 = vcombine.low %v901, %v908
    %v924 = vcombine.low %v915, %v922
    %v926 = vunpack.c.l.s4 1966171168
    %v927 = vunpack.c.0.s8 %v926
    %v928 = vlaneseq
    %v929 = vshrl.u32 %v928, 7
    %v930 = vsub.s32 %v927, %v929
    %v931 = vrot.slane %v923, %v930
    %v933 = vunpack.c.l.s4 1966171168
    %v934 = vunpack.c.0.s8 %v933
    %v935 = vlaneseq
    %v936 = vshrl.u32 %v935, 7
    %v937 = vsub.s32 %v934, %v936
    %v938 = vrot.slane %v924, %v937
    %v939 = vcombine.low %v931, %v938
    %v940 = vcombine.low %v423, %v424
    %v941 = vcombine.low %v425, %v426
    %v942 = vcombine.low %v427, %v428
    %v943 = vcombine.low %v429, %v430
    %v945 = vunpack.c.l.s4 1966171168
    %v946 = vunpack.c.0.s8 %v945
    %v947 = vlaneseq
    %v948 = vshrl.u32 %v947, 7
    %v949 = vsub.s32 %v946, %v948
    %v950 = vrot.slane %v940, %v949
    %v952 = vunpack.c.l.s4 1966171168
    %v953 = vunpack.c.0.s8 %v952
    %v954 = vlaneseq
    %v955 = vshrl.u32 %v954, 7
    %v956 = vsub.s32 %v953, %v955
    %v957 = vrot.slane %v941, %v956
    %v959 = vunpack.c.l.s4 1966171168
    %v960 = vunpack.c.0.s8 %v959
    %v961 = vlaneseq
    %v962 = vshrl.u32 %v961, 7
    %v963 = vsub.s32 %v960, %v962
    %v964 = vrot.slane %v942, %v963
    %v966 = vunpack.c.l.s4 1966171168
    %v967 = vunpack.c.0.s8 %v966
    %v968 = vlaneseq
    %v969 = vshrl.u32 %v968, 7
    %v970 = vsub.s32 %v967, %v969
    %v971 = vrot.slane %v943, %v970
    %v972 = vcombine.low %v950, %v957
    %v973 = vcombine.low %v964, %v971
    %v975 = vunpack.c.l.s4 1966171168
    %v976 = vunpack.c.0.s8 %v975
    %v977 = vlaneseq
    %v978 = vshrl.u32 %v977, 7
    %v979 = vsub.s32 %v976, %v978
    %v980 = vrot.slane %v972, %v979
    %v982 = vunpack.c.l.s4 1966171168
    %v983 = vunpack.c.0.s8 %v982
    %v984 = vlaneseq
    %v985 = vshrl.u32 %v984, 7
    %v986 = vsub.s32 %v983, %v985
    %v987 = vrot.slane %v973, %v986
    %v988 = vcombine.low %v980, %v987
    %v989 = vcombine.low %v431, %v432
    %v990 = vcombine.low %v433, %v434
    %v991 = vcombine.low %v435, %v436
    %v992 = vcombine.low %v437, %v438
    %v994 = vunpack.c.l.s4 1966171168
    %v995 = vunpack.c.0.s8 %v994
    %v996 = vlaneseq
    %v997 = vshrl.u32 %v996, 7
    %v998 = vsub.s32 %v995, %v997
    %v999 = vrot.slane %v989, %v998
    %v1001 = vunpack.c.l.s4 1966171168
    %v1002 = vunpack.c.0.s8 %v1001
    %v1003 = vlaneseq
    %v1004 = vshrl.u32 %v1003, 7
    %v1005 = vsub.s32 %v1002, %v1004
    %v1006 = vrot.slane %v990, %v1005
    %v1008 = vunpack.c.l.s4 1966171168
    %v1009 = vunpack.c.0.s8 %v1008
    %v1010 = vlaneseq
    %v1011 = vshrl.u32 %v1010, 7
    %v1012 = vsub.s32 %v1009, %v1011
    %v1013 = vrot.slane %v991, %v1012
    %v1015 = vunpack.c.l.s4 1966171168
    %v1016 = vunpack.c.0.s8 %v1015
    %v1017 = vlaneseq
    %v1018 = vshrl.u32 %v1017, 7
    %v1019 = vsub.s32 %v1016, %v1018
    %v1020 = vrot.slane %v992, %v1019
    %v1021 = vcombine.low %v999, %v1006
    %v1022 = vcombine.low %v1013, %v1020
    %v1024 = vunpack.c.l.s4 1966171168
    %v1025 = vunpack.c.0.s8 %v1024
    %v1026 = vlaneseq
    %v1027 = vshrl.u32 %v1026, 7
    %v1028 = vsub.s32 %v1025, %v1027
    %v1029 = vrot.slane %v1021, %v1028
    %v1031 = vunpack.c.l.s4 1966171168
    %v1032 = vunpack.c.0.s8 %v1031
    %v1033 = vlaneseq
    %v1034 = vshrl.u32 %v1033, 7
    %v1035 = vsub.s32 %v1032, %v1034
    %v1036 = vrot.slane %v1022, %v1035
    %v1037 = vcombine.low %v1029, %v1036
    %v1038 = vsel %vm716, %v890, 0
    %v1040 = vsel %vm716, %v939, 0
    %v1042 = vsel %vm716, %v988, 0
    %v1044 = vsel %vm716, %v1037, 0
    %1046 = vmatprep.subr.mxu0 0.0
    %1047 = vmatpush1.msra.mxu0 0.0
    %1048 = vmatprep.subr.mxu0 0.0
    %1049 = vmatpush1.msra.mxu0 0.0
    %1050 = vmatprep.subr.mxu0 0.0
    %1051 = vmatpush1.msra.mxu0 0.0
    %1052 = vmatprep.subr.mxu0 0.0
    %1053 = vmatpush1.msra.mxu0 0.0
    %1054 = vmatprep.subr.mxu0 0.0
    %1055 = vmatpush1.msra.mxu0 0.0
    %1056 = vmatprep.subr.mxu0 0.0
    %1057 = vmatpush1.msra.mxu0 0.0
    %1058 = vmatprep.subr.mxu0 0.0
    %1059 = vmatpush1.msra.mxu0 0.0
    %1060 = vmatprep.subr.mxu0 0.0
    %1061 = vmatpush1.msra.mxu0 0.0
    %1062 = vmatprep.subr.mxu0 0.0
    %1063 = vmatpush1.msra.mxu0 %v446
    %1064 = vmatprep.subr.mxu0 0.0
    %1065 = vmatpush1.msra.mxu0 %v445
    %1066 = vmatprep.subr.mxu0 0.0
    %1067 = vmatpush1.msra.mxu0 %v444
    %1068 = vmatprep.subr.mxu0 0.0
    %1069 = vmatpush1.msra.mxu0 %v443
    %1070 = vmatprep.subr.mxu0 0.0
    %1071 = vmatpush1.msra.mxu0 %v442
    %1072 = vmatprep.subr.mxu0 0.0
    %1073 = vmatpush1.msra.mxu0 %v441
    %1074 = vmatprep.subr.mxu0 0.0
    %1075 = vmatpush1.msra.mxu0 %v440
    %1076 = vmatprep.subr.mxu0 0.0
    %1077 = vmatpush1.msra.mxu0 %v439
    %1078 = vmatprep.subr.mxu0 0.0
    %1079 = vmatpush2.msra.mxu0 0.0
    %1080 = vmatprep.subr.mxu0 0.0
    %1081 = vmatpush2.msra.mxu0 0.0
    %1082 = vmatprep.subr.mxu0 0.0
    %1083 = vmatpush2.msra.mxu0 0.0
    %1084 = vmatprep.subr.mxu0 0.0
    %1085 = vmatpush2.msra.mxu0 0.0
    %1086 = vmatprep.subr.mxu0 0.0
    %1087 = vmatpush2.msra.mxu0 0.0
    %1088 = vmatprep.subr.mxu0 0.0
    %1089 = vmatpush2.msra.mxu0 0.0
    %1090 = vmatprep.subr.mxu0 0.0
    %1091 = vmatpush2.msra.mxu0 0.0
    %1092 = vmatprep.subr.mxu0 0.0
    %1093 = vmatpush2.msra.mxu0 0.0
    %1094 = vmatprep.subr.mxu0 0.0
    %1095 = vmatpush2.msra.mxu0 0.0
    %1096 = vmatprep.subr.mxu0 0.0
    %1097 = vmatpush2.msra.mxu0 0.0
    %1098 = vmatprep.subr.mxu0 0.0
    %1099 = vmatpush2.msra.mxu0 0.0
    %1100 = vmatprep.subr.mxu0 0.0
    %1101 = vmatpush2.msra.mxu0 0.0
    %1102 = vmatprep.subr.mxu0 0.0
    %1103 = vmatpush2.msra.mxu0 0.0
    %1104 = vmatprep.subr.mxu0 0.0
    %1105 = vmatpush2.msra.mxu0 0.0
    %1106 = vmatprep.subr.mxu0 0.0
    %1107 = vmatpush2.msra.mxu0 0.0
    %1108 = vmatprep.subr.mxu0 0.0
    %1109 = vmatpush2.msra.mxu0 0.0
    %1110 = vmatprep.mubr.f32.mxu0 0.0
    %1111 = vmatmul.mubr.f32.gmra.mxu0 %v1038
    %v1112 = vpop.f32.mrf.mxu0
    %v1113 = vadd.f32 %v792, %v1112
    %v1114 = vpop.f32.mrf.mxu0
    %1115 = vmatprep.mubr.f32.mxu0 0.0
    %1116 = vmatmul.mubr.f32.gmra.mxu0 %v1040
    %v1117 = vpop.f32.mrf.mxu0
    %v1118 = vadd.f32 %v797, %v1117
    %v1119 = vpop.f32.mrf.mxu0
    %1120 = vmatprep.mubr.f32.mxu0 0.0
    %1121 = vmatmul.mubr.f32.gmra.mxu0 %v1042
    %v1122 = vpop.f32.mrf.mxu0
    %v1123 = vadd.f32 %v802, %v1122
    %v1124 = vpop.f32.mrf.mxu0
    %1125 = vmatprep.mubr.f32.mxu0 0.0
    %1126 = vmatmul.mubr.f32.gmra.mxu0 %v1044
    %v1127 = vpop.f32.mrf.mxu0
    %v1128 = vadd.f32 %v807, %v1127
    %v1129 = vpop.f32.mrf.mxu0
    %1130 = vdwg.mxu0
    %s1131 = scalar_lea.vmem [#allocation2], 2
    %v1132 = vld [vmem:[%s1131] sm:$0x1]
    %v1133 = vld [vmem:[%s1131 + $0x1] sm:$0x1]
    %v1134 = vld [vmem:[%s1131 + $0x2] sm:$0x1]
    %v1135 = vld [vmem:[%s1131 + $0x3] sm:$0x1]
    %v1136 = vld [vmem:[%s1131 + $0x4] sm:$0x1]
    %v1137 = vld [vmem:[%s1131 + $0x5] sm:$0x1]
    %v1138 = vld [vmem:[%s1131 + $0x6] sm:$0x1]
    %v1139 = vld [vmem:[%s1131 + $0x7] sm:$0x1]
    %v1140 = vld [vmem:[%s1131 + $0x8] sm:$0x1]
    %v1141 = vld [vmem:[%s1131 + $0x9] sm:$0x1]
    %v1142 = vld [vmem:[%s1131 + $0xa] sm:$0x1]
    %v1143 = vld [vmem:[%s1131 + $0xb] sm:$0x1]
    %v1144 = vld [vmem:[%s1131 + $0xc] sm:$0x1]
    %v1145 = vld [vmem:[%s1131 + $0xd] sm:$0x1]
    %v1146 = vld [vmem:[%s1131 + $0xe] sm:$0x1]
    %v1147 = vld [vmem:[%s1131 + $0xf] sm:$0x1]
    %v1148 = vld [vmem:[%s1131 + $0x12] sm:$0x1]
    %v1149 = vld [vmem:[%s1131 + $0x13] sm:$0x1]
    %v1150 = vld [vmem:[%s1131 + $0x14] sm:$0x1]
    %v1151 = vld [vmem:[%s1131 + $0x15] sm:$0x1]
    %v1152 = vld [vmem:[%s1131 + $0x16] sm:$0x1]
    %v1153 = vld [vmem:[%s1131 + $0x17] sm:$0x1]
    %v1154 = vld [vmem:[%s1131 + $0x18] sm:$0x1]
    %v1155 = vld [vmem:[%s1131 + $0x19] sm:$0x1]
    %v1156 = vld [vmem:[%s1131 + $0x1a] sm:$0x1]
    %v1157 = vld [vmem:[%s1131 + $0x1b] sm:$0x1]
    %v1158 = vld [vmem:[%s1131 + $0x1c] sm:$0x1]
    %v1159 = vld [vmem:[%s1131 + $0x1d] sm:$0x1]
    %v1160 = vld [vmem:[%s1131 + $0x1e] sm:$0x1]
    %v1161 = vld [vmem:[%s1131 + $0x1f] sm:$0x1]
    %v1162 = vld [vmem:[%s1131 + $0x20] sm:$0x1]
    %v1163 = vld [vmem:[%s1131 + $0x21] sm:$0x1]
    %s1164 = scalar_lea.vmem [#allocation7], 128
    %v1165 = vld [vmem:[%s1164] sm:$0xff]
    %v1166 = vld [vmem:[%s1164 + $0x8] sm:$0xff]
    %v1167 = vld [vmem:[%s1164 + $0x10] sm:$0xff]
    %v1168 = vld [vmem:[%s1164 + $0x18] sm:$0xff]
    %v1169 = vld [vmem:[%s1164 + $0x20] sm:$0xff]
    %v1170 = vld [vmem:[%s1164 + $0x28] sm:$0xff]
    %v1171 = vld [vmem:[%s1164 + $0x30] sm:$0xff]
    %v1172 = vld [vmem:[%s1164 + $0x38] sm:$0xff]
    %v1205 = vcombine.low %v1132, %v1133
    %v1206 = vcombine.low %v1134, %v1135
    %v1207 = vcombine.low %v1136, %v1137
    %v1208 = vcombine.low %v1138, %v1139
    %v1210 = vunpack.c.l.s4 1966171168
    %v1211 = vunpack.c.0.s8 %v1210
    %v1212 = vlaneseq
    %v1213 = vshrl.u32 %v1212, 7
    %v1214 = vsub.s32 %v1211, %v1213
    %v1215 = vrot.slane %v1205, %v1214
    %v1217 = vunpack.c.l.s4 1966171168
    %v1218 = vunpack.c.0.s8 %v1217
    %v1219 = vlaneseq
    %v1220 = vshrl.u32 %v1219, 7
    %v1221 = vsub.s32 %v1218, %v1220
    %v1222 = vrot.slane %v1206, %v1221
    %v1224 = vunpack.c.l.s4 1966171168
    %v1225 = vunpack.c.0.s8 %v1224
    %v1226 = vlaneseq
    %v1227 = vshrl.u32 %v1226, 7
    %v1228 = vsub.s32 %v1225, %v1227
    %v1229 = vrot.slane %v1207, %v1228
    %v1231 = vunpack.c.l.s4 1966171168
    %v1232 = vunpack.c.0.s8 %v1231
    %v1233 = vlaneseq
    %v1234 = vshrl.u32 %v1233, 7
    %v1235 = vsub.s32 %v1232, %v1234
    %v1236 = vrot.slane %v1208, %v1235
    %v1237 = vcombine.low %v1215, %v1222
    %v1238 = vcombine.low %v1229, %v1236
    %v1240 = vunpack.c.l.s4 1966171168
    %v1241 = vunpack.c.0.s8 %v1240
    %v1242 = vlaneseq
    %v1243 = vshrl.u32 %v1242, 7
    %v1244 = vsub.s32 %v1241, %v1243
    %v1245 = vrot.slane %v1237, %v1244
    %v1247 = vunpack.c.l.s4 1966171168
    %v1248 = vunpack.c.0.s8 %v1247
    %v1249 = vlaneseq
    %v1250 = vshrl.u32 %v1249, 7
    %v1251 = vsub.s32 %v1248, %v1250
    %v1252 = vrot.slane %v1238, %v1251
    %v1253 = vcombine.low %v1245, %v1252
    %v1254 = vcombine.low %v1140, %v1141
    %v1255 = vcombine.low %v1142, %v1143
    %v1256 = vcombine.low %v1144, %v1145
    %v1257 = vcombine.low %v1146, %v1147
    %v1259 = vunpack.c.l.s4 1966171168
    %v1260 = vunpack.c.0.s8 %v1259
    %v1261 = vlaneseq
    %v1262 = vshrl.u32 %v1261, 7
    %v1263 = vsub.s32 %v1260, %v1262
    %v1264 = vrot.slane %v1254, %v1263
    %v1266 = vunpack.c.l.s4 1966171168
    %v1267 = vunpack.c.0.s8 %v1266
    %v1268 = vlaneseq
    %v1269 = vshrl.u32 %v1268, 7
    %v1270 = vsub.s32 %v1267, %v1269
    %v1271 = vrot.slane %v1255, %v1270
    %v1273 = vunpack.c.l.s4 1966171168
    %v1274 = vunpack.c.0.s8 %v1273
    %v1275 = vlaneseq
    %v1276 = vshrl.u32 %v1275, 7
    %v1277 = vsub.s32 %v1274, %v1276
    %v1278 = vrot.slane %v1256, %v1277
    %v1280 = vunpack.c.l.s4 1966171168
    %v1281 = vunpack.c.0.s8 %v1280
    %v1282 = vlaneseq
    %v1283 = vshrl.u32 %v1282, 7
    %v1284 = vsub.s32 %v1281, %v1283
    %v1285 = vrot.slane %v1257, %v1284
    %v1286 = vcombine.low %v1264, %v1271
    %v1287 = vcombine.low %v1278, %v1285
    %v1289 = vunpack.c.l.s4 1966171168
    %v1290 = vunpack.c.0.s8 %v1289
    %v1291 = vlaneseq
    %v1292 = vshrl.u32 %v1291, 7
    %v1293 = vsub.s32 %v1290, %v1292
    %v1294 = vrot.slane %v1286, %v1293
    %v1296 = vunpack.c.l.s4 1966171168
    %v1297 = vunpack.c.0.s8 %v1296
    %v1298 = vlaneseq
    %v1299 = vshrl.u32 %v1298, 7
    %v1300 = vsub.s32 %v1297, %v1299
    %v1301 = vrot.slane %v1287, %v1300
    %v1302 = vcombine.low %v1294, %v1301
    %v1303 = vcombine.low %v1148, %v1149
    %v1304 = vcombine.low %v1150, %v1151
    %v1305 = vcombine.low %v1152, %v1153
    %v1306 = vcombine.low %v1154, %v1155
    %v1308 = vunpack.c.l.s4 1966171168
    %v1309 = vunpack.c.0.s8 %v1308
    %v1310 = vlaneseq
    %v1311 = vshrl.u32 %v1310, 7
    %v1312 = vsub.s32 %v1309, %v1311
    %v1313 = vrot.slane %v1303, %v1312
    %v1315 = vunpack.c.l.s4 1966171168
    %v1316 = vunpack.c.0.s8 %v1315
    %v1317 = vlaneseq
    %v1318 = vshrl.u32 %v1317, 7
    %v1319 = vsub.s32 %v1316, %v1318
    %v1320 = vrot.slane %v1304, %v1319
    %v1322 = vunpack.c.l.s4 1966171168
    %v1323 = vunpack.c.0.s8 %v1322
    %v1324 = vlaneseq
    %v1325 = vshrl.u32 %v1324, 7
    %v1326 = vsub.s32 %v1323, %v1325
    %v1327 = vrot.slane %v1305, %v1326
    %v1329 = vunpack.c.l.s4 1966171168
    %v1330 = vunpack.c.0.s8 %v1329
    %v1331 = vlaneseq
    %v1332 = vshrl.u32 %v1331, 7
    %v1333 = vsub.s32 %v1330, %v1332
    %v1334 = vrot.slane %v1306, %v1333
    %v1335 = vcombine.low %v1313, %v1320
    %v1336 = vcombine.low %v1327, %v1334
    %v1338 = vunpack.c.l.s4 1966171168
    %v1339 = vunpack.c.0.s8 %v1338
    %v1340 = vlaneseq
    %v1341 = vshrl.u32 %v1340, 7
    %v1342 = vsub.s32 %v1339, %v1341
    %v1343 = vrot.slane %v1335, %v1342
    %v1345 = vunpack.c.l.s4 1966171168
    %v1346 = vunpack.c.0.s8 %v1345
    %v1347 = vlaneseq
    %v1348 = vshrl.u32 %v1347, 7
    %v1349 = vsub.s32 %v1346, %v1348
    %v1350 = vrot.slane %v1336, %v1349
    %v1351 = vcombine.low %v1343, %v1350
    %v1352 = vcombine.low %v1156, %v1157
    %v1353 = vcombine.low %v1158, %v1159
    %v1354 = vcombine.low %v1160, %v1161
    %v1355 = vcombine.low %v1162, %v1163
    %v1357 = vunpack.c.l.s4 1966171168
    %v1358 = vunpack.c.0.s8 %v1357
    %v1359 = vlaneseq
    %v1360 = vshrl.u32 %v1359, 7
    %v1361 = vsub.s32 %v1358, %v1360
    %v1362 = vrot.slane %v1352, %v1361
    %v1364 = vunpack.c.l.s4 1966171168
    %v1365 = vunpack.c.0.s8 %v1364
    %v1366 = vlaneseq
    %v1367 = vshrl.u32 %v1366, 7
    %v1368 = vsub.s32 %v1365, %v1367
    %v1369 = vrot.slane %v1353, %v1368
    %v1371 = vunpack.c.l.s4 1966171168
    %v1372 = vunpack.c.0.s8 %v1371
    %v1373 = vlaneseq
    %v1374 = vshrl.u32 %v1373, 7
    %v1375 = vsub.s32 %v1372, %v1374
    %v1376 = vrot.slane %v1354, %v1375
    %v1378 = vunpack.c.l.s4 1966171168
    %v1379 = vunpack.c.0.s8 %v1378
    %v1380 = vlaneseq
    %v1381 = vshrl.u32 %v1380, 7
    %v1382 = vsub.s32 %v1379, %v1381
    %v1383 = vrot.slane %v1355, %v1382
    %v1384 = vcombine.low %v1362, %v1369
    %v1385 = vcombine.low %v1376, %v1383
    %v1387 = vunpack.c.l.s4 1966171168
    %v1388 = vunpack.c.0.s8 %v1387
    %v1389 = vlaneseq
    %v1390 = vshrl.u32 %v1389, 7
    %v1391 = vsub.s32 %v1388, %v1390
    %v1392 = vrot.slane %v1384, %v1391
    %v1394 = vunpack.c.l.s4 1966171168
    %v1395 = vunpack.c.0.s8 %v1394
    %v1396 = vlaneseq
    %v1397 = vshrl.u32 %v1396, 7
    %v1398 = vsub.s32 %v1395, %v1397
    %v1399 = vrot.slane %v1385, %v1398
    %v1400 = vcombine.low %v1392, %v1399
    %v1401 = vsel %vm716, %v1253, 0
    %v1403 = vsel %vm716, %v1302, 0
    %v1405 = vsel %vm716, %v1351, 0
    %v1407 = vsel %vm716, %v1400, 0
    %1409 = vmatprep.subr.mxu0 0.0
    %1410 = vmatpush1.msra.mxu0 0.0
    %1411 = vmatprep.subr.mxu0 0.0
    %1412 = vmatpush1.msra.mxu0 0.0
    %1413 = vmatprep.subr.mxu0 0.0
    %1414 = vmatpush1.msra.mxu0 0.0
    %1415 = vmatprep.subr.mxu0 0.0
    %1416 = vmatpush1.msra.mxu0 0.0
    %1417 = vmatprep.subr.mxu0 0.0
    %1418 = vmatpush1.msra.mxu0 0.0
    %1419 = vmatprep.subr.mxu0 0.0
    %1420 = vmatpush1.msra.mxu0 0.0
    %1421 = vmatprep.subr.mxu0 0.0
    %1422 = vmatpush1.msra.mxu0 0.0
    %1423 = vmatprep.subr.mxu0 0.0
    %1424 = vmatpush1.msra.mxu0 0.0
    %1425 = vmatprep.subr.mxu0 0.0
    %1426 = vmatpush1.msra.mxu0 %v1172
    %1427 = vmatprep.subr.mxu0 0.0
    %1428 = vmatpush1.msra.mxu0 %v1171
    %1429 = vmatprep.subr.mxu0 0.0
    %1430 = vmatpush1.msra.mxu0 %v1170
    %1431 = vmatprep.subr.mxu0 0.0
    %1432 = vmatpush1.msra.mxu0 %v1169
    %1433 = vmatprep.subr.mxu0 0.0
    %1434 = vmatpush1.msra.mxu0 %v1168
    %1435 = vmatprep.subr.mxu0 0.0
    %1436 = vmatpush1.msra.mxu0 %v1167
    %1437 = vmatprep.subr.mxu0 0.0
    %1438 = vmatpush1.msra.mxu0 %v1166
    %1439 = vmatprep.subr.mxu0 0.0
    %1440 = vmatpush1.msra.mxu0 %v1165
    %1441 = vmatprep.subr.mxu0 0.0
    %1442 = vmatpush2.msra.mxu0 0.0
    %1443 = vmatprep.subr.mxu0 0.0
    %1444 = vmatpush2.msra.mxu0 0.0
    %1445 = vmatprep.subr.mxu0 0.0
    %1446 = vmatpush2.msra.mxu0 0.0
    %1447 = vmatprep.subr.mxu0 0.0
    %1448 = vmatpush2.msra.mxu0 0.0
    %1449 = vmatprep.subr.mxu0 0.0
    %1450 = vmatpush2.msra.mxu0 0.0
    %1451 = vmatprep.subr.mxu0 0.0
    %1452 = vmatpush2.msra.mxu0 0.0
    %1453 = vmatprep.subr.mxu0 0.0
    %1454 = vmatpush2.msra.mxu0 0.0
    %1455 = vmatprep.subr.mxu0 0.0
    %1456 = vmatpush2.msra.mxu0 0.0
    %1457 = vmatprep.subr.mxu0 0.0
    %1458 = vmatpush2.msra.mxu0 0.0
    %1459 = vmatprep.subr.mxu0 0.0
    %1460 = vmatpush2.msra.mxu0 0.0
    %1461 = vmatprep.subr.mxu0 0.0
    %1462 = vmatpush2.msra.mxu0 0.0
    %1463 = vmatprep.subr.mxu0 0.0
    %1464 = vmatpush2.msra.mxu0 0.0
    %1465 = vmatprep.subr.mxu0 0.0
    %1466 = vmatpush2.msra.mxu0 0.0
    %1467 = vmatprep.subr.mxu0 0.0
    %1468 = vmatpush2.msra.mxu0 0.0
    %1469 = vmatprep.subr.mxu0 0.0
    %1470 = vmatpush2.msra.mxu0 0.0
    %1471 = vmatprep.subr.mxu0 0.0
    %1472 = vmatpush2.msra.mxu0 0.0
    %1473 = vmatprep.mubr.f32.mxu0 0.0
    %1474 = vmatmul.mubr.f32.gmra.mxu0 %v1401
    %v1475 = vpop.f32.mrf.mxu0
    %v1476 = vadd.f32 0.0, %v1475
    %v1477 = vpop.f32.mrf.mxu0
    %1478 = vmatprep.mubr.f32.mxu0 0.0
    %1479 = vmatmul.mubr.f32.gmra.mxu0 %v1403
    %v1480 = vpop.f32.mrf.mxu0
    %v1481 = vadd.f32 0.0, %v1480
    %v1482 = vpop.f32.mrf.mxu0
    %1483 = vmatprep.mubr.f32.mxu0 0.0
    %1484 = vmatmul.mubr.f32.gmra.mxu0 %v1405
    %v1485 = vpop.f32.mrf.mxu0
    %v1486 = vadd.f32 0.0, %v1485
    %v1487 = vpop.f32.mrf.mxu0
    %1488 = vmatprep.mubr.f32.mxu0 0.0
    %1489 = vmatmul.mubr.f32.gmra.mxu0 %v1407
    %v1490 = vpop.f32.mrf.mxu0
    %v1491 = vadd.f32 0.0, %v1490
    %v1492 = vpop.f32.mrf.mxu0
    %1493 = vdwg.mxu0
    %v1494 = vadd.f32 %v1113, %v1476
    %v1495 = vadd.f32 %v1118, %v1481
    %v1496 = vadd.f32 %v1123, %v1486
    %v1497 = vadd.f32 %v1128, %v1491
    %v1498 = vld [vmem:[#allocation9] sm:$0xff]
    %v1499 = vld [vmem:[#allocation9 + $0x8] sm:$0xff]
    %v1500 = vld [vmem:[#allocation9 + $0x10] sm:$0xff]
    %v1501 = vld [vmem:[#allocation9 + $0x18] sm:$0xff]
    %v1502 = vld [vmem:[#allocation9 + $0x20] sm:$0xff]
    %v1503 = vld [vmem:[#allocation9 + $0x28] sm:$0xff]
    %v1504 = vld [vmem:[#allocation9 + $0x30] sm:$0xff]
    %v1505 = vld [vmem:[#allocation9 + $0x38] sm:$0xff]
    %v1507 = vsel %vm716, %v1494, 0
    %v1510 = vsel %vm716, %v1495, 0
    %v1513 = vsel %vm716, %v1496, 0
    %v1516 = vsel %vm716, %v1497, 0
    %1518 = vmatprep.subr.mxu0 0.0
    %1519 = vmatpush1.msra.mxu0 0.0
    %1520 = vmatprep.subr.mxu0 0.0
    %1521 = vmatpush1.msra.mxu0 0.0
    %1522 = vmatprep.subr.mxu0 0.0
    %1523 = vmatpush1.msra.mxu0 0.0
    %1524 = vmatprep.subr.mxu0 0.0
    %1525 = vmatpush1.msra.mxu0 0.0
    %1526 = vmatprep.subr.mxu0 0.0
    %1527 = vmatpush1.msra.mxu0 0.0
    %1528 = vmatprep.subr.mxu0 0.0
    %1529 = vmatpush1.msra.mxu0 0.0
    %1530 = vmatprep.subr.mxu0 0.0
    %1531 = vmatpush1.msra.mxu0 0.0
    %1532 = vmatprep.subr.mxu0 0.0
    %1533 = vmatpush1.msra.mxu0 0.0
    %1534 = vmatprep.subr.mxu0 0.0
    %1535 = vmatpush1.msra.mxu0 %v1505
    %1536 = vmatprep.subr.mxu0 0.0
    %1537 = vmatpush1.msra.mxu0 %v1504
    %1538 = vmatprep.subr.mxu0 0.0
    %1539 = vmatpush1.msra.mxu0 %v1503
    %1540 = vmatprep.subr.mxu0 0.0
    %1541 = vmatpush1.msra.mxu0 %v1502
    %1542 = vmatprep.subr.mxu0 0.0
    %1543 = vmatpush1.msra.mxu0 %v1501
    %1544 = vmatprep.subr.mxu0 0.0
    %1545 = vmatpush1.msra.mxu0 %v1500
    %1546 = vmatprep.subr.mxu0 0.0
    %1547 = vmatpush1.msra.mxu0 %v1499
    %1548 = vmatprep.subr.mxu0 0.0
    %1549 = vmatpush1.msra.mxu0 %v1498
    %1550 = vmatprep.subr.mxu0 0.0
    %1551 = vmatpush2.msra.mxu0 0.0
    %1552 = vmatprep.subr.mxu0 0.0
    %1553 = vmatpush2.msra.mxu0 0.0
    %1554 = vmatprep.subr.mxu0 0.0
    %1555 = vmatpush2.msra.mxu0 0.0
    %1556 = vmatprep.subr.mxu0 0.0
    %1557 = vmatpush2.msra.mxu0 0.0
    %1558 = vmatprep.subr.mxu0 0.0
    %1559 = vmatpush2.msra.mxu0 0.0
    %1560 = vmatprep.subr.mxu0 0.0
    %1561 = vmatpush2.msra.mxu0 0.0
    %1562 = vmatprep.subr.mxu0 0.0
    %1563 = vmatpush2.msra.mxu0 0.0
    %1564 = vmatprep.subr.mxu0 0.0
    %1565 = vmatpush2.msra.mxu0 0.0
    %1566 = vmatprep.subr.mxu0 0.0
    %1567 = vmatpush2.msra.mxu0 0.0
    %1568 = vmatprep.subr.mxu0 0.0
    %1569 = vmatpush2.msra.mxu0 0.0
    %1570 = vmatprep.subr.mxu0 0.0
    %1571 = vmatpush2.msra.mxu0 0.0
    %1572 = vmatprep.subr.mxu0 0.0
    %1573 = vmatpush2.msra.mxu0 0.0
    %1574 = vmatprep.subr.mxu0 0.0
    %1575 = vmatpush2.msra.mxu0 0.0
    %1576 = vmatprep.subr.mxu0 0.0
    %1577 = vmatpush2.msra.mxu0 0.0
    %1578 = vmatprep.subr.mxu0 0.0
    %1579 = vmatpush2.msra.mxu0 0.0
    %1580 = vmatprep.subr.mxu0 0.0
    %1581 = vmatpush2.msra.mxu0 0.0
    %1582 = vmatprep.mubr.f32.mxu0 0.0
    %1583 = vmatmul.mubr.f32.gmra.mxu0 %v1507
    %v1584 = vpop.f32.mrf.mxu0
    %v1585 = vadd.f32 0.0, %v1584
    %v1586 = vpop.f32.mrf.mxu0
    %1587 = vmatprep.mubr.f32.mxu0 0.0
    %1588 = vmatmul.mubr.f32.gmra.mxu0 %v1510
    %v1589 = vpop.f32.mrf.mxu0
    %v1590 = vadd.f32 0.0, %v1589
    %v1591 = vpop.f32.mrf.mxu0
    %1592 = vmatprep.mubr.f32.mxu0 0.0
    %1593 = vmatmul.mubr.f32.gmra.mxu0 %v1513
    %v1594 = vpop.f32.mrf.mxu0
    %v1595 = vadd.f32 0.0, %v1594
    %v1596 = vpop.f32.mrf.mxu0
    %1597 = vmatprep.mubr.f32.mxu0 0.0
    %1598 = vmatmul.mubr.f32.gmra.mxu0 %v1516
    %v1599 = vpop.f32.mrf.mxu0
    %v1600 = vadd.f32 0.0, %v1599
    %v1601 = vpop.f32.mrf.mxu0
    %1602 = vdwg.mxu0
    %v1603 = vsel %vm716, %v1585, 0.0
    %v1604 = vsel %vm716, %v1590, 0.0
    %v1605 = vadd.f32 %v1603, %v1604
    %v1606 = vsel %vm716, %v1595, 0.0
    %v1607 = vadd.f32 %v1605, %v1606
    %v1608 = vsel %vm716, %v1600, 0.0
    %v1609 = vadd.f32 %v1607, %v1608
    %v1610 = vrot.slane %v1609, 4
    %v1611 = vadd.f32 %v1609, %v1610
    %v1612 = vrot.slane %v1611, 2
    %v1613 = vadd.f32 %v1611, %v1612
    %v1614 = vrot.slane %v1613, 1
    %v1615 = vadd.f32 %v1613, %v1614
    %v1616 = vmul.f32 %v1615, 0.001953125
    %v1617 = vmul.f32 %v1494, %v1494
    %v1618 = vmul.f32 %v1495, %v1495
    %v1619 = vmul.f32 %v1496, %v1496
    %v1620 = vmul.f32 %v1497, %v1497
    %v1622 = vsel %vm716, %v1617, 0
    %v1625 = vsel %vm716, %v1618, 0
    %v1628 = vsel %vm716, %v1619, 0
    %v1631 = vsel %vm716, %v1620, 0
    %1633 = vmatprep.subr.mxu0 0.0
    %1634 = vmatpush1.msra.mxu0 0.0
    %1635 = vmatprep.subr.mxu0 0.0
    %1636 = vmatpush1.msra.mxu0 0.0
    %1637 = vmatprep.subr.mxu0 0.0
    %1638 = vmatpush1.msra.mxu0 0.0
    %1639 = vmatprep.subr.mxu0 0.0
    %1640 = vmatpush1.msra.mxu0 0.0
    %1641 = vmatprep.subr.mxu0 0.0
    %1642 = vmatpush1.msra.mxu0 0.0
    %1643 = vmatprep.subr.mxu0 0.0
    %1644 = vmatpush1.msra.mxu0 0.0
    %1645 = vmatprep.subr.mxu0 0.0
    %1646 = vmatpush1.msra.mxu0 0.0
    %1647 = vmatprep.subr.mxu0 0.0
    %1648 = vmatpush1.msra.mxu0 0.0
    %1649 = vmatprep.subr.mxu0 0.0
    %1650 = vmatpush1.msra.mxu0 %v1505
    %1651 = vmatprep.subr.mxu0 0.0
    %1652 = vmatpush1.msra.mxu0 %v1504
    %1653 = vmatprep.subr.mxu0 0.0
    %1654 = vmatpush1.msra.mxu0 %v1503
    %1655 = vmatprep.subr.mxu0 0.0
    %1656 = vmatpush1.msra.mxu0 %v1502
    %1657 = vmatprep.subr.mxu0 0.0
    %1658 = vmatpush1.msra.mxu0 %v1501
    %1659 = vmatprep.subr.mxu0 0.0
    %1660 = vmatpush1.msra.mxu0 %v1500
    %1661 = vmatprep.subr.mxu0 0.0
    %1662 = vmatpush1.msra.mxu0 %v1499
    %1663 = vmatprep.subr.mxu0 0.0
    %1664 = vmatpush1.msra.mxu0 %v1498
    %1665 = vmatprep.subr.mxu0 0.0
    %1666 = vmatpush2.msra.mxu0 0.0
    %1667 = vmatprep.subr.mxu0 0.0
    %1668 = vmatpush2.msra.mxu0 0.0
    %1669 = vmatprep.subr.mxu0 0.0
    %1670 = vmatpush2.msra.mxu0 0.0
    %1671 = vmatprep.subr.mxu0 0.0
    %1672 = vmatpush2.msra.mxu0 0.0
    %1673 = vmatprep.subr.mxu0 0.0
    %1674 = vmatpush2.msra.mxu0 0.0
    %1675 = vmatprep.subr.mxu0 0.0
    %1676 = vmatpush2.msra.mxu0 0.0
    %1677 = vmatprep.subr.mxu0 0.0
    %1678 = vmatpush2.msra.mxu0 0.0
    %1679 = vmatprep.subr.mxu0 0.0
    %1680 = vmatpush2.msra.mxu0 0.0
    %1681 = vmatprep.subr.mxu0 0.0
    %1682 = vmatpush2.msra.mxu0 0.0
    %1683 = vmatprep.subr.mxu0 0.0
    %1684 = vmatpush2.msra.mxu0 0.0
    %1685 = vmatprep.subr.mxu0 0.0
    %1686 = vmatpush2.msra.mxu0 0.0
    %1687 = vmatprep.subr.mxu0 0.0
    %1688 = vmatpush2.msra.mxu0 0.0
    %1689 = vmatprep.subr.mxu0 0.0
    %1690 = vmatpush2.msra.mxu0 0.0
    %1691 = vmatprep.subr.mxu0 0.0
    %1692 = vmatpush2.msra.mxu0 0.0
    %1693 = vmatprep.subr.mxu0 0.0
    %1694 = vmatpush2.msra.mxu0 0.0
    %1695 = vmatprep.subr.mxu0 0.0
    %1696 = vmatpush2.msra.mxu0 0.0
    %1697 = vmatprep.mubr.f32.mxu0 0.0
    %1698 = vmatmul.mubr.f32.gmra.mxu0 %v1622
    %v1699 = vpop.f32.mrf.mxu0
    %v1700 = vadd.f32 0.0, %v1699
    %v1701 = vpop.f32.mrf.mxu0
    %1702 = vmatprep.mubr.f32.mxu0 0.0
    %1703 = vmatmul.mubr.f32.gmra.mxu0 %v1625
    %v1704 = vpop.f32.mrf.mxu0
    %v1705 = vadd.f32 0.0, %v1704
    %v1706 = vpop.f32.mrf.mxu0
    %1707 = vmatprep.mubr.f32.mxu0 0.0
    %1708 = vmatmul.mubr.f32.gmra.mxu0 %v1628
    %v1709 = vpop.f32.mrf.mxu0
    %v1710 = vadd.f32 0.0, %v1709
    %v1711 = vpop.f32.mrf.mxu0
    %1712 = vmatprep.mubr.f32.mxu0 0.0
    %1713 = vmatmul.mubr.f32.gmra.mxu0 %v1631
    %v1714 = vpop.f32.mrf.mxu0
    %v1715 = vadd.f32 0.0, %v1714
    %v1716 = vpop.f32.mrf.mxu0
    %1717 = vdwg.mxu0
    %v1718 = vsel %vm716, %v1700, 0.0
    %v1719 = vsel %vm716, %v1705, 0.0
    %v1720 = vadd.f32 %v1718, %v1719
    %v1721 = vsel %vm716, %v1710, 0.0
    %v1722 = vadd.f32 %v1720, %v1721
    %v1723 = vsel %vm716, %v1715, 0.0
    %v1724 = vadd.f32 %v1722, %v1723
    %v1725 = vrot.slane %v1724, 4
    %v1726 = vadd.f32 %v1724, %v1725
    %v1727 = vrot.slane %v1726, 2
    %v1728 = vadd.f32 %v1726, %v1727
    %v1729 = vrot.slane %v1728, 1
    %v1730 = vadd.f32 %v1728, %v1729
    %v1731 = vmul.f32 %v1730, 0.001953125
    %v1732 = vmul.f32 %v1616, %v1616
    %v1733 = vsub.f32 %v1731, %v1732
    %v1734 = vld [vmem:[%s3] sm:$0x1]
    %v1735 = vadd.f32 %v1733, 1e-05
    %v1736 = vrsqrt.pop %v1735
    %v1737 = vmul.f32 %v1734, %v1736
    %v1738 = vld [vmem:[%s4] sm:$0x1]
    %v1739 = vmul.f32 %v1616, %v1737
    %v1740 = vsub.f32 %v1738, %v1739
    %v1742 = vlaneseq
    %v1743 = vshrl.u32 %v1742, 7
    %v1744 = vsub.s32 0, %v1743
    %v1745 = vrot.slane %v1737, %v1744
    %v1747 = vmul.f32 %v1494, %v1745
    %v1748 = vmul.f32 %v1495, %v1745
    %v1749 = vmul.f32 %v1496, %v1745
    %v1750 = vmul.f32 %v1497, %v1745
    %v1752 = vlaneseq
    %v1753 = vshrl.u32 %v1752, 7
    %v1754 = vsub.s32 0, %v1753
    %v1755 = vrot.slane %v1740, %v1754
    %v1757 = vadd.f32 %v1747, %v1755
    %v1758 = vadd.f32 %v1748, %v1755
    %v1759 = vadd.f32 %v1749, %v1755
    %v1760 = vadd.f32 %v1750, %v1755
    %vm1761 = vcmp.gt.f32.partialorder %v1757, 0.0
    %vm1762 = vcmp.gt.f32.partialorder %v1758, 0.0
    %vm1763 = vcmp.gt.f32.partialorder %v1759, 0.0
    %vm1764 = vcmp.gt.f32.partialorder %v1760, 0.0
    %v1765 = vmul.f32 %v1757, 0.2
    %v1766 = vmul.f32 %v1758, 0.2
    %v1767 = vmul.f32 %v1759, 0.2
    %v1768 = vmul.f32 %v1760, 0.2
    %v1769 = vsel %vm1761, %v1757, %v1765
    %v1770 = vsel %vm1762, %v1758, %v1766
    %v1771 = vsel %vm1763, %v1759, %v1767
    %v1772 = vsel %vm1764, %v1760, %v1768
    %v1777 = vcombine.high %v1769, %v1769
    %v1779 = vunpack.c.l.s4 1966171168
    %v1780 = vunpack.c.0.s8 %v1779
    %v1781 = vlaneseq
    %v1782 = vshrl.u32 %v1781, 7
    %v1783 = vsub.s32 %v1780, %v1782
    %v1784 = vrot.slane %v1769, %v1783
    %v1786 = vunpack.c.l.s4 1966171168
    %v1787 = vunpack.c.0.s8 %v1786
    %v1788 = vlaneseq
    %v1789 = vshrl.u32 %v1788, 7
    %v1790 = vsub.s32 %v1787, %v1789
    %v1791 = vrot.slane %v1777, %v1790
    %v1792 = vcombine.high %v1784, %v1784
    %v1793 = vcombine.high %v1791, %v1791
    %v1795 = vunpack.c.l.s4 1966171168
    %v1796 = vunpack.c.0.s8 %v1795
    %v1797 = vlaneseq
    %v1798 = vshrl.u32 %v1797, 7
    %v1799 = vsub.s32 %v1796, %v1798
    %v1800 = vrot.slane %v1784, %v1799
    %v1802 = vunpack.c.l.s4 1966171168
    %v1803 = vunpack.c.0.s8 %v1802
    %v1804 = vlaneseq
    %v1805 = vshrl.u32 %v1804, 7
    %v1806 = vsub.s32 %v1803, %v1805
    %v1807 = vrot.slane %v1791, %v1806
    %v1809 = vunpack.c.l.s4 1966171168
    %v1810 = vunpack.c.0.s8 %v1809
    %v1811 = vlaneseq
    %v1812 = vshrl.u32 %v1811, 7
    %v1813 = vsub.s32 %v1810, %v1812
    %v1814 = vrot.slane %v1792, %v1813
    %v1816 = vunpack.c.l.s4 1966171168
    %v1817 = vunpack.c.0.s8 %v1816
    %v1818 = vlaneseq
    %v1819 = vshrl.u32 %v1818, 7
    %v1820 = vsub.s32 %v1817, %v1819
    %v1821 = vrot.slane %v1793, %v1820
    %v1822 = vcombine.high %v1800, %v1800
    %v1823 = vcombine.high %v1807, %v1807
    %v1824 = vcombine.high %v1814, %v1814
    %v1825 = vcombine.high %v1821, %v1821
    %v1826 = vcombine.high %v1770, %v1770
    %v1828 = vunpack.c.l.s4 1966171168
    %v1829 = vunpack.c.0.s8 %v1828
    %v1830 = vlaneseq
    %v1831 = vshrl.u32 %v1830, 7
    %v1832 = vsub.s32 %v1829, %v1831
    %v1833 = vrot.slane %v1770, %v1832
    %v1835 = vunpack.c.l.s4 1966171168
    %v1836 = vunpack.c.0.s8 %v1835
    %v1837 = vlaneseq
    %v1838 = vshrl.u32 %v1837, 7
    %v1839 = vsub.s32 %v1836, %v1838
    %v1840 = vrot.slane %v1826, %v1839
    %v1841 = vcombine.high %v1833, %v1833
    %v1842 = vcombine.high %v1840, %v1840
    %v1844 = vunpack.c.l.s4 1966171168
    %v1845 = vunpack.c.0.s8 %v1844
    %v1846 = vlaneseq
    %v1847 = vshrl.u32 %v1846, 7
    %v1848 = vsub.s32 %v1845, %v1847
    %v1849 = vrot.slane %v1833, %v1848
    %v1851 = vunpack.c.l.s4 1966171168
    %v1852 = vunpack.c.0.s8 %v1851
    %v1853 = vlaneseq
    %v1854 = vshrl.u32 %v1853, 7
    %v1855 = vsub.s32 %v1852, %v1854
    %v1856 = vrot.slane %v1840, %v1855
    %v1858 = vunpack.c.l.s4 1966171168
    %v1859 = vunpack.c.0.s8 %v1858
    %v1860 = vlaneseq
    %v1861 = vshrl.u32 %v1860, 7
    %v1862 = vsub.s32 %v1859, %v1861
    %v1863 = vrot.slane %v1841, %v1862
    %v1865 = vunpack.c.l.s4 1966171168
    %v1866 = vunpack.c.0.s8 %v1865
    %v1867 = vlaneseq
    %v1868 = vshrl.u32 %v1867, 7
    %v1869 = vsub.s32 %v1866, %v1868
    %v1870 = vrot.slane %v1842, %v1869
    %v1871 = vcombine.high %v1849, %v1849
    %v1872 = vcombine.high %v1856, %v1856
    %v1873 = vcombine.high %v1863, %v1863
    %v1874 = vcombine.high %v1870, %v1870
    %v1875 = vcombine.high %v1771, %v1771
    %v1877 = vunpack.c.l.s4 1966171168
    %v1878 = vunpack.c.0.s8 %v1877
    %v1879 = vlaneseq
    %v1880 = vshrl.u32 %v1879, 7
    %v1881 = vsub.s32 %v1878, %v1880
    %v1882 = vrot.slane %v1771, %v1881
    %v1884 = vunpack.c.l.s4 1966171168
    %v1885 = vunpack.c.0.s8 %v1884
    %v1886 = vlaneseq
    %v1887 = vshrl.u32 %v1886, 7
    %v1888 = vsub.s32 %v1885, %v1887
    %v1889 = vrot.slane %v1875, %v1888
    %v1890 = vcombine.high %v1882, %v1882
    %v1891 = vcombine.high %v1889, %v1889
    %v1893 = vunpack.c.l.s4 1966171168
    %v1894 = vunpack.c.0.s8 %v1893
    %v1895 = vlaneseq
    %v1896 = vshrl.u32 %v1895, 7
    %v1897 = vsub.s32 %v1894, %v1896
    %v1898 = vrot.slane %v1882, %v1897
    %v1900 = vunpack.c.l.s4 1966171168
    %v1901 = vunpack.c.0.s8 %v1900
    %v1902 = vlaneseq
    %v1903 = vshrl.u32 %v1902, 7
    %v1904 = vsub.s32 %v1901, %v1903
    %v1905 = vrot.slane %v1889, %v1904
    %v1907 = vunpack.c.l.s4 1966171168
    %v1908 = vunpack.c.0.s8 %v1907
    %v1909 = vlaneseq
    %v1910 = vshrl.u32 %v1909, 7
    %v1911 = vsub.s32 %v1908, %v1910
    %v1912 = vrot.slane %v1890, %v1911
    %v1914 = vunpack.c.l.s4 1966171168
    %v1915 = vunpack.c.0.s8 %v1914
    %v1916 = vlaneseq
    %v1917 = vshrl.u32 %v1916, 7
    %v1918 = vsub.s32 %v1915, %v1917
    %v1919 = vrot.slane %v1891, %v1918
    %v1920 = vcombine.high %v1898, %v1898
    %v1921 = vcombine.high %v1905, %v1905
    %v1922 = vcombine.high %v1912, %v1912
    %v1923 = vcombine.high %v1919, %v1919
    %v1924 = vcombine.high %v1772, %v1772
    %v1926 = vunpack.c.l.s4 1966171168
    %v1927 = vunpack.c.0.s8 %v1926
    %v1928 = vlaneseq
    %v1929 = vshrl.u32 %v1928, 7
    %v1930 = vsub.s32 %v1927, %v1929
    %v1931 = vrot.slane %v1772, %v1930
    %v1933 = vunpack.c.l.s4 1966171168
    %v1934 = vunpack.c.0.s8 %v1933
    %v1935 = vlaneseq
    %v1936 = vshrl.u32 %v1935, 7
    %v1937 = vsub.s32 %v1934, %v1936
    %v1938 = vrot.slane %v1924, %v1937
    %v1939 = vcombine.high %v1931, %v1931
    %v1940 = vcombine.high %v1938, %v1938
    %v1942 = vunpack.c.l.s4 1966171168
    %v1943 = vunpack.c.0.s8 %v1942
    %v1944 = vlaneseq
    %v1945 = vshrl.u32 %v1944, 7
    %v1946 = vsub.s32 %v1943, %v1945
    %v1947 = vrot.slane %v1931, %v1946
    %v1949 = vunpack.c.l.s4 1966171168
    %v1950 = vunpack.c.0.s8 %v1949
    %v1951 = vlaneseq
    %v1952 = vshrl.u32 %v1951, 7
    %v1953 = vsub.s32 %v1950, %v1952
    %v1954 = vrot.slane %v1938, %v1953
    %v1956 = vunpack.c.l.s4 1966171168
    %v1957 = vunpack.c.0.s8 %v1956
    %v1958 = vlaneseq
    %v1959 = vshrl.u32 %v1958, 7
    %v1960 = vsub.s32 %v1957, %v1959
    %v1961 = vrot.slane %v1939, %v1960
    %v1963 = vunpack.c.l.s4 1966171168
    %v1964 = vunpack.c.0.s8 %v1963
    %v1965 = vlaneseq
    %v1966 = vshrl.u32 %v1965, 7
    %v1967 = vsub.s32 %v1964, %v1966
    %v1968 = vrot.slane %v1940, %v1967
    %v1969 = vcombine.high %v1947, %v1947
    %v1970 = vcombine.high %v1954, %v1954
    %v1971 = vcombine.high %v1961, %v1961
    %v1972 = vcombine.high %v1968, %v1968
    %2005 = vst.msk [vmem:[#allocation3] sm:$0x1] %vm101, 0.0
    %2006 = vst.msk [vmem:[#allocation3 + $0x1] sm:$0x1] %vm101, 0.0
    %2007 = vst.msk [vmem:[#allocation3 + $0x2] sm:$0x1] %vm101, 0.0
    %2008 = vst.msk [vmem:[#allocation3 + $0x3] sm:$0x1] %vm101, 0.0
    %2009 = vst.msk [vmem:[#allocation3 + $0x4] sm:$0x1] %vm101, 0.0
    %2010 = vst.msk [vmem:[#allocation3 + $0x5] sm:$0x1] %vm101, 0.0
    %2011 = vst.msk [vmem:[#allocation3 + $0x6] sm:$0x1] %vm101, 0.0
    %2012 = vst.msk [vmem:[#allocation3 + $0x7] sm:$0x1] %vm101, 0.0
    %2013 = vst.msk [vmem:[#allocation3 + $0x8] sm:$0x1] %vm101, 0.0
    %2014 = vst.msk [vmem:[#allocation3 + $0x9] sm:$0x1] %vm101, 0.0
    %2015 = vst.msk [vmem:[#allocation3 + $0xa] sm:$0x1] %vm101, 0.0
    %2016 = vst.msk [vmem:[#allocation3 + $0xb] sm:$0x1] %vm101, 0.0
    %2017 = vst.msk [vmem:[#allocation3 + $0xc] sm:$0x1] %vm101, 0.0
    %2018 = vst.msk [vmem:[#allocation3 + $0xd] sm:$0x1] %vm101, 0.0
    %2019 = vst.msk [vmem:[#allocation3 + $0xe] sm:$0x1] %vm101, 0.0
    %2020 = vst.msk [vmem:[#allocation3 + $0xf] sm:$0x1] %vm101, 0.0
    %2021 = vst.msk [vmem:[#allocation3 + $0x10] sm:$0x1] %vm101, 0.0
    %2022 = vst.msk [vmem:[#allocation3 + $0x11] sm:$0x1] %vm101, 0.0
    %2023 = vst.msk [vmem:[#allocation3 + $0x12] sm:$0x1] %vm101, 0.0
    %2024 = vst.msk [vmem:[#allocation3 + $0x13] sm:$0x1] %vm101, 0.0
    %2025 = vst.msk [vmem:[#allocation3 + $0x14] sm:$0x1] %vm101, 0.0
    %2026 = vst.msk [vmem:[#allocation3 + $0x15] sm:$0x1] %vm101, 0.0
    %2027 = vst.msk [vmem:[#allocation3 + $0x16] sm:$0x1] %vm101, 0.0
    %2028 = vst.msk [vmem:[#allocation3 + $0x17] sm:$0x1] %vm101, 0.0
    %2029 = vst.msk [vmem:[#allocation3 + $0x18] sm:$0x1] %vm101, 0.0
    %2030 = vst.msk [vmem:[#allocation3 + $0x19] sm:$0x1] %vm101, 0.0
    %2031 = vst.msk [vmem:[#allocation3 + $0x1a] sm:$0x1] %vm101, 0.0
    %2032 = vst.msk [vmem:[#allocation3 + $0x1b] sm:$0x1] %vm101, 0.0
    %2033 = vst.msk [vmem:[#allocation3 + $0x1c] sm:$0x1] %vm101, 0.0
    %2034 = vst.msk [vmem:[#allocation3 + $0x1d] sm:$0x1] %vm101, 0.0
    %2035 = vst.msk [vmem:[#allocation3 + $0x1e] sm:$0x1] %vm101, 0.0
    %2036 = vst.msk [vmem:[#allocation3 + $0x1f] sm:$0x1] %vm101, 0.0
    %2037 = vst.msk [vmem:[#allocation3 + $0x20] sm:$0x1] %vm101, 0.0
    %2038 = vst.msk [vmem:[#allocation3 + $0x21] sm:$0x1] %vm101, 0.0
    %2039 = vst.msk [vmem:[#allocation3 + $0x22] sm:$0x1] %vm101, 0.0
    %2040 = vst.msk [vmem:[#allocation3 + $0x23] sm:$0x1] %vm101, 0.0
    %s2041 = scalar_lea.vmem [#allocation3], 1
    %2042 = vst.msk [vmem:[%s2041] sm:$0x1] %vm101, %v1800
    %2043 = vst.msk [vmem:[%s2041 + $0x1] sm:$0x1] %vm101, %v1814
    %2044 = vst.msk [vmem:[%s2041 + $0x2] sm:$0x1] %vm101, %v1822
    %2045 = vst.msk [vmem:[%s2041 + $0x3] sm:$0x1] %vm101, %v1824
    %2046 = vst.msk [vmem:[%s2041 + $0x4] sm:$0x1] %vm101, %v1807
    %2047 = vst.msk [vmem:[%s2041 + $0x5] sm:$0x1] %vm101, %v1821
    %2048 = vst.msk [vmem:[%s2041 + $0x6] sm:$0x1] %vm101, %v1823
    %2049 = vst.msk [vmem:[%s2041 + $0x7] sm:$0x1] %vm101, %v1825
    %2050 = vst.msk [vmem:[%s2041 + $0x8] sm:$0x1] %vm101, %v1849
    %2051 = vst.msk [vmem:[%s2041 + $0x9] sm:$0x1] %vm101, %v1863
    %2052 = vst.msk [vmem:[%s2041 + $0xa] sm:$0x1] %vm101, %v1871
    %2053 = vst.msk [vmem:[%s2041 + $0xb] sm:$0x1] %vm101, %v1873
    %2054 = vst.msk [vmem:[%s2041 + $0xc] sm:$0x1] %vm101, %v1856
    %2055 = vst.msk [vmem:[%s2041 + $0xd] sm:$0x1] %vm101, %v1870
    %2056 = vst.msk [vmem:[%s2041 + $0xe] sm:$0x1] %vm101, %v1872
    %2057 = vst.msk [vmem:[%s2041 + $0xf] sm:$0x1] %vm101, %v1874
    %2058 = vst.msk [vmem:[%s2041 + $0x12] sm:$0x1] %vm101, %v1898
    %2059 = vst.msk [vmem:[%s2041 + $0x13] sm:$0x1] %vm101, %v1912
    %2060 = vst.msk [vmem:[%s2041 + $0x14] sm:$0x1] %vm101, %v1920
    %2061 = vst.msk [vmem:[%s2041 + $0x15] sm:$0x1] %vm101, %v1922
    %2062 = vst.msk [vmem:[%s2041 + $0x16] sm:$0x1] %vm101, %v1905
    %2063 = vst.msk [vmem:[%s2041 + $0x17] sm:$0x1] %vm101, %v1919
    %2064 = vst.msk [vmem:[%s2041 + $0x18] sm:$0x1] %vm101, %v1921
    %2065 = vst.msk [vmem:[%s2041 + $0x19] sm:$0x1] %vm101, %v1923
    %2066 = vst.msk [vmem:[%s2041 + $0x1a] sm:$0x1] %vm101, %v1947
    %2067 = vst.msk [vmem:[%s2041 + $0x1b] sm:$0x1] %vm101, %v1961
    %2068 = vst.msk [vmem:[%s2041 + $0x1c] sm:$0x1] %vm101, %v1969
    %2069 = vst.msk [vmem:[%s2041 + $0x1d] sm:$0x1] %vm101, %v1971
    %2070 = vst.msk [vmem:[%s2041 + $0x1e] sm:$0x1] %vm101, %v1954
    %2071 = vst.msk [vmem:[%s2041 + $0x1f] sm:$0x1] %vm101, %v1968
    %2072 = vst.msk [vmem:[%s2041 + $0x20] sm:$0x1] %vm101, %v1970
    %2073 = vst.msk [vmem:[%s2041 + $0x21] sm:$0x1] %vm101, %v1972
    %v2074 = vld [vmem:[#allocation3] sm:$0x1]
    %v2075 = vld [vmem:[#allocation3 + $0x1] sm:$0x1]
    %v2076 = vld [vmem:[#allocation3 + $0x2] sm:$0x1]
    %v2077 = vld [vmem:[#allocation3 + $0x3] sm:$0x1]
    %v2078 = vld [vmem:[#allocation3 + $0x4] sm:$0x1]
    %v2079 = vld [vmem:[#allocation3 + $0x5] sm:$0x1]
    %v2080 = vld [vmem:[#allocation3 + $0x6] sm:$0x1]
    %v2081 = vld [vmem:[#allocation3 + $0x7] sm:$0x1]
    %v2082 = vld [vmem:[#allocation3 + $0x8] sm:$0x1]
    %v2083 = vld [vmem:[#allocation3 + $0x9] sm:$0x1]
    %v2084 = vld [vmem:[#allocation3 + $0xa] sm:$0x1]
    %v2085 = vld [vmem:[#allocation3 + $0xb] sm:$0x1]
    %v2086 = vld [vmem:[#allocation3 + $0xc] sm:$0x1]
    %v2087 = vld [vmem:[#allocation3 + $0xd] sm:$0x1]
    %v2088 = vld [vmem:[#allocation3 + $0xe] sm:$0x1]
    %v2089 = vld [vmem:[#allocation3 + $0xf] sm:$0x1]
    %v2090 = vld [vmem:[#allocation3 + $0x12] sm:$0x1]
    %v2091 = vld [vmem:[#allocation3 + $0x13] sm:$0x1]
    %v2092 = vld [vmem:[#allocation3 + $0x14] sm:$0x1]
    %v2093 = vld [vmem:[#allocation3 + $0x15] sm:$0x1]
    %v2094 = vld [vmem:[#allocation3 + $0x16] sm:$0x1]
    %v2095 = vld [vmem:[#allocation3 + $0x17] sm:$0x1]
    %v2096 = vld [vmem:[#allocation3 + $0x18] sm:$0x1]
    %v2097 = vld [vmem:[#allocation3 + $0x19] sm:$0x1]
    %v2098 = vld [vmem:[#allocation3 + $0x1a] sm:$0x1]
    %v2099 = vld [vmem:[#allocation3 + $0x1b] sm:$0x1]
    %v2100 = vld [vmem:[#allocation3 + $0x1c] sm:$0x1]
    %v2101 = vld [vmem:[#allocation3 + $0x1d] sm:$0x1]
    %v2102 = vld [vmem:[#allocation3 + $0x1e] sm:$0x1]
    %v2103 = vld [vmem:[#allocation3 + $0x1f] sm:$0x1]
    %v2104 = vld [vmem:[#allocation3 + $0x20] sm:$0x1]
    %v2105 = vld [vmem:[#allocation3 + $0x21] sm:$0x1]
    %v2106 = vld [vmem:[#allocation10] sm:$0xff]
    %v2107 = vld [vmem:[#allocation10 + $0x8] sm:$0xff]
    %v2108 = vld [vmem:[#allocation10 + $0x10] sm:$0xff]
    %v2109 = vld [vmem:[#allocation10 + $0x18] sm:$0xff]
    %v2110 = vld [vmem:[#allocation10 + $0x20] sm:$0xff]
    %v2111 = vld [vmem:[#allocation10 + $0x28] sm:$0xff]
    %v2112 = vld [vmem:[#allocation10 + $0x30] sm:$0xff]
    %v2113 = vld [vmem:[#allocation10 + $0x38] sm:$0xff]
    %v2114 = vld [vmem:[%s2041] sm:$0x1]
    %v2115 = vld [vmem:[%s2041 + $0x1] sm:$0x1]
    %v2116 = vld [vmem:[%s2041 + $0x2] sm:$0x1]
    %v2117 = vld [vmem:[%s2041 + $0x3] sm:$0x1]
    %v2118 = vld [vmem:[%s2041 + $0x4] sm:$0x1]
    %v2119 = vld [vmem:[%s2041 + $0x5] sm:$0x1]
    %v2120 = vld [vmem:[%s2041 + $0x6] sm:$0x1]
    %v2121 = vld [vmem:[%s2041 + $0x7] sm:$0x1]
    %v2122 = vld [vmem:[%s2041 + $0x8] sm:$0x1]
    %v2123 = vld [vmem:[%s2041 + $0x9] sm:$0x1]
    %v2124 = vld [vmem:[%s2041 + $0xa] sm:$0x1]
    %v2125 = vld [vmem:[%s2041 + $0xb] sm:$0x1]
    %v2126 = vld [vmem:[%s2041 + $0xc] sm:$0x1]
    %v2127 = vld [vmem:[%s2041 + $0xd] sm:$0x1]
    %v2128 = vld [vmem:[%s2041 + $0xe] sm:$0x1]
    %v2129 = vld [vmem:[%s2041 + $0xf] sm:$0x1]
    %v2130 = vld [vmem:[%s2041 + $0x12] sm:$0x1]
    %v2131 = vld [vmem:[%s2041 + $0x13] sm:$0x1]
    %v2132 = vld [vmem:[%s2041 + $0x14] sm:$0x1]
    %v2133 = vld [vmem:[%s2041 + $0x15] sm:$0x1]
    %v2134 = vld [vmem:[%s2041 + $0x16] sm:$0x1]
    %v2135 = vld [vmem:[%s2041 + $0x17] sm:$0x1]
    %v2136 = vld [vmem:[%s2041 + $0x18] sm:$0x1]
    %v2137 = vld [vmem:[%s2041 + $0x19] sm:$0x1]
    %v2138 = vld [vmem:[%s2041 + $0x1a] sm:$0x1]
    %v2139 = vld [vmem:[%s2041 + $0x1b] sm:$0x1]
    %v2140 = vld [vmem:[%s2041 + $0x1c] sm:$0x1]
    %v2141 = vld [vmem:[%s2041 + $0x1d] sm:$0x1]
    %v2142 = vld [vmem:[%s2041 + $0x1e] sm:$0x1]
    %v2143 = vld [vmem:[%s2041 + $0x1f] sm:$0x1]
    %v2144 = vld [vmem:[%s2041 + $0x20] sm:$0x1]
    %v2145 = vld [vmem:[%s2041 + $0x21] sm:$0x1]
    %s2146 = scalar_lea.vmem [#allocation10], 64
    %v2147 = vld [vmem:[%s2146] sm:$0xff]
    %v2148 = vld [vmem:[%s2146 + $0x8] sm:$0xff]
    %v2149 = vld [vmem:[%s2146 + $0x10] sm:$0xff]
    %v2150 = vld [vmem:[%s2146 + $0x18] sm:$0xff]
    %v2151 = vld [vmem:[%s2146 + $0x20] sm:$0xff]
    %v2152 = vld [vmem:[%s2146 + $0x28] sm:$0xff]
    %v2153 = vld [vmem:[%s2146 + $0x30] sm:$0xff]
    %v2154 = vld [vmem:[%s2146 + $0x38] sm:$0xff]
    %v2187 = vcombine.low %v2114, %v2115
    %v2188 = vcombine.low %v2116, %v2117
    %v2189 = vcombine.low %v2118, %v2119
    %v2190 = vcombine.low %v2120, %v2121
    %v2192 = vunpack.c.l.s4 1966171168
    %v2193 = vunpack.c.0.s8 %v2192
    %v2194 = vlaneseq
    %v2195 = vshrl.u32 %v2194, 7
    %v2196 = vsub.s32 %v2193, %v2195
    %v2197 = vrot.slane %v2187, %v2196
    %v2199 = vunpack.c.l.s4 1966171168
    %v2200 = vunpack.c.0.s8 %v2199
    %v2201 = vlaneseq
    %v2202 = vshrl.u32 %v2201, 7
    %v2203 = vsub.s32 %v2200, %v2202
    %v2204 = vrot.slane %v2188, %v2203
    %v2206 = vunpack.c.l.s4 1966171168
    %v2207 = vunpack.c.0.s8 %v2206
    %v2208 = vlaneseq
    %v2209 = vshrl.u32 %v2208, 7
    %v2210 = vsub.s32 %v2207, %v2209
    %v2211 = vrot.slane %v2189, %v2210
    %v2213 = vunpack.c.l.s4 1966171168
    %v2214 = vunpack.c.0.s8 %v2213
    %v2215 = vlaneseq
    %v2216 = vshrl.u32 %v2215, 7
    %v2217 = vsub.s32 %v2214, %v2216
    %v2218 = vrot.slane %v2190, %v2217
    %v2219 = vcombine.low %v2197, %v2204
    %v2220 = vcombine.low %v2211, %v2218
    %v2222 = vunpack.c.l.s4 1966171168
    %v2223 = vunpack.c.0.s8 %v2222
    %v2224 = vlaneseq
    %v2225 = vshrl.u32 %v2224, 7
    %v2226 = vsub.s32 %v2223, %v2225
    %v2227 = vrot.slane %v2219, %v2226
    %v2229 = vunpack.c.l.s4 1966171168
    %v2230 = vunpack.c.0.s8 %v2229
    %v2231 = vlaneseq
    %v2232 = vshrl.u32 %v2231, 7
    %v2233 = vsub.s32 %v2230, %v2232
    %v2234 = vrot.slane %v2220, %v2233
    %v2235 = vcombine.low %v2227, %v2234
    %v2236 = vcombine.low %v2122, %v2123
    %v2237 = vcombine.low %v2124, %v2125
    %v2238 = vcombine.low %v2126, %v2127
    %v2239 = vcombine.low %v2128, %v2129
    %v2241 = vunpack.c.l.s4 1966171168
    %v2242 = vunpack.c.0.s8 %v2241
    %v2243 = vlaneseq
    %v2244 = vshrl.u32 %v2243, 7
    %v2245 = vsub.s32 %v2242, %v2244
    %v2246 = vrot.slane %v2236, %v2245
    %v2248 = vunpack.c.l.s4 1966171168
    %v2249 = vunpack.c.0.s8 %v2248
    %v2250 = vlaneseq
    %v2251 = vshrl.u32 %v2250, 7
    %v2252 = vsub.s32 %v2249, %v2251
    %v2253 = vrot.slane %v2237, %v2252
    %v2255 = vunpack.c.l.s4 1966171168
    %v2256 = vunpack.c.0.s8 %v2255
    %v2257 = vlaneseq
    %v2258 = vshrl.u32 %v2257, 7
    %v2259 = vsub.s32 %v2256, %v2258
    %v2260 = vrot.slane %v2238, %v2259
    %v2262 = vunpack.c.l.s4 1966171168
    %v2263 = vunpack.c.0.s8 %v2262
    %v2264 = vlaneseq
    %v2265 = vshrl.u32 %v2264, 7
    %v2266 = vsub.s32 %v2263, %v2265
    %v2267 = vrot.slane %v2239, %v2266
    %v2268 = vcombine.low %v2246, %v2253
    %v2269 = vcombine.low %v2260, %v2267
    %v2271 = vunpack.c.l.s4 1966171168
    %v2272 = vunpack.c.0.s8 %v2271
    %v2273 = vlaneseq
    %v2274 = vshrl.u32 %v2273, 7
    %v2275 = vsub.s32 %v2272, %v2274
    %v2276 = vrot.slane %v2268, %v2275
    %v2278 = vunpack.c.l.s4 1966171168
    %v2279 = vunpack.c.0.s8 %v2278
    %v2280 = vlaneseq
    %v2281 = vshrl.u32 %v2280, 7
    %v2282 = vsub.s32 %v2279, %v2281
    %v2283 = vrot.slane %v2269, %v2282
    %v2284 = vcombine.low %v2276, %v2283
    %v2285 = vcombine.low %v2130, %v2131
    %v2286 = vcombine.low %v2132, %v2133
    %v2287 = vcombine.low %v2134, %v2135
    %v2288 = vcombine.low %v2136, %v2137
    %v2290 = vunpack.c.l.s4 1966171168
    %v2291 = vunpack.c.0.s8 %v2290
    %v2292 = vlaneseq
    %v2293 = vshrl.u32 %v2292, 7
    %v2294 = vsub.s32 %v2291, %v2293
    %v2295 = vrot.slane %v2285, %v2294
    %v2297 = vunpack.c.l.s4 1966171168
    %v2298 = vunpack.c.0.s8 %v2297
    %v2299 = vlaneseq
    %v2300 = vshrl.u32 %v2299, 7
    %v2301 = vsub.s32 %v2298, %v2300
    %v2302 = vrot.slane %v2286, %v2301
    %v2304 = vunpack.c.l.s4 1966171168
    %v2305 = vunpack.c.0.s8 %v2304
    %v2306 = vlaneseq
    %v2307 = vshrl.u32 %v2306, 7
    %v2308 = vsub.s32 %v2305, %v2307
    %v2309 = vrot.slane %v2287, %v2308
    %v2311 = vunpack.c.l.s4 1966171168
    %v2312 = vunpack.c.0.s8 %v2311
    %v2313 = vlaneseq
    %v2314 = vshrl.u32 %v2313, 7
    %v2315 = vsub.s32 %v2312, %v2314
    %v2316 = vrot.slane %v2288, %v2315
    %v2317 = vcombine.low %v2295, %v2302
    %v2318 = vcombine.low %v2309, %v2316
    %v2320 = vunpack.c.l.s4 1966171168
    %v2321 = vunpack.c.0.s8 %v2320
    %v2322 = vlaneseq
    %v2323 = vshrl.u32 %v2322, 7
    %v2324 = vsub.s32 %v2321, %v2323
    %v2325 = vrot.slane %v2317, %v2324
    %v2327 = vunpack.c.l.s4 1966171168
    %v2328 = vunpack.c.0.s8 %v2327
    %v2329 = vlaneseq
    %v2330 = vshrl.u32 %v2329, 7
    %v2331 = vsub.s32 %v2328, %v2330
    %v2332 = vrot.slane %v2318, %v2331
    %v2333 = vcombine.low %v2325, %v2332
    %v2334 = vcombine.low %v2138, %v2139
    %v2335 = vcombine.low %v2140, %v2141
    %v2336 = vcombine.low %v2142, %v2143
    %v2337 = vcombine.low %v2144, %v2145
    %v2339 = vunpack.c.l.s4 1966171168
    %v2340 = vunpack.c.0.s8 %v2339
    %v2341 = vlaneseq
    %v2342 = vshrl.u32 %v2341, 7
    %v2343 = vsub.s32 %v2340, %v2342
    %v2344 = vrot.slane %v2334, %v2343
    %v2346 = vunpack.c.l.s4 1966171168
    %v2347 = vunpack.c.0.s8 %v2346
    %v2348 = vlaneseq
    %v2349 = vshrl.u32 %v2348, 7
    %v2350 = vsub.s32 %v2347, %v2349
    %v2351 = vrot.slane %v2335, %v2350
    %v2353 = vunpack.c.l.s4 1966171168
    %v2354 = vunpack.c.0.s8 %v2353
    %v2355 = vlaneseq
    %v2356 = vshrl.u32 %v2355, 7
    %v2357 = vsub.s32 %v2354, %v2356
    %v2358 = vrot.slane %v2336, %v2357
    %v2360 = vunpack.c.l.s4 1966171168
    %v2361 = vunpack.c.0.s8 %v2360
    %v2362 = vlaneseq
    %v2363 = vshrl.u32 %v2362, 7
    %v2364 = vsub.s32 %v2361, %v2363
    %v2365 = vrot.slane %v2337, %v2364
    %v2366 = vcombine.low %v2344, %v2351
    %v2367 = vcombine.low %v2358, %v2365
    %v2369 = vunpack.c.l.s4 1966171168
    %v2370 = vunpack.c.0.s8 %v2369
    %v2371 = vlaneseq
    %v2372 = vshrl.u32 %v2371, 7
    %v2373 = vsub.s32 %v2370, %v2372
    %v2374 = vrot.slane %v2366, %v2373
    %v2376 = vunpack.c.l.s4 1966171168
    %v2377 = vunpack.c.0.s8 %v2376
    %v2378 = vlaneseq
    %v2379 = vshrl.u32 %v2378, 7
    %v2380 = vsub.s32 %v2377, %v2379
    %v2381 = vrot.slane %v2367, %v2380
    %v2382 = vcombine.low %v2374, %v2381
    %v2383 = vsel %vm716, %v2235, 0
    %v2385 = vsel %vm716, %v2284, 0
    %v2387 = vsel %vm716, %v2333, 0
    %v2389 = vsel %vm716, %v2382, 0
    %2391 = vmatprep.subr.mxu0 0.0
    %2392 = vmatpush1.msra.mxu0 0.0
    %2393 = vmatprep.subr.mxu0 0.0
    %2394 = vmatpush1.msra.mxu0 0.0
    %2395 = vmatprep.subr.mxu0 0.0
    %2396 = vmatpush1.msra.mxu0 0.0
    %2397 = vmatprep.subr.mxu0 0.0
    %2398 = vmatpush1.msra.mxu0 0.0
    %2399 = vmatprep.subr.mxu0 0.0
    %2400 = vmatpush1.msra.mxu0 0.0
    %2401 = vmatprep.subr.mxu0 0.0
    %2402 = vmatpush1.msra.mxu0 0.0
    %2403 = vmatprep.subr.mxu0 0.0
    %2404 = vmatpush1.msra.mxu0 0.0
    %2405 = vmatprep.subr.mxu0 0.0
    %2406 = vmatpush1.msra.mxu0 0.0
    %2407 = vmatprep.subr.mxu0 0.0
    %2408 = vmatpush1.msra.mxu0 %v2154
    %2409 = vmatprep.subr.mxu0 0.0
    %2410 = vmatpush1.msra.mxu0 %v2153
    %2411 = vmatprep.subr.mxu0 0.0
    %2412 = vmatpush1.msra.mxu0 %v2152
    %2413 = vmatprep.subr.mxu0 0.0
    %2414 = vmatpush1.msra.mxu0 %v2151
    %2415 = vmatprep.subr.mxu0 0.0
    %2416 = vmatpush1.msra.mxu0 %v2150
    %2417 = vmatprep.subr.mxu0 0.0
    %2418 = vmatpush1.msra.mxu0 %v2149
    %2419 = vmatprep.subr.mxu0 0.0
    %2420 = vmatpush1.msra.mxu0 %v2148
    %2421 = vmatprep.subr.mxu0 0.0
    %2422 = vmatpush1.msra.mxu0 %v2147
    %2423 = vmatprep.subr.mxu0 0.0
    %2424 = vmatpush2.msra.mxu0 0.0
    %2425 = vmatprep.subr.mxu0 0.0
    %2426 = vmatpush2.msra.mxu0 0.0
    %2427 = vmatprep.subr.mxu0 0.0
    %2428 = vmatpush2.msra.mxu0 0.0
    %2429 = vmatprep.subr.mxu0 0.0
    %2430 = vmatpush2.msra.mxu0 0.0
    %2431 = vmatprep.subr.mxu0 0.0
    %2432 = vmatpush2.msra.mxu0 0.0
    %2433 = vmatprep.subr.mxu0 0.0
    %2434 = vmatpush2.msra.mxu0 0.0
    %2435 = vmatprep.subr.mxu0 0.0
    %2436 = vmatpush2.msra.mxu0 0.0
    %2437 = vmatprep.subr.mxu0 0.0
    %2438 = vmatpush2.msra.mxu0 0.0
    %2439 = vmatprep.subr.mxu0 0.0
    %2440 = vmatpush2.msra.mxu0 0.0
    %2441 = vmatprep.subr.mxu0 0.0
    %2442 = vmatpush2.msra.mxu0 0.0
    %2443 = vmatprep.subr.mxu0 0.0
    %2444 = vmatpush2.msra.mxu0 0.0
    %2445 = vmatprep.subr.mxu0 0.0
    %2446 = vmatpush2.msra.mxu0 0.0
    %2447 = vmatprep.subr.mxu0 0.0
    %2448 = vmatpush2.msra.mxu0 0.0
    %2449 = vmatprep.subr.mxu0 0.0
    %2450 = vmatpush2.msra.mxu0 0.0
    %2451 = vmatprep.subr.mxu0 0.0
    %2452 = vmatpush2.msra.mxu0 0.0
    %2453 = vmatprep.subr.mxu0 0.0
    %2454 = vmatpush2.msra.mxu0 0.0
    %2455 = vmatprep.mubr.f32.mxu0 0.0
    %2456 = vmatmul.mubr.f32.gmra.mxu0 %v2383
    %v2457 = vpop.f32.mrf.mxu0
    %v2458 = vadd.f32 0.0, %v2457
    %v2459 = vpop.f32.mrf.mxu0
    %2460 = vmatprep.mubr.f32.mxu0 0.0
    %2461 = vmatmul.mubr.f32.gmra.mxu0 %v2385
    %v2462 = vpop.f32.mrf.mxu0
    %v2463 = vadd.f32 0.0, %v2462
    %v2464 = vpop.f32.mrf.mxu0
    %2465 = vmatprep.mubr.f32.mxu0 0.0
    %2466 = vmatmul.mubr.f32.gmra.mxu0 %v2387
    %v2467 = vpop.f32.mrf.mxu0
    %v2468 = vadd.f32 0.0, %v2467
    %v2469 = vpop.f32.mrf.mxu0
    %2470 = vmatprep.mubr.f32.mxu0 0.0
    %2471 = vmatmul.mubr.f32.gmra.mxu0 %v2389
    %v2472 = vpop.f32.mrf.mxu0
    %v2473 = vadd.f32 0.0, %v2472
    %v2474 = vpop.f32.mrf.mxu0
    %2475 = vdwg.mxu0
    %v2508 = vcombine.low %v2074, %v2075
    %v2509 = vcombine.low %v2076, %v2077
    %v2510 = vcombine.low %v2078, %v2079
    %v2511 = vcombine.low %v2080, %v2081
    %v2513 = vunpack.c.l.s4 1966171168
    %v2514 = vunpack.c.0.s8 %v2513
    %v2515 = vlaneseq
    %v2516 = vshrl.u32 %v2515, 7
    %v2517 = vsub.s32 %v2514, %v2516
    %v2518 = vrot.slane %v2508, %v2517
    %v2520 = vunpack.c.l.s4 1966171168
    %v2521 = vunpack.c.0.s8 %v2520
    %v2522 = vlaneseq
    %v2523 = vshrl.u32 %v2522, 7
    %v2524 = vsub.s32 %v2521, %v2523
    %v2525 = vrot.slane %v2509, %v2524
    %v2527 = vunpack.c.l.s4 1966171168
    %v2528 = vunpack.c.0.s8 %v2527
    %v2529 = vlaneseq
    %v2530 = vshrl.u32 %v2529, 7
    %v2531 = vsub.s32 %v2528, %v2530
    %v2532 = vrot.slane %v2510, %v2531
    %v2534 = vunpack.c.l.s4 1966171168
    %v2535 = vunpack.c.0.s8 %v2534
    %v2536 = vlaneseq
    %v2537 = vshrl.u32 %v2536, 7
    %v2538 = vsub.s32 %v2535, %v2537
    %v2539 = vrot.slane %v2511, %v2538
    %v2540 = vcombine.low %v2518, %v2525
    %v2541 = vcombine.low %v2532, %v2539
    %v2543 = vunpack.c.l.s4 1966171168
    %v2544 = vunpack.c.0.s8 %v2543
    %v2545 = vlaneseq
    %v2546 = vshrl.u32 %v2545, 7
    %v2547 = vsub.s32 %v2544, %v2546
    %v2548 = vrot.slane %v2540, %v2547
    %v2550 = vunpack.c.l.s4 1966171168
    %v2551 = vunpack.c.0.s8 %v2550
    %v2552 = vlaneseq
    %v2553 = vshrl.u32 %v2552, 7
    %v2554 = vsub.s32 %v2551, %v2553
    %v2555 = vrot.slane %v2541, %v2554
    %v2556 = vcombine.low %v2548, %v2555
    %v2557 = vcombine.low %v2082, %v2083
    %v2558 = vcombine.low %v2084, %v2085
    %v2559 = vcombine.low %v2086, %v2087
    %v2560 = vcombine.low %v2088, %v2089
    %v2562 = vunpack.c.l.s4 1966171168
    %v2563 = vunpack.c.0.s8 %v2562
    %v2564 = vlaneseq
    %v2565 = vshrl.u32 %v2564, 7
    %v2566 = vsub.s32 %v2563, %v2565
    %v2567 = vrot.slane %v2557, %v2566
    %v2569 = vunpack.c.l.s4 1966171168
    %v2570 = vunpack.c.0.s8 %v2569
    %v2571 = vlaneseq
    %v2572 = vshrl.u32 %v2571, 7
    %v2573 = vsub.s32 %v2570, %v2572
    %v2574 = vrot.slane %v2558, %v2573
    %v2576 = vunpack.c.l.s4 1966171168
    %v2577 = vunpack.c.0.s8 %v2576
    %v2578 = vlaneseq
    %v2579 = vshrl.u32 %v2578, 7
    %v2580 = vsub.s32 %v2577, %v2579
    %v2581 = vrot.slane %v2559, %v2580
    %v2583 = vunpack.c.l.s4 1966171168
    %v2584 = vunpack.c.0.s8 %v2583
    %v2585 = vlaneseq
    %v2586 = vshrl.u32 %v2585, 7
    %v2587 = vsub.s32 %v2584, %v2586
    %v2588 = vrot.slane %v2560, %v2587
    %v2589 = vcombine.low %v2567, %v2574
    %v2590 = vcombine.low %v2581, %v2588
    %v2592 = vunpack.c.l.s4 1966171168
    %v2593 = vunpack.c.0.s8 %v2592
    %v2594 = vlaneseq
    %v2595 = vshrl.u32 %v2594, 7
    %v2596 = vsub.s32 %v2593, %v2595
    %v2597 = vrot.slane %v2589, %v2596
    %v2599 = vunpack.c.l.s4 1966171168
    %v2600 = vunpack.c.0.s8 %v2599
    %v2601 = vlaneseq
    %v2602 = vshrl.u32 %v2601, 7
    %v2603 = vsub.s32 %v2600, %v2602
    %v2604 = vrot.slane %v2590, %v2603
    %v2605 = vcombine.low %v2597, %v2604
    %v2606 = vcombine.low %v2090, %v2091
    %v2607 = vcombine.low %v2092, %v2093
    %v2608 = vcombine.low %v2094, %v2095
    %v2609 = vcombine.low %v2096, %v2097
    %v2611 = vunpack.c.l.s4 1966171168
    %v2612 = vunpack.c.0.s8 %v2611
    %v2613 = vlaneseq
    %v2614 = vshrl.u32 %v2613, 7
    %v2615 = vsub.s32 %v2612, %v2614
    %v2616 = vrot.slane %v2606, %v2615
    %v2618 = vunpack.c.l.s4 1966171168
    %v2619 = vunpack.c.0.s8 %v2618
    %v2620 = vlaneseq
    %v2621 = vshrl.u32 %v2620, 7
    %v2622 = vsub.s32 %v2619, %v2621
    %v2623 = vrot.slane %v2607, %v2622
    %v2625 = vunpack.c.l.s4 1966171168
    %v2626 = vunpack.c.0.s8 %v2625
    %v2627 = vlaneseq
    %v2628 = vshrl.u32 %v2627, 7
    %v2629 = vsub.s32 %v2626, %v2628
    %v2630 = vrot.slane %v2608, %v2629
    %v2632 = vunpack.c.l.s4 1966171168
    %v2633 = vunpack.c.0.s8 %v2632
    %v2634 = vlaneseq
    %v2635 = vshrl.u32 %v2634, 7
    %v2636 = vsub.s32 %v2633, %v2635
    %v2637 = vrot.slane %v2609, %v2636
    %v2638 = vcombine.low %v2616, %v2623
    %v2639 = vcombine.low %v2630, %v2637
    %v2641 = vunpack.c.l.s4 1966171168
    %v2642 = vunpack.c.0.s8 %v2641
    %v2643 = vlaneseq
    %v2644 = vshrl.u32 %v2643, 7
    %v2645 = vsub.s32 %v2642, %v2644
    %v2646 = vrot.slane %v2638, %v2645
    %v2648 = vunpack.c.l.s4 1966171168
    %v2649 = vunpack.c.0.s8 %v2648
    %v2650 = vlaneseq
    %v2651 = vshrl.u32 %v2650, 7
    %v2652 = vsub.s32 %v2649, %v2651
    %v2653 = vrot.slane %v2639, %v2652
    %v2654 = vcombine.low %v2646, %v2653
    %v2655 = vcombine.low %v2098, %v2099
    %v2656 = vcombine.low %v2100, %v2101
    %v2657 = vcombine.low %v2102, %v2103
    %v2658 = vcombine.low %v2104, %v2105
    %v2660 = vunpack.c.l.s4 1966171168
    %v2661 = vunpack.c.0.s8 %v2660
    %v2662 = vlaneseq
    %v2663 = vshrl.u32 %v2662, 7
    %v2664 = vsub.s32 %v2661, %v2663
    %v2665 = vrot.slane %v2655, %v2664
    %v2667 = vunpack.c.l.s4 1966171168
    %v2668 = vunpack.c.0.s8 %v2667
    %v2669 = vlaneseq
    %v2670 = vshrl.u32 %v2669, 7
    %v2671 = vsub.s32 %v2668, %v2670
    %v2672 = vrot.slane %v2656, %v2671
    %v2674 = vunpack.c.l.s4 1966171168
    %v2675 = vunpack.c.0.s8 %v2674
    %v2676 = vlaneseq
    %v2677 = vshrl.u32 %v2676, 7
    %v2678 = vsub.s32 %v2675, %v2677
    %v2679 = vrot.slane %v2657, %v2678
    %v2681 = vunpack.c.l.s4 1966171168
    %v2682 = vunpack.c.0.s8 %v2681
    %v2683 = vlaneseq
    %v2684 = vshrl.u32 %v2683, 7
    %v2685 = vsub.s32 %v2682, %v2684
    %v2686 = vrot.slane %v2658, %v2685
    %v2687 = vcombine.low %v2665, %v2672
    %v2688 = vcombine.low %v2679, %v2686
    %v2690 = vunpack.c.l.s4 1966171168
    %v2691 = vunpack.c.0.s8 %v2690
    %v2692 = vlaneseq
    %v2693 = vshrl.u32 %v2692, 7
    %v2694 = vsub.s32 %v2691, %v2693
    %v2695 = vrot.slane %v2687, %v2694
    %v2697 = vunpack.c.l.s4 1966171168
    %v2698 = vunpack.c.0.s8 %v2697
    %v2699 = vlaneseq
    %v2700 = vshrl.u32 %v2699, 7
    %v2701 = vsub.s32 %v2698, %v2700
    %v2702 = vrot.slane %v2688, %v2701
    %v2703 = vcombine.low %v2695, %v2702
    %v2704 = vsel %vm716, %v2556, 0
    %v2706 = vsel %vm716, %v2605, 0
    %v2708 = vsel %vm716, %v2654, 0
    %v2710 = vsel %vm716, %v2703, 0
    %2712 = vmatprep.subr.mxu0 0.0
    %2713 = vmatpush1.msra.mxu0 0.0
    %2714 = vmatprep.subr.mxu0 0.0
    %2715 = vmatpush1.msra.mxu0 0.0
    %2716 = vmatprep.subr.mxu0 0.0
    %2717 = vmatpush1.msra.mxu0 0.0
    %2718 = vmatprep.subr.mxu0 0.0
    %2719 = vmatpush1.msra.mxu0 0.0
    %2720 = vmatprep.subr.mxu0 0.0
    %2721 = vmatpush1.msra.mxu0 0.0
    %2722 = vmatprep.subr.mxu0 0.0
    %2723 = vmatpush1.msra.mxu0 0.0
    %2724 = vmatprep.subr.mxu0 0.0
    %2725 = vmatpush1.msra.mxu0 0.0
    %2726 = vmatprep.subr.mxu0 0.0
    %2727 = vmatpush1.msra.mxu0 0.0
    %2728 = vmatprep.subr.mxu0 0.0
    %2729 = vmatpush1.msra.mxu0 %v2113
    %2730 = vmatprep.subr.mxu0 0.0
    %2731 = vmatpush1.msra.mxu0 %v2112
    %2732 = vmatprep.subr.mxu0 0.0
    %2733 = vmatpush1.msra.mxu0 %v2111
    %2734 = vmatprep.subr.mxu0 0.0
    %2735 = vmatpush1.msra.mxu0 %v2110
    %2736 = vmatprep.subr.mxu0 0.0
    %2737 = vmatpush1.msra.mxu0 %v2109
    %2738 = vmatprep.subr.mxu0 0.0
    %2739 = vmatpush1.msra.mxu0 %v2108
    %2740 = vmatprep.subr.mxu0 0.0
    %2741 = vmatpush1.msra.mxu0 %v2107
    %2742 = vmatprep.subr.mxu0 0.0
    %2743 = vmatpush1.msra.mxu0 %v2106
    %2744 = vmatprep.subr.mxu0 0.0
    %2745 = vmatpush2.msra.mxu0 0.0
    %2746 = vmatprep.subr.mxu0 0.0
    %2747 = vmatpush2.msra.mxu0 0.0
    %2748 = vmatprep.subr.mxu0 0.0
    %2749 = vmatpush2.msra.mxu0 0.0
    %2750 = vmatprep.subr.mxu0 0.0
    %2751 = vmatpush2.msra.mxu0 0.0
    %2752 = vmatprep.subr.mxu0 0.0
    %2753 = vmatpush2.msra.mxu0 0.0
    %2754 = vmatprep.subr.mxu0 0.0
    %2755 = vmatpush2.msra.mxu0 0.0
    %2756 = vmatprep.subr.mxu0 0.0
    %2757 = vmatpush2.msra.mxu0 0.0
    %2758 = vmatprep.subr.mxu0 0.0
    %2759 = vmatpush2.msra.mxu0 0.0
    %2760 = vmatprep.subr.mxu0 0.0
    %2761 = vmatpush2.msra.mxu0 0.0
    %2762 = vmatprep.subr.mxu0 0.0
    %2763 = vmatpush2.msra.mxu0 0.0
    %2764 = vmatprep.subr.mxu0 0.0
    %2765 = vmatpush2.msra.mxu0 0.0
    %2766 = vmatprep.subr.mxu0 0.0
    %2767 = vmatpush2.msra.mxu0 0.0
    %2768 = vmatprep.subr.mxu0 0.0
    %2769 = vmatpush2.msra.mxu0 0.0
    %2770 = vmatprep.subr.mxu0 0.0
    %2771 = vmatpush2.msra.mxu0 0.0
    %2772 = vmatprep.subr.mxu0 0.0
    %2773 = vmatpush2.msra.mxu0 0.0
    %2774 = vmatprep.subr.mxu0 0.0
    %2775 = vmatpush2.msra.mxu0 0.0
    %2776 = vmatprep.mubr.f32.mxu0 0.0
    %2777 = vmatmul.mubr.f32.gmra.mxu0 %v2704
    %v2778 = vpop.f32.mrf.mxu0
    %v2779 = vadd.f32 %v2458, %v2778
    %v2780 = vpop.f32.mrf.mxu0
    %2781 = vmatprep.mubr.f32.mxu0 0.0
    %2782 = vmatmul.mubr.f32.gmra.mxu0 %v2706
    %v2783 = vpop.f32.mrf.mxu0
    %v2784 = vadd.f32 %v2463, %v2783
    %v2785 = vpop.f32.mrf.mxu0
    %2786 = vmatprep.mubr.f32.mxu0 0.0
    %2787 = vmatmul.mubr.f32.gmra.mxu0 %v2708
    %v2788 = vpop.f32.mrf.mxu0
    %v2789 = vadd.f32 %v2468, %v2788
    %v2790 = vpop.f32.mrf.mxu0
    %2791 = vmatprep.mubr.f32.mxu0 0.0
    %2792 = vmatmul.mubr.f32.gmra.mxu0 %v2710
    %v2793 = vpop.f32.mrf.mxu0
    %v2794 = vadd.f32 %v2473, %v2793
    %v2795 = vpop.f32.mrf.mxu0
    %2796 = vdwg.mxu0
    %s2797 = scalar_lea.vmem [#allocation3], 2
    %v2798 = vld [vmem:[%s2797] sm:$0x1]
    %v2799 = vld [vmem:[%s2797 + $0x1] sm:$0x1]
    %v2800 = vld [vmem:[%s2797 + $0x2] sm:$0x1]
    %v2801 = vld [vmem:[%s2797 + $0x3] sm:$0x1]
    %v2802 = vld [vmem:[%s2797 + $0x4] sm:$0x1]
    %v2803 = vld [vmem:[%s2797 + $0x5] sm:$0x1]
    %v2804 = vld [vmem:[%s2797 + $0x6] sm:$0x1]
    %v2805 = vld [vmem:[%s2797 + $0x7] sm:$0x1]
    %v2806 = vld [vmem:[%s2797 + $0x8] sm:$0x1]
    %v2807 = vld [vmem:[%s2797 + $0x9] sm:$0x1]
    %v2808 = vld [vmem:[%s2797 + $0xa] sm:$0x1]
    %v2809 = vld [vmem:[%s2797 + $0xb] sm:$0x1]
    %v2810 = vld [vmem:[%s2797 + $0xc] sm:$0x1]
    %v2811 = vld [vmem:[%s2797 + $0xd] sm:$0x1]
    %v2812 = vld [vmem:[%s2797 + $0xe] sm:$0x1]
    %v2813 = vld [vmem:[%s2797 + $0xf] sm:$0x1]
    %v2814 = vld [vmem:[%s2797 + $0x12] sm:$0x1]
    %v2815 = vld [vmem:[%s2797 + $0x13] sm:$0x1]
    %v2816 = vld [vmem:[%s2797 + $0x14] sm:$0x1]
    %v2817 = vld [vmem:[%s2797 + $0x15] sm:$0x1]
    %v2818 = vld [vmem:[%s2797 + $0x16] sm:$0x1]
    %v2819 = vld [vmem:[%s2797 + $0x17] sm:$0x1]
    %v2820 = vld [vmem:[%s2797 + $0x18] sm:$0x1]
    %v2821 = vld [vmem:[%s2797 + $0x19] sm:$0x1]
    %v2822 = vld [vmem:[%s2797 + $0x1a] sm:$0x1]
    %v2823 = vld [vmem:[%s2797 + $0x1b] sm:$0x1]
    %v2824 = vld [vmem:[%s2797 + $0x1c] sm:$0x1]
    %v2825 = vld [vmem:[%s2797 + $0x1d] sm:$0x1]
    %v2826 = vld [vmem:[%s2797 + $0x1e] sm:$0x1]
    %v2827 = vld [vmem:[%s2797 + $0x1f] sm:$0x1]
    %v2828 = vld [vmem:[%s2797 + $0x20] sm:$0x1]
    %v2829 = vld [vmem:[%s2797 + $0x21] sm:$0x1]
    %s2830 = scalar_lea.vmem [#allocation10], 128
    %v2831 = vld [vmem:[%s2830] sm:$0xff]
    %v2832 = vld [vmem:[%s2830 + $0x8] sm:$0xff]
    %v2833 = vld [vmem:[%s2830 + $0x10] sm:$0xff]
    %v2834 = vld [vmem:[%s2830 + $0x18] sm:$0xff]
    %v2835 = vld [vmem:[%s2830 + $0x20] sm:$0xff]
    %v2836 = vld [vmem:[%s2830 + $0x28] sm:$0xff]
    %v2837 = vld [vmem:[%s2830 + $0x30] sm:$0xff]
    %v2838 = vld [vmem:[%s2830 + $0x38] sm:$0xff]
    %v2871 = vcombine.low %v2798, %v2799
    %v2872 = vcombine.low %v2800, %v2801
    %v2873 = vcombine.low %v2802, %v2803
    %v2874 = vcombine.low %v2804, %v2805
    %v2876 = vunpack.c.l.s4 1966171168
    %v2877 = vunpack.c.0.s8 %v2876
    %v2878 = vlaneseq
    %v2879 = vshrl.u32 %v2878, 7
    %v2880 = vsub.s32 %v2877, %v2879
    %v2881 = vrot.slane %v2871, %v2880
    %v2883 = vunpack.c.l.s4 1966171168
    %v2884 = vunpack.c.0.s8 %v2883
    %v2885 = vlaneseq
    %v2886 = vshrl.u32 %v2885, 7
    %v2887 = vsub.s32 %v2884, %v2886
    %v2888 = vrot.slane %v2872, %v2887
    %v2890 = vunpack.c.l.s4 1966171168
    %v2891 = vunpack.c.0.s8 %v2890
    %v2892 = vlaneseq
    %v2893 = vshrl.u32 %v2892, 7
    %v2894 = vsub.s32 %v2891, %v2893
    %v2895 = vrot.slane %v2873, %v2894
    %v2897 = vunpack.c.l.s4 1966171168
    %v2898 = vunpack.c.0.s8 %v2897
    %v2899 = vlaneseq
    %v2900 = vshrl.u32 %v2899, 7
    %v2901 = vsub.s32 %v2898, %v2900
    %v2902 = vrot.slane %v2874, %v2901
    %v2903 = vcombine.low %v2881, %v2888
    %v2904 = vcombine.low %v2895, %v2902
    %v2906 = vunpack.c.l.s4 1966171168
    %v2907 = vunpack.c.0.s8 %v2906
    %v2908 = vlaneseq
    %v2909 = vshrl.u32 %v2908, 7
    %v2910 = vsub.s32 %v2907, %v2909
    %v2911 = vrot.slane %v2903, %v2910
    %v2913 = vunpack.c.l.s4 1966171168
    %v2914 = vunpack.c.0.s8 %v2913
    %v2915 = vlaneseq
    %v2916 = vshrl.u32 %v2915, 7
    %v2917 = vsub.s32 %v2914, %v2916
    %v2918 = vrot.slane %v2904, %v2917
    %v2919 = vcombine.low %v2911, %v2918
    %v2920 = vcombine.low %v2806, %v2807
    %v2921 = vcombine.low %v2808, %v2809
    %v2922 = vcombine.low %v2810, %v2811
    %v2923 = vcombine.low %v2812, %v2813
    %v2925 = vunpack.c.l.s4 1966171168
    %v2926 = vunpack.c.0.s8 %v2925
    %v2927 = vlaneseq
    %v2928 = vshrl.u32 %v2927, 7
    %v2929 = vsub.s32 %v2926, %v2928
    %v2930 = vrot.slane %v2920, %v2929
    %v2932 = vunpack.c.l.s4 1966171168
    %v2933 = vunpack.c.0.s8 %v2932
    %v2934 = vlaneseq
    %v2935 = vshrl.u32 %v2934, 7
    %v2936 = vsub.s32 %v2933, %v2935
    %v2937 = vrot.slane %v2921, %v2936
    %v2939 = vunpack.c.l.s4 1966171168
    %v2940 = vunpack.c.0.s8 %v2939
    %v2941 = vlaneseq
    %v2942 = vshrl.u32 %v2941, 7
    %v2943 = vsub.s32 %v2940, %v2942
    %v2944 = vrot.slane %v2922, %v2943
    %v2946 = vunpack.c.l.s4 1966171168
    %v2947 = vunpack.c.0.s8 %v2946
    %v2948 = vlaneseq
    %v2949 = vshrl.u32 %v2948, 7
    %v2950 = vsub.s32 %v2947, %v2949
    %v2951 = vrot.slane %v2923, %v2950
    %v2952 = vcombine.low %v2930, %v2937
    %v2953 = vcombine.low %v2944, %v2951
    %v2955 = vunpack.c.l.s4 1966171168
    %v2956 = vunpack.c.0.s8 %v2955
    %v2957 = vlaneseq
    %v2958 = vshrl.u32 %v2957, 7
    %v2959 = vsub.s32 %v2956, %v2958
    %v2960 = vrot.slane %v2952, %v2959
    %v2962 = vunpack.c.l.s4 1966171168
    %v2963 = vunpack.c.0.s8 %v2962
    %v2964 = vlaneseq
    %v2965 = vshrl.u32 %v2964, 7
    %v2966 = vsub.s32 %v2963, %v2965
    %v2967 = vrot.slane %v2953, %v2966
    %v2968 = vcombine.low %v2960, %v2967
    %v2969 = vcombine.low %v2814, %v2815
    %v2970 = vcombine.low %v2816, %v2817
    %v2971 = vcombine.low %v2818, %v2819
    %v2972 = vcombine.low %v2820, %v2821
    %v2974 = vunpack.c.l.s4 1966171168
    %v2975 = vunpack.c.0.s8 %v2974
    %v2976 = vlaneseq
    %v2977 = vshrl.u32 %v2976, 7
    %v2978 = vsub.s32 %v2975, %v2977
    %v2979 = vrot.slane %v2969, %v2978
    %v2981 = vunpack.c.l.s4 1966171168
    %v2982 = vunpack.c.0.s8 %v2981
    %v2983 = vlaneseq
    %v2984 = vshrl.u32 %v2983, 7
    %v2985 = vsub.s32 %v2982, %v2984
    %v2986 = vrot.slane %v2970, %v2985
    %v2988 = vunpack.c.l.s4 1966171168
    %v2989 = vunpack.c.0.s8 %v2988
    %v2990 = vlaneseq
    %v2991 = vshrl.u32 %v2990, 7
    %v2992 = vsub.s32 %v2989, %v2991
    %v2993 = vrot.slane %v2971, %v2992
    %v2995 = vunpack.c.l.s4 1966171168
    %v2996 = vunpack.c.0.s8 %v2995
    %v2997 = vlaneseq
    %v2998 = vshrl.u32 %v2997, 7
    %v2999 = vsub.s32 %v2996, %v2998
    %v3000 = vrot.slane %v2972, %v2999
    %v3001 = vcombine.low %v2979, %v2986
    %v3002 = vcombine.low %v2993, %v3000
    %v3004 = vunpack.c.l.s4 1966171168
    %v3005 = vunpack.c.0.s8 %v3004
    %v3006 = vlaneseq
    %v3007 = vshrl.u32 %v3006, 7
    %v3008 = vsub.s32 %v3005, %v3007
    %v3009 = vrot.slane %v3001, %v3008
    %v3011 = vunpack.c.l.s4 1966171168
    %v3012 = vunpack.c.0.s8 %v3011
    %v3013 = vlaneseq
    %v3014 = vshrl.u32 %v3013, 7
    %v3015 = vsub.s32 %v3012, %v3014
    %v3016 = vrot.slane %v3002, %v3015
    %v3017 = vcombine.low %v3009, %v3016
    %v3018 = vcombine.low %v2822, %v2823
    %v3019 = vcombine.low %v2824, %v2825
    %v3020 = vcombine.low %v2826, %v2827
    %v3021 = vcombine.low %v2828, %v2829
    %v3023 = vunpack.c.l.s4 1966171168
    %v3024 = vunpack.c.0.s8 %v3023
    %v3025 = vlaneseq
    %v3026 = vshrl.u32 %v3025, 7
    %v3027 = vsub.s32 %v3024, %v3026
    %v3028 = vrot.slane %v3018, %v3027
    %v3030 = vunpack.c.l.s4 1966171168
    %v3031 = vunpack.c.0.s8 %v3030
    %v3032 = vlaneseq
    %v3033 = vshrl.u32 %v3032, 7
    %v3034 = vsub.s32 %v3031, %v3033
    %v3035 = vrot.slane %v3019, %v3034
    %v3037 = vunpack.c.l.s4 1966171168
    %v3038 = vunpack.c.0.s8 %v3037
    %v3039 = vlaneseq
    %v3040 = vshrl.u32 %v3039, 7
    %v3041 = vsub.s32 %v3038, %v3040
    %v3042 = vrot.slane %v3020, %v3041
    %v3044 = vunpack.c.l.s4 1966171168
    %v3045 = vunpack.c.0.s8 %v3044
    %v3046 = vlaneseq
    %v3047 = vshrl.u32 %v3046, 7
    %v3048 = vsub.s32 %v3045, %v3047
    %v3049 = vrot.slane %v3021, %v3048
    %v3050 = vcombine.low %v3028, %v3035
    %v3051 = vcombine.low %v3042, %v3049
    %v3053 = vunpack.c.l.s4 1966171168
    %v3054 = vunpack.c.0.s8 %v3053
    %v3055 = vlaneseq
    %v3056 = vshrl.u32 %v3055, 7
    %v3057 = vsub.s32 %v3054, %v3056
    %v3058 = vrot.slane %v3050, %v3057
    %v3060 = vunpack.c.l.s4 1966171168
    %v3061 = vunpack.c.0.s8 %v3060
    %v3062 = vlaneseq
    %v3063 = vshrl.u32 %v3062, 7
    %v3064 = vsub.s32 %v3061, %v3063
    %v3065 = vrot.slane %v3051, %v3064
    %v3066 = vcombine.low %v3058, %v3065
    %v3067 = vsel %vm716, %v2919, 0
    %v3069 = vsel %vm716, %v2968, 0
    %v3071 = vsel %vm716, %v3017, 0
    %v3073 = vsel %vm716, %v3066, 0
    %3075 = vmatprep.subr.mxu0 0.0
    %3076 = vmatpush1.msra.mxu0 0.0
    %3077 = vmatprep.subr.mxu0 0.0
    %3078 = vmatpush1.msra.mxu0 0.0
    %3079 = vmatprep.subr.mxu0 0.0
    %3080 = vmatpush1.msra.mxu0 0.0
    %3081 = vmatprep.subr.mxu0 0.0
    %3082 = vmatpush1.msra.mxu0 0.0
    %3083 = vmatprep.subr.mxu0 0.0
    %3084 = vmatpush1.msra.mxu0 0.0
    %3085 = vmatprep.subr.mxu0 0.0
    %3086 = vmatpush1.msra.mxu0 0.0
    %3087 = vmatprep.subr.mxu0 0.0
    %3088 = vmatpush1.msra.mxu0 0.0
    %3089 = vmatprep.subr.mxu0 0.0
    %3090 = vmatpush1.msra.mxu0 0.0
    %3091 = vmatprep.subr.mxu0 0.0
    %3092 = vmatpush1.msra.mxu0 %v2838
    %3093 = vmatprep.subr.mxu0 0.0
    %3094 = vmatpush1.msra.mxu0 %v2837
    %3095 = vmatprep.subr.mxu0 0.0
    %3096 = vmatpush1.msra.mxu0 %v2836
    %3097 = vmatprep.subr.mxu0 0.0
    %3098 = vmatpush1.msra.mxu0 %v2835
    %3099 = vmatprep.subr.mxu0 0.0
    %3100 = vmatpush1.msra.mxu0 %v2834
    %3101 = vmatprep.subr.mxu0 0.0
    %3102 = vmatpush1.msra.mxu0 %v2833
    %3103 = vmatprep.subr.mxu0 0.0
    %3104 = vmatpush1.msra.mxu0 %v2832
    %3105 = vmatprep.subr.mxu0 0.0
    %3106 = vmatpush1.msra.mxu0 %v2831
    %3107 = vmatprep.subr.mxu0 0.0
    %3108 = vmatpush2.msra.mxu0 0.0
    %3109 = vmatprep.subr.mxu0 0.0
    %3110 = vmatpush2.msra.mxu0 0.0
    %3111 = vmatprep.subr.mxu0 0.0
    %3112 = vmatpush2.msra.mxu0 0.0
    %3113 = vmatprep.subr.mxu0 0.0
    %3114 = vmatpush2.msra.mxu0 0.0
    %3115 = vmatprep.subr.mxu0 0.0
    %3116 = vmatpush2.msra.mxu0 0.0
    %3117 = vmatprep.subr.mxu0 0.0
    %3118 = vmatpush2.msra.mxu0 0.0
    %3119 = vmatprep.subr.mxu0 0.0
    %3120 = vmatpush2.msra.mxu0 0.0
    %3121 = vmatprep.subr.mxu0 0.0
    %3122 = vmatpush2.msra.mxu0 0.0
    %3123 = vmatprep.subr.mxu0 0.0
    %3124 = vmatpush2.msra.mxu0 0.0
    %3125 = vmatprep.subr.mxu0 0.0
    %3126 = vmatpush2.msra.mxu0 0.0
    %3127 = vmatprep.subr.mxu0 0.0
    %3128 = vmatpush2.msra.mxu0 0.0
    %3129 = vmatprep.subr.mxu0 0.0
    %3130 = vmatpush2.msra.mxu0 0.0
    %3131 = vmatprep.subr.mxu0 0.0
    %3132 = vmatpush2.msra.mxu0 0.0
    %3133 = vmatprep.subr.mxu0 0.0
    %3134 = vmatpush2.msra.mxu0 0.0
    %3135 = vmatprep.subr.mxu0 0.0
    %3136 = vmatpush2.msra.mxu0 0.0
    %3137 = vmatprep.subr.mxu0 0.0
    %3138 = vmatpush2.msra.mxu0 0.0
    %3139 = vmatprep.mubr.f32.mxu0 0.0
    %3140 = vmatmul.mubr.f32.gmra.mxu0 %v3067
    %v3141 = vpop.f32.mrf.mxu0
    %v3142 = vadd.f32 0.0, %v3141
    %v3143 = vpop.f32.mrf.mxu0
    %3144 = vmatprep.mubr.f32.mxu0 0.0
    %3145 = vmatmul.mubr.f32.gmra.mxu0 %v3069
    %v3146 = vpop.f32.mrf.mxu0
    %v3147 = vadd.f32 0.0, %v3146
    %v3148 = vpop.f32.mrf.mxu0
    %3149 = vmatprep.mubr.f32.mxu0 0.0
    %3150 = vmatmul.mubr.f32.gmra.mxu0 %v3071
    %v3151 = vpop.f32.mrf.mxu0
    %v3152 = vadd.f32 0.0, %v3151
    %v3153 = vpop.f32.mrf.mxu0
    %3154 = vmatprep.mubr.f32.mxu0 0.0
    %3155 = vmatmul.mubr.f32.gmra.mxu0 %v3073
    %v3156 = vpop.f32.mrf.mxu0
    %v3157 = vadd.f32 0.0, %v3156
    %v3158 = vpop.f32.mrf.mxu0
    %3159 = vdwg.mxu0
    %v3160 = vadd.f32 %v2779, %v3142
    %v3161 = vadd.f32 %v2784, %v3147
    %v3162 = vadd.f32 %v2789, %v3152
    %v3163 = vadd.f32 %v2794, %v3157
    %v3164 = vld [vmem:[#allocation12] sm:$0xff]
    %v3165 = vld [vmem:[#allocation12 + $0x8] sm:$0xff]
    %v3166 = vld [vmem:[#allocation12 + $0x10] sm:$0xff]
    %v3167 = vld [vmem:[#allocation12 + $0x18] sm:$0xff]
    %v3168 = vld [vmem:[#allocation12 + $0x20] sm:$0xff]
    %v3169 = vld [vmem:[#allocation12 + $0x28] sm:$0xff]
    %v3170 = vld [vmem:[#allocation12 + $0x30] sm:$0xff]
    %v3171 = vld [vmem:[#allocation12 + $0x38] sm:$0xff]
    %v3173 = vsel %vm716, %v3160, 0
    %v3176 = vsel %vm716, %v3161, 0
    %v3179 = vsel %vm716, %v3162, 0
    %v3182 = vsel %vm716, %v3163, 0
    %3184 = vmatprep.subr.mxu0 0.0
    %3185 = vmatpush1.msra.mxu0 0.0
    %3186 = vmatprep.subr.mxu0 0.0
    %3187 = vmatpush1.msra.mxu0 0.0
    %3188 = vmatprep.subr.mxu0 0.0
    %3189 = vmatpush1.msra.mxu0 0.0
    %3190 = vmatprep.subr.mxu0 0.0
    %3191 = vmatpush1.msra.mxu0 0.0
    %3192 = vmatprep.subr.mxu0 0.0
    %3193 = vmatpush1.msra.mxu0 0.0
    %3194 = vmatprep.subr.mxu0 0.0
    %3195 = vmatpush1.msra.mxu0 0.0
    %3196 = vmatprep.subr.mxu0 0.0
    %3197 = vmatpush1.msra.mxu0 0.0
    %3198 = vmatprep.subr.mxu0 0.0
    %3199 = vmatpush1.msra.mxu0 0.0
    %3200 = vmatprep.subr.mxu0 0.0
    %3201 = vmatpush1.msra.mxu0 %v3171
    %3202 = vmatprep.subr.mxu0 0.0
    %3203 = vmatpush1.msra.mxu0 %v3170
    %3204 = vmatprep.subr.mxu0 0.0
    %3205 = vmatpush1.msra.mxu0 %v3169
    %3206 = vmatprep.subr.mxu0 0.0
    %3207 = vmatpush1.msra.mxu0 %v3168
    %3208 = vmatprep.subr.mxu0 0.0
    %3209 = vmatpush1.msra.mxu0 %v3167
    %3210 = vmatprep.subr.mxu0 0.0
    %3211 = vmatpush1.msra.mxu0 %v3166
    %3212 = vmatprep.subr.mxu0 0.0
    %3213 = vmatpush1.msra.mxu0 %v3165
    %3214 = vmatprep.subr.mxu0 0.0
    %3215 = vmatpush1.msra.mxu0 %v3164
    %3216 = vmatprep.subr.mxu0 0.0
    %3217 = vmatpush2.msra.mxu0 0.0
    %3218 = vmatprep.subr.mxu0 0.0
    %3219 = vmatpush2.msra.mxu0 0.0
    %3220 = vmatprep.subr.mxu0 0.0
    %3221 = vmatpush2.msra.mxu0 0.0
    %3222 = vmatprep.subr.mxu0 0.0
    %3223 = vmatpush2.msra.mxu0 0.0
    %3224 = vmatprep.subr.mxu0 0.0
    %3225 = vmatpush2.msra.mxu0 0.0
    %3226 = vmatprep.subr.mxu0 0.0
    %3227 = vmatpush2.msra.mxu0 0.0
    %3228 = vmatprep.subr.mxu0 0.0
    %3229 = vmatpush2.msra.mxu0 0.0
    %3230 = vmatprep.subr.mxu0 0.0
    %3231 = vmatpush2.msra.mxu0 0.0
    %3232 = vmatprep.subr.mxu0 0.0
    %3233 = vmatpush2.msra.mxu0 0.0
    %3234 = vmatprep.subr.mxu0 0.0
    %3235 = vmatpush2.msra.mxu0 0.0
    %3236 = vmatprep.subr.mxu0 0.0
    %3237 = vmatpush2.msra.mxu0 0.0
    %3238 = vmatprep.subr.mxu0 0.0
    %3239 = vmatpush2.msra.mxu0 0.0
    %3240 = vmatprep.subr.mxu0 0.0
    %3241 = vmatpush2.msra.mxu0 0.0
    %3242 = vmatprep.subr.mxu0 0.0
    %3243 = vmatpush2.msra.mxu0 0.0
    %3244 = vmatprep.subr.mxu0 0.0
    %3245 = vmatpush2.msra.mxu0 0.0
    %3246 = vmatprep.subr.mxu0 0.0
    %3247 = vmatpush2.msra.mxu0 0.0
    %3248 = vmatprep.mubr.f32.mxu0 0.0
    %3249 = vmatmul.mubr.f32.gmra.mxu0 %v3173
    %v3250 = vpop.f32.mrf.mxu0
    %v3251 = vadd.f32 0.0, %v3250
    %v3252 = vpop.f32.mrf.mxu0
    %3253 = vmatprep.mubr.f32.mxu0 0.0
    %3254 = vmatmul.mubr.f32.gmra.mxu0 %v3176
    %v3255 = vpop.f32.mrf.mxu0
    %v3256 = vadd.f32 0.0, %v3255
    %v3257 = vpop.f32.mrf.mxu0
    %3258 = vmatprep.mubr.f32.mxu0 0.0
    %3259 = vmatmul.mubr.f32.gmra.mxu0 %v3179
    %v3260 = vpop.f32.mrf.mxu0
    %v3261 = vadd.f32 0.0, %v3260
    %v3262 = vpop.f32.mrf.mxu0
    %3263 = vmatprep.mubr.f32.mxu0 0.0
    %3264 = vmatmul.mubr.f32.gmra.mxu0 %v3182
    %v3265 = vpop.f32.mrf.mxu0
    %v3266 = vadd.f32 0.0, %v3265
    %v3267 = vpop.f32.mrf.mxu0
    %3268 = vdwg.mxu0
    %v3269 = vsel %vm716, %v3251, 0.0
    %v3270 = vsel %vm716, %v3256, 0.0
    %v3271 = vadd.f32 %v3269, %v3270
    %v3272 = vsel %vm716, %v3261, 0.0
    %v3273 = vadd.f32 %v3271, %v3272
    %v3274 = vsel %vm716, %v3266, 0.0
    %v3275 = vadd.f32 %v3273, %v3274
    %v3276 = vrot.slane %v3275, 4
    %v3277 = vadd.f32 %v3275, %v3276
    %v3278 = vrot.slane %v3277, 2
    %v3279 = vadd.f32 %v3277, %v3278
    %v3280 = vrot.slane %v3279, 1
    %v3281 = vadd.f32 %v3279, %v3280
    %v3282 = vmul.f32 %v3281, 0.001953125
    %v3283 = vmul.f32 %v3160, %v3160
    %v3284 = vmul.f32 %v3161, %v3161
    %v3285 = vmul.f32 %v3162, %v3162
    %v3286 = vmul.f32 %v3163, %v3163
    %v3288 = vsel %vm716, %v3283, 0
    %v3291 = vsel %vm716, %v3284, 0
    %v3294 = vsel %vm716, %v3285, 0
    %v3297 = vsel %vm716, %v3286, 0
    %3299 = vmatprep.subr.mxu0 0.0
    %3300 = vmatpush1.msra.mxu0 0.0
    %3301 = vmatprep.subr.mxu0 0.0
    %3302 = vmatpush1.msra.mxu0 0.0
    %3303 = vmatprep.subr.mxu0 0.0
    %3304 = vmatpush1.msra.mxu0 0.0
    %3305 = vmatprep.subr.mxu0 0.0
    %3306 = vmatpush1.msra.mxu0 0.0
    %3307 = vmatprep.subr.mxu0 0.0
    %3308 = vmatpush1.msra.mxu0 0.0
    %3309 = vmatprep.subr.mxu0 0.0
    %3310 = vmatpush1.msra.mxu0 0.0
    %3311 = vmatprep.subr.mxu0 0.0
    %3312 = vmatpush1.msra.mxu0 0.0
    %3313 = vmatprep.subr.mxu0 0.0
    %3314 = vmatpush1.msra.mxu0 0.0
    %3315 = vmatprep.subr.mxu0 0.0
    %3316 = vmatpush1.msra.mxu0 %v3171
    %3317 = vmatprep.subr.mxu0 0.0
    %3318 = vmatpush1.msra.mxu0 %v3170
    %3319 = vmatprep.subr.mxu0 0.0
    %3320 = vmatpush1.msra.mxu0 %v3169
    %3321 = vmatprep.subr.mxu0 0.0
    %3322 = vmatpush1.msra.mxu0 %v3168
    %3323 = vmatprep.subr.mxu0 0.0
    %3324 = vmatpush1.msra.mxu0 %v3167
    %3325 = vmatprep.subr.mxu0 0.0
    %3326 = vmatpush1.msra.mxu0 %v3166
    %3327 = vmatprep.subr.mxu0 0.0
    %3328 = vmatpush1.msra.mxu0 %v3165
    %3329 = vmatprep.subr.mxu0 0.0
    %3330 = vmatpush1.msra.mxu0 %v3164
    %3331 = vmatprep.subr.mxu0 0.0
    %3332 = vmatpush2.msra.mxu0 0.0
    %3333 = vmatprep.subr.mxu0 0.0
    %3334 = vmatpush2.msra.mxu0 0.0
    %3335 = vmatprep.subr.mxu0 0.0
    %3336 = vmatpush2.msra.mxu0 0.0
    %3337 = vmatprep.subr.mxu0 0.0
    %3338 = vmatpush2.msra.mxu0 0.0
    %3339 = vmatprep.subr.mxu0 0.0
    %3340 = vmatpush2.msra.mxu0 0.0
    %3341 = vmatprep.subr.mxu0 0.0
    %3342 = vmatpush2.msra.mxu0 0.0
    %3343 = vmatprep.subr.mxu0 0.0
    %3344 = vmatpush2.msra.mxu0 0.0
    %3345 = vmatprep.subr.mxu0 0.0
    %3346 = vmatpush2.msra.mxu0 0.0
    %3347 = vmatprep.subr.mxu0 0.0
    %3348 = vmatpush2.msra.mxu0 0.0
    %3349 = vmatprep.subr.mxu0 0.0
    %3350 = vmatpush2.msra.mxu0 0.0
    %3351 = vmatprep.subr.mxu0 0.0
    %3352 = vmatpush2.msra.mxu0 0.0
    %3353 = vmatprep.subr.mxu0 0.0
    %3354 = vmatpush2.msra.mxu0 0.0
    %3355 = vmatprep.subr.mxu0 0.0
    %3356 = vmatpush2.msra.mxu0 0.0
    %3357 = vmatprep.subr.mxu0 0.0
    %3358 = vmatpush2.msra.mxu0 0.0
    %3359 = vmatprep.subr.mxu0 0.0
    %3360 = vmatpush2.msra.mxu0 0.0
    %3361 = vmatprep.subr.mxu0 0.0
    %3362 = vmatpush2.msra.mxu0 0.0
    %3363 = vmatprep.mubr.f32.mxu0 0.0
    %3364 = vmatmul.mubr.f32.gmra.mxu0 %v3288
    %v3365 = vpop.f32.mrf.mxu0
    %v3366 = vadd.f32 0.0, %v3365
    %v3367 = vpop.f32.mrf.mxu0
    %3368 = vmatprep.mubr.f32.mxu0 0.0
    %3369 = vmatmul.mubr.f32.gmra.mxu0 %v3291
    %v3370 = vpop.f32.mrf.mxu0
    %v3371 = vadd.f32 0.0, %v3370
    %v3372 = vpop.f32.mrf.mxu0
    %3373 = vmatprep.mubr.f32.mxu0 0.0
    %3374 = vmatmul.mubr.f32.gmra.mxu0 %v3294
    %v3375 = vpop.f32.mrf.mxu0
    %v3376 = vadd.f32 0.0, %v3375
    %v3377 = vpop.f32.mrf.mxu0
    %3378 = vmatprep.mubr.f32.mxu0 0.0
    %3379 = vmatmul.mubr.f32.gmra.mxu0 %v3297
    %v3380 = vpop.f32.mrf.mxu0
    %v3381 = vadd.f32 0.0, %v3380
    %v3382 = vpop.f32.mrf.mxu0
    %3383 = vdwg.mxu0
    %v3384 = vsel %vm716, %v3366, 0.0
    %v3385 = vsel %vm716, %v3371, 0.0
    %v3386 = vadd.f32 %v3384, %v3385
    %v3387 = vsel %vm716, %v3376, 0.0
    %v3388 = vadd.f32 %v3386, %v3387
    %v3389 = vsel %vm716, %v3381, 0.0
    %v3390 = vadd.f32 %v3388, %v3389
    %v3391 = vrot.slane %v3390, 4
    %v3392 = vadd.f32 %v3390, %v3391
    %v3393 = vrot.slane %v3392, 2
    %v3394 = vadd.f32 %v3392, %v3393
    %v3395 = vrot.slane %v3394, 1
    %v3396 = vadd.f32 %v3394, %v3395
    %v3397 = vmul.f32 %v3396, 0.001953125
    %v3398 = vmul.f32 %v3282, %v3282
    %v3399 = vsub.f32 %v3397, %v3398
    %v3400 = vld [vmem:[%s7] sm:$0x1]
    %v3401 = vadd.f32 %v3399, 1e-05
    %v3402 = vrsqrt.pop %v3401
    %v3403 = vmul.f32 %v3400, %v3402
    %v3404 = vld [vmem:[%s8] sm:$0x1]
    %v3405 = vmul.f32 %v3282, %v3403
    %v3406 = vsub.f32 %v3404, %v3405
    %v3408 = vlaneseq
    %v3409 = vshrl.u32 %v3408, 7
    %v3410 = vsub.s32 0, %v3409
    %v3411 = vrot.slane %v3403, %v3410
    %v3413 = vmul.f32 %v3160, %v3411
    %v3414 = vmul.f32 %v3161, %v3411
    %v3415 = vmul.f32 %v3162, %v3411
    %v3416 = vmul.f32 %v3163, %v3411
    %v3418 = vlaneseq
    %v3419 = vshrl.u32 %v3418, 7
    %v3420 = vsub.s32 0, %v3419
    %v3421 = vrot.slane %v3406, %v3420
    %v3423 = vadd.f32 %v3413, %v3421
    %v3424 = vadd.f32 %v3414, %v3421
    %v3425 = vadd.f32 %v3415, %v3421
    %v3426 = vadd.f32 %v3416, %v3421
    %v3427 = vld [vmem:[#allocation4] sm:$0xff]
    %v3428 = vld [vmem:[#allocation4 + $0x8] sm:$0xff]
    %v3429 = vld [vmem:[#allocation4 + $0x10] sm:$0xff]
    %v3430 = vld [vmem:[#allocation4 + $0x18] sm:$0xff]
    %v3431 = vadd.f32 %v3423, %v3427
    %v3432 = vadd.f32 %v3424, %v3428
    %v3433 = vadd.f32 %v3425, %v3429
    %v3434 = vadd.f32 %v3426, %v3430
    %vm3435 = vcmp.gt.f32.partialorder %v3431, 0.0
    %vm3436 = vcmp.gt.f32.partialorder %v3432, 0.0
    %vm3437 = vcmp.gt.f32.partialorder %v3433, 0.0
    %vm3438 = vcmp.gt.f32.partialorder %v3434, 0.0
    %v3439 = vmul.f32 %v3431, 0.2
    %v3440 = vmul.f32 %v3432, 0.2
    %v3441 = vmul.f32 %v3433, 0.2
    %v3442 = vmul.f32 %v3434, 0.2
    %v3443 = vsel %vm3435, %v3431, %v3439
    %v3444 = vsel %vm3436, %v3432, %v3440
    %v3445 = vsel %vm3437, %v3433, %v3441
    %v3446 = vsel %vm3438, %v3434, %v3442
    %3447 = vst.msk [vmem:[#allocation13] sm:$0xff] %vm716, %v3443
    %3448 = vst.msk [vmem:[#allocation13 + $0x8] sm:$0xff] %vm716, %v3444
    %3449 = vst.msk [vmem:[#allocation13 + $0x10] sm:$0xff] %vm716, %v3445
    %3450 = vst.msk [vmem:[#allocation13 + $0x18] sm:$0xff] %vm716, %v3446
    // Predicated region
    $region58: #{tpu_custom_call.1} parent=1 // pred_check
      _
    $region59: #{tpu_custom_call.1} parent=1 // pred_check_branch
      %3452 = sbr.rel (0) target = $region61
    $region60: #{tpu_custom_call.1} parent=1 // pred_region
      %s3454 = ssub.s32 512, 512
      %3455 = vsyncadd [#allocation6], %s3454
      %s3456 = sshll.u32 [#allocation13], 4
      %s3457 = int_to_ptr.vmem [resolvable:$true] %s3456
      %3462 = dma.vmem_to_hbm [thread:$0]  %s3457, 512, %s9, [#allocation6], 128, 128, 8
    $region61: #{tpu_custom_call.1} parent=1 // pred_fallthru
      _
    // Predicated region
    $region62: #{tpu_custom_call.1} parent=1 // pred_check
      _
    $region63: #{tpu_custom_call.1} parent=1 // pred_check_branch
      %3464 = sbr.rel (0) target = $region65
    $region64: #{tpu_custom_call.1} parent=1 // pred_region
      %3465 = dma.done [#allocation6], 512
    $region65: #{tpu_custom_call.1} parent=1 // pred_fallthru
      _
    %3466 = vsyncpa [#allocation5], 1
    %3467 = vsyncpa [#allocation8], 1
    %3468 = vsyncpa [#allocation11], 1
    %3469 = vsyncpa [#allocation6], 1

</llo_original>
